<compile_context>
chip_gen: v5e
topology: v5e:2x2
jax: 0.10.0
libtpu: 0.0.40
codegen_flags: <defaults>
</compile_context>

<pallas_src>
import functools

import jax
import jax.numpy as jnp
from jax import lax
from jax.experimental import pallas as pl
from jax.experimental.pallas import tpu as pltpu

NEG_INF = -1e30
BF16 = jnp.bfloat16


def _round_up(x, m):
    return (x + m - 1) // m * m


# ----------------------------------------------------------------------------
# small numerics helpers (used inside kernels)
# ----------------------------------------------------------------------------
def _softmax(x, axis):
    m = jnp.max(x, axis=axis, keepdims=True)
    e = jnp.exp(x - m)
    return e / jnp.sum(e, axis=axis, keepdims=True)


def _log_softmax(x, axis):
    m = jnp.max(x, axis=axis, keepdims=True)
    s = x - m
    return s - jnp.log(jnp.sum(jnp.exp(s), axis=axis, keepdims=True))


# ----------------------------------------------------------------------------
# Pallas kernel: generic linear  y = x @ W + b   (W already transposed: (K, N))
# Row-tiled over M so it scales to real sizes and pipelines DMA with the GEMM.
# ----------------------------------------------------------------------------
def _linear_kernel(x_ref, w_ref, b_ref, o_ref):
    o_ref[...] = (
        jnp.dot(x_ref[...].astype(BF16), w_ref[...].astype(BF16),
                preferred_element_type=jnp.float32)
        + b_ref[...]
    )


def pallas_linear(x, w_t, b, tm=512):
    """x: (M, K), w_t: (K, N), b: (N,) -> (M, N), tiled over rows of M."""
    M, K = x.shape
    N = w_t.shape[1]
    TM = min(tm, _round_up(M, 8))
    Mp = _round_up(M, TM)
    if Mp != M:
        x = jnp.pad(x, ((0, Mp - M), (0, 0)))
    out = pl.pallas_call(
        _linear_kernel,
        out_shape=jax.ShapeDtypeStruct((Mp, N), jnp.float32),
        grid=(Mp // TM,),
        in_specs=[
            pl.BlockSpec((TM, K), lambda i: (i, 0)),
            pl.BlockSpec((K, N), lambda i: (0, 0)),   # weights stay VMEM-resident
            pl.BlockSpec((1, N), lambda i: (0, 0)),
        ],
        out_specs=pl.BlockSpec((TM, N), lambda i: (i, 0)),
        compiler_params=pltpu.CompilerParams(dimension_semantics=("parallel",)),
    )(x, w_t, b.reshape(1, N))
    return out[:M]


# ----------------------------------------------------------------------------
# Pallas kernel: embedding projection + 2-layer highway encoder (fused).
# Row-tiled over B*T; each highway layer is ONE (rows,H)x(H,2H) GEMM + split.
# ----------------------------------------------------------------------------
def _emb_kernel(e_ref, wp_ref, w1_ref, b1_ref, w2_ref, b2_ref, o_ref):
    H = o_ref.shape[-1]
    x = jnp.dot(e_ref[...].astype(BF16), wp_ref[...].astype(BF16),
                preferred_element_type=jnp.float32)
    for w_ref, b_ref in ((w1_ref, b1_ref), (w2_ref, b2_ref)):
        z = jnp.dot(x.astype(BF16), w_ref[...].astype(BF16),
                    preferred_element_type=jnp.float32) + b_ref[...]
        t = jax.nn.relu(z[:, :H])          # transform half
        g = jax.nn.sigmoid(z[:, H:])       # gate half
        x = g * t + (1.0 - g) * x
    o_ref[...] = x


def embed(params, idxs, tm=512):
    # TODO(synk): embedding-table gather (word_vectors[idxs]) stays in plain JAX.
    B, T = idxs.shape
    e = params["word_vectors"][idxs]          # (B, T, E)
    E = e.shape[-1]
    H = params["proj_w"].shape[0]

    def hwy_cat(h):
        w = jnp.concatenate([jnp.transpose(h["wt"]), jnp.transpose(h["wg"])], axis=1)
        bb = jnp.concatenate([h["bt"], h["bg"]]).reshape(1, 2 * H)
        return w, bb

    w1, b1 = hwy_cat(params["hwy"][0])
    w2, b2 = hwy_cat(params["hwy"][1])

    M = B * T
    TM = min(tm, _round_up(M, 8))
    Mp = _round_up(M, TM)
    e2 = e.reshape(M, E)
    if Mp != M:
        e2 = jnp.pad(e2, ((0, Mp - M), (0, 0)))

    out = pl.pallas_call(
        _emb_kernel,
        out_shape=jax.ShapeDtypeStruct((Mp, H), jnp.float32),
        grid=(Mp // TM,),
        in_specs=[
            pl.BlockSpec((TM, E), lambda i: (i, 0)),
            pl.BlockSpec((E, H), lambda i: (0, 0)),
            pl.BlockSpec((H, 2 * H), lambda i: (0, 0)),
            pl.BlockSpec((1, 2 * H), lambda i: (0, 0)),
            pl.BlockSpec((H, 2 * H), lambda i: (0, 0)),
            pl.BlockSpec((1, 2 * H), lambda i: (0, 0)),
        ],
        out_specs=pl.BlockSpec((TM, H), lambda i: (i, 0)),
        compiler_params=pltpu.CompilerParams(dimension_semantics=("parallel",)),
    )(e2, jnp.transpose(params["proj_w"]), w1, b1, w2, b2)
    return out[:M].reshape(B, T, H)


# ----------------------------------------------------------------------------
# Pallas kernel: LSTM recurrence, one direction.
# Grid iterates over time ("arbitrary"); (h, c) live in VMEM scratch across
# grid steps; w_hh stays VMEM-resident (constant index map).  pack_padded
# semantics preserved: updates gated by (t < length), outputs 0 at pad steps.
# Input-to-hidden projection gx is precomputed by the tiled pallas_linear.
# ----------------------------------------------------------------------------
def _lstm_step_kernel(len_ref, gx_ref, whh_ref, o_ref, h_scr, c_scr, *, reverse, T):
    t = pl.program_id(0)

    @pl.when(t == 0)
    def _():
        h_scr[...] = jnp.zeros_like(h_scr)
        c_scr[...] = jnp.zeros_like(c_scr)

    time_idx = (T - 1 - t) if reverse else t
    h = h_scr[...]                              # (B, H)
    c = c_scr[...]
    H = h.shape[-1]

    gates = gx_ref[0] + jnp.dot(h.astype(BF16), whh_ref[...].astype(BF16),
                                preferred_element_type=jnp.float32)   # (B, 4H)
    i = jax.nn.sigmoid(gates[:, 0:H])
    f = jax.nn.sigmoid(gates[:, H:2 * H])
    g = jnp.tanh(gates[:, 2 * H:3 * H])
    o = jax.nn.sigmoid(gates[:, 3 * H:4 * H])
    c_new = f * c + i * g
    h_new = o * jnp.tanh(c_new)

    valid = (time_idx < len_ref[...]).astype(jnp.float32)   # (B, 1)
    h_scr[...] = valid * h_new + (1.0 - valid) * h
    c_scr[...] = valid * c_new + (1.0 - valid) * c
    o_ref[0] = valid * h_new


def lstm_direction(x, lengths, w_ih, w_hh, b_ih, b_hh, reverse):
    B, T, Din = x.shape
    H = w_hh.shape[1]
    gx = pallas_linear(x.reshape(B * T, Din), jnp.transpose(w_ih), b_ih + b_hh)
    gx_t = jnp.transpose(gx.reshape(B, T, 4 * H), (1, 0, 2))   # (T, B, 4H)
    len_col = lengths.astype(jnp.int32).reshape(B, 1)

    if reverse:
        tmap = lambda t: (T - 1 - t, 0, 0)
    else:
        tmap = lambda t: (t, 0, 0)

    outs = pl.pallas_call(
        functools.partial(_lstm_step_kernel, reverse=reverse, T=T),
        out_shape=jax.ShapeDtypeStruct((T, B, H), jnp.float32),
        grid=(T,),
        in_specs=[
            pl.BlockSpec((B, 1), lambda t: (0, 0)),
            pl.BlockSpec((1, B, 4 * H), tmap),
            pl.BlockSpec((H, 4 * H), lambda t: (0, 0)),
        ],
        out_specs=pl.BlockSpec((1, B, H), tmap),
        scratch_shapes=[pltpu.VMEM((B, H), jnp.float32),
                        pltpu.VMEM((B, H), jnp.float32)],
        compiler_params=pltpu.CompilerParams(dimension_semantics=("arbitrary",)),
    )(len_col, gx_t, jnp.transpose(w_hh))
    return jnp.transpose(outs, (1, 0, 2))    # (B, T, H)


def bilstm_layer(x, lengths, lp):
    fwd = lstm_direction(x, lengths, lp["w_ih_f"], lp["w_hh_f"],
                         lp["b_ih_f"], lp["b_hh_f"], reverse=False)
    bwd = lstm_direction(x, lengths, lp["w_ih_b"], lp["w_hh_b"],
                         lp["b_ih_b"], lp["b_hh_b"], reverse=True)
    return jnp.concatenate([fwd, bwd], axis=-1)


def rnn_encoder(x, lengths, layer_params):
    for lp in layer_params:
        x = bilstm_layer(x, lengths, lp)
    return x


# ----------------------------------------------------------------------------
# Pallas kernel: BiDAF attention (one batch element per grid step).
# Lengths come in via scalar prefetch (SMEM); masks built with iota + where.
# c_w/q_w are lane-dense rows; s0 is a VPU row-reduction.
# b = s1m @ (s2m^T @ c): never materializes the (Lc,Lc) product.
# Output written by direct slice stores (no in-kernel concat).
# ----------------------------------------------------------------------------
def _bidaf_att_kernel(clen_ref, qlen_ref, c_ref, q_ref, cw_ref, qw_ref, cqw_ref,
                      bias_ref, o_ref):
    b = pl.program_id(0)
    c = c_ref[0]                      # (Lc, D)
    q = q_ref[0]                      # (Lq, D)
    Lc, D = c.shape
    Lq = q.shape[0]

    # similarity: s[i,j] = c_i.cw + q_j.qw + (c_i*cqw).q_j + bias
    s0 = jnp.sum(c * cw_ref[...], axis=-1, keepdims=True)                  # (Lc,1)
    s1 = lax.dot_general(qw_ref[...], q, (((1,), (1,)), ((), ())),
                         preferred_element_type=jnp.float32)               # (1,Lq)
    s2 = lax.dot_general((c * cqw_ref[...]).astype(BF16), q.astype(BF16),
                         (((1,), (1,)), ((), ())),
                         preferred_element_type=jnp.float32)               # (Lc,Lq)
    s = s0 + s1 + s2 + bias_ref[0, 0]

    col = lax.broadcasted_iota(jnp.int32, (Lc, Lq), 1)
    row = lax.broadcasted_iota(jnp.int32, (Lc, Lq), 0)
    s1m = _softmax(jnp.where(col < qlen_ref[b], s, NEG_INF), axis=-1)      # (Lc,Lq)
    s2m = _softmax(jnp.where(row < clen_ref[b], s, NEG_INF), axis=0)       # (Lc,Lq)

    a = jnp.dot(s1m.astype(BF16), q.astype(BF16),
                preferred_element_type=jnp.float32)                        # (Lc,D)
    qc = lax.dot_general(s2m.astype(BF16), c.astype(BF16),
                         (((0,), (0,)), ((), ())),
                         preferred_element_type=jnp.float32)               # (Lq,D)
    b2 = jnp.dot(s1m.astype(BF16), qc.astype(BF16),
                 preferred_element_type=jnp.float32)                       # (Lc,D)

    o_ref[0, :, 0:D] = c
    o_ref[0, :, D:2 * D] = a
    o_ref[0, :, 2 * D:3 * D] = c * a
    o_ref[0, :, 3 * D:4 * D] = c * b2


def bidaf_attention(c, q, c_len, q_len, ap):
    B, Lc, D = c.shape
    Lq = q.shape[1]
    cw_row = jnp.transpose(ap["c_w"])   # (1, D)
    qw_row = jnp.transpose(ap["q_w"])   # (1, D)
    grid_spec = pltpu.PrefetchScalarGridSpec(
        num_scalar_prefetch=2,
        grid=(B,),
        in_specs=[
            pl.BlockSpec((1, Lc, D), lambda b, cl, ql: (b, 0, 0)),
            pl.BlockSpec((1, Lq, D), lambda b, cl, ql: (b, 0, 0)),
            pl.BlockSpec((1, D), lambda b, cl, ql: (0, 0)),
            pl.BlockSpec((1, D), lambda b, cl, ql: (0, 0)),
            pl.BlockSpec((1, D), lambda b, cl, ql: (0, 0)),
            pl.BlockSpec((1, 1), lambda b, cl, ql: (0, 0)),
        ],
        out_specs=pl.BlockSpec((1, Lc, 4 * D), lambda b, cl, ql: (b, 0, 0)),
    )
    return pl.pallas_call(
        _bidaf_att_kernel,
        out_shape=jax.ShapeDtypeStruct((B, Lc, 4 * D), jnp.float32),
        grid_spec=grid_spec,
        compiler_params=pltpu.CompilerParams(dimension_semantics=("parallel",)),
    )(c_len, q_len, c, q, cw_row, qw_row, ap["cq_w"], ap["bias"])


# ----------------------------------------------------------------------------
# Pallas kernel: fused output head.
# Four N=1 linears computed as VPU row reductions, logits add, and both
# masked log-softmaxes in one kernel gridded over the batch.
# ----------------------------------------------------------------------------
def _output_kernel(clen_ref, att_ref, mod_ref, mod2_ref, wa1_ref, wm1_ref,
                   wa2_ref, wm2_ref, bias_ref, p1_ref, p2_ref):
    b = pl.program_id(0)
    att = att_ref[0]       # (Lc, 8H)
    mod = mod_ref[0]       # (Lc, 2H)
    mod2 = mod2_ref[0]     # (Lc, 2H)
    Lc = att.shape[0]

    l1 = (jnp.sum(att * wa1_ref[...], axis=-1, keepdims=True)
          + jnp.sum(mod * wm1_ref[...], axis=-1, keepdims=True)
          + bias_ref[0, 0])                                         # (Lc, 1)
    l2 = (jnp.sum(att * wa2_ref[...], axis=-1, keepdims=True)
          + jnp.sum(mod2 * wm2_ref[...], axis=-1, keepdims=True)
          + bias_ref[0, 1])                                         # (Lc, 1)

    row = lax.broadcasted_iota(jnp.int32, (Lc, 1), 0)
    mask = row < clen_ref[b]
    p1_ref[0] = _log_softmax(jnp.where(mask, l1, NEG_INF), axis=0)
    p2_ref[0] = _log_softmax(jnp.where(mask, l2, NEG_INF), axis=0)


def bidaf_output(att, mod, c_len, op):
    B, Lc, Da = att.shape
    Dm = mod.shape[-1]
    mod2 = rnn_encoder(mod, c_len, op["rnn"])                       # (B, Lc, 2H)
    bias = jnp.stack([op["att1_b"] + op["mod1_b"],
                      op["att2_b"] + op["mod2_b"]], axis=1)         # (1, 2)

    grid_spec = pltpu.PrefetchScalarGridSpec(
        num_scalar_prefetch=1,
        grid=(B,),
        in_specs=[
            pl.BlockSpec((1, Lc, Da), lambda b, cl: (b, 0, 0)),
            pl.BlockSpec((1, Lc, Dm), lambda b, cl: (b, 0, 0)),
            pl.BlockSpec((1, Lc, Dm), lambda b, cl: (b, 0, 0)),
            pl.BlockSpec((1, Da), lambda b, cl: (0, 0)),
            pl.BlockSpec((1, Dm), lambda b, cl: (0, 0)),
            pl.BlockSpec((1, Da), lambda b, cl: (0, 0)),
            pl.BlockSpec((1, Dm), lambda b, cl: (0, 0)),
            pl.BlockSpec((1, 2), lambda b, cl: (0, 0)),
        ],
        out_specs=[
            pl.BlockSpec((1, Lc, 1), lambda b, cl: (b, 0, 0)),
            pl.BlockSpec((1, Lc, 1), lambda b, cl: (b, 0, 0)),
        ],
    )
    log_p1, log_p2 = pl.pallas_call(
        _output_kernel,
        out_shape=(jax.ShapeDtypeStruct((B, Lc, 1), jnp.float32),
                   jax.ShapeDtypeStruct((B, Lc, 1), jnp.float32)),
        grid_spec=grid_spec,
        compiler_params=pltpu.CompilerParams(dimension_semantics=("parallel",)),
    )(c_len, att, mod, mod2,
      op["att1_w"], op["mod1_w"], op["att2_w"], op["mod2_w"], bias)
    return log_p1[..., 0], log_p2[..., 0]


# ----------------------------------------------------------------------------
# Full forward pass
# ----------------------------------------------------------------------------
def bidaf_forward(params, cw_idxs, qw_idxs):
    c_mask = cw_idxs != 0
    q_mask = qw_idxs != 0
    c_len = c_mask.sum(-1).astype(jnp.int32)
    q_len = q_mask.sum(-1).astype(jnp.int32)

    c_emb = embed(params, cw_idxs)                            # (B, Lc, H)
    q_emb = embed(params, qw_idxs)                            # (B, Lq, H)

    c_enc = rnn_encoder(c_emb, c_len, params["enc"])          # (B, Lc, 2H)
    q_enc = rnn_encoder(q_emb, q_len, params["enc"])          # (B, Lq, 2H)

    att = bidaf_attention(c_enc, q_enc, c_len, q_len, params["att"])  # (B, Lc, 8H)
    mod = rnn_encoder(att, c_len, params["mod"])              # (B, Lc, 2H)

    return bidaf_output(att, mod, c_len, params["out"])


# ----------------------------------------------------------------------------
# Deterministic parameter init (synthetic weights, shapes match nn.Module)
# ----------------------------------------------------------------------------
def init_params(key, vocab, emb_dim, H):
    keys = iter(jax.random.split(key, 128))

    def nrm(shape, scale=0.1):
        return scale * jax.random.normal(next(keys), shape, jnp.float32)

    def lstm_layer(din):
        return dict(
            w_ih_f=nrm((4 * H, din)), w_hh_f=nrm((4 * H, H)),
            b_ih_f=nrm((4 * H,)), b_hh_f=nrm((4 * H,)),
            w_ih_b=nrm((4 * H, din)), w_hh_b=nrm((4 * H, H)),
            b_ih_b=nrm((4 * H,)), b_hh_b=nrm((4 * H,)),
        )

    p = {}
    p["word_vectors"] = nrm((vocab, emb_dim), 1.0)
    p["proj_w"] = nrm((H, emb_dim))                      # Linear(emb_dim, H, bias=False)
    p["hwy"] = [dict(wt=nrm((H, H)), bt=nrm((H,)),
                     wg=nrm((H, H)), bg=nrm((H,))) for _ in range(2)]
    p["enc"] = [lstm_layer(H)]                           # BiLSTM(H -> H), 1 layer
    p["att"] = dict(c_w=nrm((2 * H, 1)), q_w=nrm((2 * H, 1)),
                    cq_w=nrm((1, 2 * H)), bias=jnp.zeros((1, 1), jnp.float32))
    p["mod"] = [lstm_layer(8 * H), lstm_layer(2 * H)]    # BiLSTM(8H -> H), 2 layers
    p["out"] = dict(
        att1_w=nrm((1, 8 * H)), att1_b=nrm((1,)),
        mod1_w=nrm((1, 2 * H)), mod1_b=nrm((1,)),
        rnn=[lstm_layer(2 * H)],
        att2_w=nrm((1, 8 * H)), att2_b=nrm((1,)),
        mod2_w=nrm((1, 2 * H)), mod2_b=nrm((1,)),
    )
    return p


if __name__ == "__main__":
    VOCAB, EMB, H = 100, 48, 32
    B, Lc, Lq = 2, 32, 16

    key = jax.random.PRNGKey(0)
    kp, kc, kq = jax.random.split(key, 3)
    params = init_params(kp, VOCAB, EMB, H)

    # word indices: nonzero for a prefix, 0 (pad) afterwards
    cw = jax.random.randint(kc, (B, Lc), 1, VOCAB, dtype=jnp.int32)
    qw = jax.random.randint(kq, (B, Lq), 1, VOCAB, dtype=jnp.int32)
    c_lens = jnp.array([Lc, Lc - 7], jnp.int32)
    q_lens = jnp.array([Lq, Lq - 5], jnp.int32)
    cw = jnp.where(jnp.arange(Lc)[None, :] < c_lens[:, None], cw, 0)
    qw = jnp.where(jnp.arange(Lq)[None, :] < q_lens[:, None], qw, 0)

    fwd = jax.jit(bidaf_forward)
    log_p1, log_p2 = fwd(params, cw, qw)
    jax.block_until_ready((log_p1, log_p2))

    assert log_p1.shape == (B, Lc) and log_p2.shape == (B, Lc)
    assert bool(jnp.all(jnp.isfinite(log_p1))) and bool(jnp.all(jnp.isfinite(log_p2)))
    print("KERNEL_OK")
</pallas_src>

<mosaic_0001>
module attributes {stable_mosaic.version = 11 : i64} {
  func.func @_linear_kernel(%arg0: i32, %arg1: memref<64x32xf32, #tpu.memory_space<vmem>>, %arg2: memref<32x128xf32, #tpu.memory_space<vmem>>, %arg3: memref<1x128xf32, #tpu.memory_space<vmem>>, %arg4: memref<64x128xf32, #tpu.memory_space<vmem>>) attributes {dimension_semantics = [#tpu.dimension_semantics<parallel>], iteration_bounds = array<i64: 1>, scalar_prefetch = 0 : i64, scratch_operands = 0 : i64, tpu.core_type = #tpu.core_type<tc>, window_params = [{transform_indices = @transform_0, window_bounds = array<i64: 64, 32>}, {pipeline_mode = #tpu.pipeline_mode<synchronous>, transform_indices = @transform_1, window_bounds = array<i64: 32, 128>}, {pipeline_mode = #tpu.pipeline_mode<synchronous>, transform_indices = @transform_2, window_bounds = array<i64: 1, 128>}, {transform_indices = @transform_3, window_bounds = array<i64: 64, 128>}]} {
    %c0 = arith.constant 0 : index
    %c0_0 = arith.constant 0 : index
    %0 = vector.load %arg1[%c0, %c0_0] : memref<64x32xf32, #tpu.memory_space<vmem>>, vector<64x32xf32>
    %1 = arith.truncf %0 : vector<64x32xf32> to vector<64x32xbf16>
    %c0_1 = arith.constant 0 : index
    %c0_2 = arith.constant 0 : index
    %2 = vector.load %arg2[%c0_1, %c0_2] : memref<32x128xf32, #tpu.memory_space<vmem>>, vector<32x128xf32>
    %3 = arith.truncf %2 : vector<32x128xf32> to vector<32x128xbf16>
    %cst = arith.constant dense<0.000000e+00> : vector<64x128xf32>
    %4 = tpu.matmul %1, %3, %cst {dimension_numbers = #tpu.dot_dimension_numbers<[1], [0], [0], [1], [0, 0, 1, 1], [], []>} : vector<64x32xbf16>, vector<32x128xbf16>, vector<64x128xf32> -> vector<64x128xf32>
    %c0_3 = arith.constant 0 : index
    %c0_4 = arith.constant 0 : index
    %5 = vector.load %arg3[%c0_3, %c0_4] : memref<1x128xf32, #tpu.memory_space<vmem>>, vector<1x128xf32>
    %6 = vector.broadcast %5 : vector<1x128xf32> to vector<64x128xf32>
    %7 = arith.addf %4, %6 : vector<64x128xf32>
    %c0_5 = arith.constant 0 : index
    %c0_6 = arith.constant 0 : index
    %8 = vector.load %arg4[%c0_5, %c0_6] : memref<64x128xf32, #tpu.memory_space<vmem>>, vector<64x128xf32>
    tpu.vector_store %arg4[%c0_5, %c0_6], %7 {strides = array<i32>} : memref<64x128xf32, #tpu.memory_space<vmem>>, vector<64x128xf32>,
    return
  }
  func.func @transform_0(%arg0: i32) -> (i32, i32) {
    %c0_i32 = arith.constant 0 : i32
    %c0_i32_0 = arith.constant 0 : i32
    return %arg0, %c0_i32 : i32, i32
  }
  func.func @transform_1(%arg0: i32) -> (i32, i32) {
    %c0_i32 = arith.constant 0 : i32
    %c0_i32_0 = arith.constant 0 : i32
    %c0_i32_1 = arith.constant 0 : i32
    return %c0_i32, %c0_i32_0 : i32, i32
  }
  func.func @transform_2(%arg0: i32) -> (i32, i32) {
    %c0_i32 = arith.constant 0 : i32
    %c0_i32_0 = arith.constant 0 : i32
    %c0_i32_1 = arith.constant 0 : i32
    return %c0_i32, %c0_i32_0 : i32, i32
  }
  func.func @transform_3(%arg0: i32) -> (i32, i32) {
    %c0_i32 = arith.constant 0 : i32
    %c0_i32_0 = arith.constant 0 : i32
    return %arg0, %c0_i32 : i32, i32
  }
}

module attributes {stable_mosaic.version = 11 : i64} {
  func.func @_emb_kernel(%arg0: i32, %arg1: memref<64x48xf32, #tpu.memory_space<vmem>>, %arg2: memref<48x32xf32, #tpu.memory_space<vmem>>, %arg3: memref<32x64xf32, #tpu.memory_space<vmem>>, %arg4: memref<1x64xf32, #tpu.memory_space<vmem>>, %arg5: memref<32x64xf32, #tpu.memory_space<vmem>>, %arg6: memref<1x64xf32, #tpu.memory_space<vmem>>, %arg7: memref<64x32xf32, #tpu.memory_space<vmem>>) attributes {dimension_semantics = [#tpu.dimension_semantics<parallel>], iteration_bounds = array<i64: 1>, scalar_prefetch = 0 : i64, scratch_operands = 0 : i64, tpu.core_type = #tpu.core_type<tc>, window_params = [{transform_indices = @transform_0, window_bounds = array<i64: 64, 48>}, {pipeline_mode = #tpu.pipeline_mode<synchronous>, transform_indices = @transform_1, window_bounds = array<i64: 48, 32>}, {pipeline_mode = #tpu.pipeline_mode<synchronous>, transform_indices = @transform_2, window_bounds = array<i64: 32, 64>}, {pipeline_mode = #tpu.pipeline_mode<synchronous>, transform_indices = @transform_3, window_bounds = array<i64: 1, 64>}, {pipeline_mode = #tpu.pipeline_mode<synchronous>, transform_indices = @transform_4, window_bounds = array<i64: 32, 64>}, {pipeline_mode = #tpu.pipeline_mode<synchronous>, transform_indices = @transform_5, window_bounds = array<i64: 1, 64>}, {transform_indices = @transform_6, window_bounds = array<i64: 64, 32>}]} {
    %c0 = arith.constant 0 : index
    %c0_0 = arith.constant 0 : index
    %0 = vector.load %arg1[%c0, %c0_0] : memref<64x48xf32, #tpu.memory_space<vmem>>, vector<64x48xf32>
    %1 = arith.truncf %0 : vector<64x48xf32> to vector<64x48xbf16>
    %c0_1 = arith.constant 0 : index
    %c0_2 = arith.constant 0 : index
    %2 = vector.load %arg2[%c0_1, %c0_2] : memref<48x32xf32, #tpu.memory_space<vmem>>, vector<48x32xf32>
    %3 = arith.truncf %2 : vector<48x32xf32> to vector<48x32xbf16>
    %cst = arith.constant dense<0.000000e+00> : vector<64x32xf32>
    %4 = tpu.matmul %1, %3, %cst {dimension_numbers = #tpu.dot_dimension_numbers<[1], [0], [0], [1], [0, 0, 1, 1], [], []>} : vector<64x48xbf16>, vector<48x32xbf16>, vector<64x32xf32> -> vector<64x32xf32>
    %5 = arith.truncf %4 : vector<64x32xf32> to vector<64x32xbf16>
    %c0_3 = arith.constant 0 : index
    %c0_4 = arith.constant 0 : index
    %6 = vector.load %arg3[%c0_3, %c0_4] : memref<32x64xf32, #tpu.memory_space<vmem>>, vector<32x64xf32>
    %7 = arith.truncf %6 : vector<32x64xf32> to vector<32x64xbf16>
    %cst_5 = arith.constant dense<0.000000e+00> : vector<64x64xf32>
    %8 = tpu.matmul %5, %7, %cst_5 {dimension_numbers = #tpu.dot_dimension_numbers<[1], [0], [0], [1], [0, 0, 1, 1], [], []>} : vector<64x32xbf16>, vector<32x64xbf16>, vector<64x64xf32> -> vector<64x64xf32>
    %c0_6 = arith.constant 0 : index
    %c0_7 = arith.constant 0 : index
    %9 = vector.load %arg4[%c0_6, %c0_7] : memref<1x64xf32, #tpu.memory_space<vmem>>, vector<1x64xf32>
    %10 = vector.broadcast %9 : vector<1x64xf32> to vector<64x64xf32>
    %11 = arith.addf %8, %10 : vector<64x64xf32>
    %12 = vector.extract_strided_slice %11 {offsets = [0, 0], sizes = [64, 32], strides = [1, 1]} : vector<64x64xf32> to vector<64x32xf32>
    %cst_8 = arith.constant 0.000000e+00 : f32
    %13 = vector.broadcast %cst_8 : f32 to vector<64x32xf32>
    %14 = arith.maximumf %12, %13 : vector<64x32xf32>
    %15 = vector.extract_strided_slice %11 {offsets = [0, 32], sizes = [64, 32], strides = [1, 1]} : vector<64x64xf32> to vector<64x32xf32>
    %16 = arith.negf %15 : vector<64x32xf32>
    %17 = math.exp %16 : vector<64x32xf32>
    %cst_9 = arith.constant 1.000000e+00 : f32
    %18 = vector.broadcast %cst_9 : f32 to vector<64x32xf32>
    %19 = arith.addf %18, %17 : vector<64x32xf32>
    %20 = arith.divf %18, %19 : vector<64x32xf32>
    %21 = arith.mulf %20, %14 : vector<64x32xf32>
    %cst_10 = arith.constant 1.000000e+00 : f32
    %22 = vector.broadcast %cst_10 : f32 to vector<64x32xf32>
    %23 = arith.subf %22, %20 : vector<64x32xf32>
    %24 = arith.mulf %23, %4 : vector<64x32xf32>
    %25 = arith.addf %21, %24 : vector<64x32xf32>
    %26 = arith.truncf %25 : vector<64x32xf32> to vector<64x32xbf16>
    %c0_11 = arith.constant 0 : index
    %c0_12 = arith.constant 0 : index
    %27 = vector.load %arg5[%c0_11, %c0_12] : memref<32x64xf32, #tpu.memory_space<vmem>>, vector<32x64xf32>
    %28 = arith.truncf %27 : vector<32x64xf32> to vector<32x64xbf16>
    %cst_13 = arith.constant dense<0.000000e+00> : vector<64x64xf32>
    %29 = tpu.matmul %26, %28, %cst_13 {dimension_numbers = #tpu.dot_dimension_numbers<[1], [0], [0], [1], [0, 0, 1, 1], [], []>} : vector<64x32xbf16>, vector<32x64xbf16>, vector<64x64xf32> -> vector<64x64xf32>
    %c0_14 = arith.constant 0 : index
    %c0_15 = arith.constant 0 : index
    %30 = vector.load %arg6[%c0_14, %c0_15] : memref<1x64xf32, #tpu.memory_space<vmem>>, vector<1x64xf32>
    %31 = vector.broadcast %30 : vector<1x64xf32> to vector<64x64xf32>
    %32 = arith.addf %29, %31 : vector<64x64xf32>
    %33 = vector.extract_strided_slice %32 {offsets = [0, 0], sizes = [64, 32], strides = [1, 1]} : vector<64x64xf32> to vector<64x32xf32>
    %cst_16 = arith.constant 0.000000e+00 : f32
    %34 = vector.broadcast %cst_16 : f32 to vector<64x32xf32>
    %35 = arith.maximumf %33, %34 : vector<64x32xf32>
    %36 = vector.extract_strided_slice %32 {offsets = [0, 32], sizes = [64, 32], strides = [1, 1]} : vector<64x64xf32> to vector<64x32xf32>
    %37 = arith.negf %36 : vector<64x32xf32>
    %38 = math.exp %37 : vector<64x32xf32>
    %cst_17 = arith.constant 1.000000e+00 : f32
    %39 = vector.broadcast %cst_17 : f32 to vector<64x32xf32>
    %40 = arith.addf %39, %38 : vector<64x32xf32>
    %41 = arith.divf %39, %40 : vector<64x32xf32>
    %42 = arith.mulf %41, %35 : vector<64x32xf32>
    %cst_18 = arith.constant 1.000000e+00 : f32
    %43 = vector.broadcast %cst_18 : f32 to vector<64x32xf32>
    %44 = arith.subf %43, %41 : vector<64x32xf32>
    %45 = arith.mulf %44, %25 : vector<64x32xf32>
    %46 = arith.addf %42, %45 : vector<64x32xf32>
    %c0_19 = arith.constant 0 : index
    %c0_20 = arith.constant 0 : index
    %47 = vector.load %arg7[%c0_19, %c0_20] : memref<64x32xf32, #tpu.memory_space<vmem>>, vector<64x32xf32>
    tpu.vector_store %arg7[%c0_19, %c0_20], %46 {strides = array<i32>} : memref<64x32xf32, #tpu.memory_space<vmem>>, vector<64x32xf32>,
    return
  }
  func.func @transform_0(%arg0: i32) -> (i32, i32) {
    %c0_i32 = arith.constant 0 : i32
    %c0_i32_0 = arith.constant 0 : i32
    return %arg0, %c0_i32 : i32, i32
  }
  func.func @transform_1(%arg0: i32) -> (i32, i32) {
    %c0_i32 = arith.constant 0 : i32
    %c0_i32_0 = arith.constant 0 : i32
    %c0_i32_1 = arith.constant 0 : i32
    return %c0_i32, %c0_i32_0 : i32, i32
  }
  func.func @transform_2(%arg0: i32) -> (i32, i32) {
    %c0_i32 = arith.constant 0 : i32
    %c0_i32_0 = arith.constant 0 : i32
    %c0_i32_1 = arith.constant 0 : i32
    return %c0_i32, %c0_i32_0 : i32, i32
  }
  func.func @transform_3(%arg0: i32) -> (i32, i32) {
    %c0_i32 = arith.constant 0 : i32
    %c0_i32_0 = arith.constant 0 : i32
    %c0_i32_1 = arith.constant 0 : i32
    return %c0_i32, %c0_i32_0 : i32, i32
  }
  func.func @transform_4(%arg0: i32) -> (i32, i32) {
    %c0_i32 = arith.constant 0 : i32
    %c0_i32_0 = arith.constant 0 : i32
    %c0_i32_1 = arith.constant 0 : i32
    return %c0_i32, %c0_i32_0 : i32, i32
  }
  func.func @transform_5(%arg0: i32) -> (i32, i32) {
    %c0_i32 = arith.constant 0 : i32
    %c0_i32_0 = arith.constant 0 : i32
    %c0_i32_1 = arith.constant 0 : i32
    return %c0_i32, %c0_i32_0 : i32, i32
  }
  func.func @transform_6(%arg0: i32) -> (i32, i32) {
    %c0_i32 = arith.constant 0 : i32
    %c0_i32_0 = arith.constant 0 : i32
    return %arg0, %c0_i32 : i32, i32
  }
}

module attributes {stable_mosaic.version = 11 : i64} {
  func.func @_lstm_step_kernel(%arg0: i32, %arg1: memref<2x1xi32, #tpu.memory_space<vmem>>, %arg2: memref<1x2x128xf32, #tpu.memory_space<vmem>>, %arg3: memref<32x128xf32, #tpu.memory_space<vmem>>, %arg4: memref<1x2x32xf32, #tpu.memory_space<vmem>>, %arg5: memref<2x32xf32, #tpu.memory_space<vmem>>, %arg6: memref<2x32xf32, #tpu.memory_space<vmem>>) attributes {dimension_semantics = [#tpu.dimension_semantics<arbitrary>], iteration_bounds = array<i64: 32>, scalar_prefetch = 0 : i64, scratch_operands = 2 : i64, tpu.core_type = #tpu.core_type<tc>, window_params = [{pipeline_mode = #tpu.pipeline_mode<synchronous>, transform_indices = @transform_0, window_bounds = array<i64: 2, 1>}, {transform_indices = @transform_1, window_bounds = array<i64: 1, 2, 128>}, {pipeline_mode = #tpu.pipeline_mode<synchronous>, transform_indices = @transform_2, window_bounds = array<i64: 32, 128>}, {transform_indices = @transform_3, window_bounds = array<i64: 1, 2, 32>}]} {
    %c0_i32 = arith.constant 0 : i32
    %0 = arith.cmpi eq, %arg0, %c0_i32 : i32
    %1 = arith.extui %0 : i1 to i32
    %c0_i32_0 = arith.constant 0 : i32
    %2 = arith.cmpi ne, %1, %c0_i32_0 : i32
    scf.if %2 {
      %cst_23 = arith.constant 0.000000e+00 : f32
      %64 = vector.broadcast %cst_23 : f32 to vector<2x32xf32>
      %c0_24 = arith.constant 0 : index
      %c0_25 = arith.constant 0 : index
      %65 = vector.load %arg5[%c0_24, %c0_25] : memref<2x32xf32, #tpu.memory_space<vmem>>, vector<2x32xf32>
      tpu.vector_store %arg5[%c0_24, %c0_25], %64 {strides = array<i32>} : memref<2x32xf32, #tpu.memory_space<vmem>>, vector<2x32xf32>,
      %cst_26 = arith.constant 0.000000e+00 : f32
      %66 = vector.broadcast %cst_26 : f32 to vector<2x32xf32>
      %c0_27 = arith.constant 0 : index
      %c0_28 = arith.constant 0 : index
      %67 = vector.load %arg6[%c0_27, %c0_28] : memref<2x32xf32, #tpu.memory_space<vmem>>, vector<2x32xf32>
      tpu.vector_store %arg6[%c0_27, %c0_28], %66 {strides = array<i32>} : memref<2x32xf32, #tpu.memory_space<vmem>>, vector<2x32xf32>,
    } else {
    }
    %c31_i32 = arith.constant 31 : i32
    %3 = arith.subi %c31_i32, %arg0 : i32
    %c0 = arith.constant 0 : index
    %c0_1 = arith.constant 0 : index
    %4 = vector.load %arg5[%c0, %c0_1] : memref<2x32xf32, #tpu.memory_space<vmem>>, vector<2x32xf32>
    %c0_2 = arith.constant 0 : index
    %c0_3 = arith.constant 0 : index
    %5 = vector.load %arg6[%c0_2, %c0_3] : memref<2x32xf32, #tpu.memory_space<vmem>>, vector<2x32xf32>
    %c0_4 = arith.constant 0 : index
    %c0_5 = arith.constant 0 : index
    %c0_6 = arith.constant 0 : index
    %6 = vector.load %arg2[%c0_4, %c0_5, %c0_6] : memref<1x2x128xf32, #tpu.memory_space<vmem>>, vector<1x2x128xf32>
    %7 = vector.shape_cast %6 : vector<1x2x128xf32> to vector<2x128xf32>
    %8 = arith.truncf %4 : vector<2x32xf32> to vector<2x32xbf16>
    %c0_7 = arith.constant 0 : index
    %c0_8 = arith.constant 0 : index
    %9 = vector.load %arg3[%c0_7, %c0_8] : memref<32x128xf32, #tpu.memory_space<vmem>>, vector<32x128xf32>
    %10 = arith.truncf %9 : vector<32x128xf32> to vector<32x128xbf16>
    %cst = arith.constant dense<0.000000e+00> : vector<2x128xf32>
    %11 = tpu.matmul %8, %10, %cst {dimension_numbers = #tpu.dot_dimension_numbers<[1], [0], [0], [1], [0, 0, 1, 1], [], []>} : vector<2x32xbf16>, vector<32x128xbf16>, vector<2x128xf32> -> vector<2x128xf32>
    %12 = arith.addf %7, %11 : vector<2x128xf32>
    %13 = vector.extract_strided_slice %12 {offsets = [0, 0], sizes = [2, 32], strides = [1, 1]} : vector<2x128xf32> to vector<2x32xf32>
    %14 = arith.negf %13 : vector<2x32xf32>
    %15 = math.exp %14 : vector<2x32xf32>
    %cst_9 = arith.constant 1.000000e+00 : f32
    %16 = vector.broadcast %cst_9 : f32 to vector<2x32xf32>
    %17 = arith.addf %16, %15 : vector<2x32xf32>
    %18 = arith.divf %16, %17 : vector<2x32xf32>
    %19 = vector.extract_strided_slice %12 {offsets = [0, 32], sizes = [2, 32], strides = [1, 1]} : vector<2x128xf32> to vector<2x32xf32>
    %20 = arith.negf %19 : vector<2x32xf32>
    %21 = math.exp %20 : vector<2x32xf32>
    %cst_10 = arith.constant 1.000000e+00 : f32
    %22 = vector.broadcast %cst_10 : f32 to vector<2x32xf32>
    %23 = arith.addf %22, %21 : vector<2x32xf32>
    %24 = arith.divf %22, %23 : vector<2x32xf32>
    %25 = vector.extract_strided_slice %12 {offsets = [0, 64], sizes = [2, 32], strides = [1, 1]} : vector<2x128xf32> to vector<2x32xf32>
    %26 = math.tanh %25 : vector<2x32xf32>
    %27 = vector.extract_strided_slice %12 {offsets = [0, 96], sizes = [2, 32], strides = [1, 1]} : vector<2x128xf32> to vector<2x32xf32>
    %28 = arith.negf %27 : vector<2x32xf32>
    %29 = math.exp %28 : vector<2x32xf32>
    %cst_11 = arith.constant 1.000000e+00 : f32
    %30 = vector.broadcast %cst_11 : f32 to vector<2x32xf32>
    %31 = arith.addf %30, %29 : vector<2x32xf32>
    %32 = arith.divf %30, %31 : vector<2x32xf32>
    %33 = arith.mulf %24, %5 : vector<2x32xf32>
    %34 = arith.mulf %18, %26 : vector<2x32xf32>
    %35 = arith.addf %33, %34 : vector<2x32xf32>
    %36 = math.tanh %35 : vector<2x32xf32>
    %37 = arith.mulf %32, %36 : vector<2x32xf32>
    %c0_12 = arith.constant 0 : index
    %c0_13 = arith.constant 0 : index
    %38 = vector.load %arg1[%c0_12, %c0_13] : memref<2x1xi32, #tpu.memory_space<vmem>>, vector<2x1xi32>
    %39 = vector.broadcast %3 : i32 to vector<2x1xi32>
    %40 = arith.cmpi slt, %39, %38 : vector<2x1xi32>
    %41 = arith.extui %40 : vector<2x1xi1> to vector<2x1xi32>
    %42 = arith.sitofp %41 : vector<2x1xi32> to vector<2x1xf32>
    %43 = vector.broadcast %42 : vector<2x1xf32> to vector<2x32xf32>
    %44 = arith.mulf %43, %37 : vector<2x32xf32>
    %cst_14 = arith.constant 1.000000e+00 : f32
    %45 = vector.broadcast %cst_14 : f32 to vector<2x1xf32>
    %46 = arith.subf %45, %42 : vector<2x1xf32>
    %47 = vector.broadcast %46 : vector<2x1xf32> to vector<2x32xf32>
    %48 = arith.mulf %47, %4 : vector<2x32xf32>
    %49 = arith.addf %44, %48 : vector<2x32xf32>
    %c0_15 = arith.constant 0 : index
    %c0_16 = arith.constant 0 : index
    %50 = vector.load %arg5[%c0_15, %c0_16] : memref<2x32xf32, #tpu.memory_space<vmem>>, vector<2x32xf32>
    tpu.vector_store %arg5[%c0_15, %c0_16], %49 {strides = array<i32>} : memref<2x32xf32, #tpu.memory_space<vmem>>, vector<2x32xf32>,
    %51 = vector.broadcast %42 : vector<2x1xf32> to vector<2x32xf32>
    %52 = arith.mulf %51, %35 : vector<2x32xf32>
    %cst_17 = arith.constant 1.000000e+00 : f32
    %53 = vector.broadcast %cst_17 : f32 to vector<2x1xf32>
    %54 = arith.subf %53, %42 : vector<2x1xf32>
    %55 = vector.broadcast %54 : vector<2x1xf32> to vector<2x32xf32>
    %56 = arith.mulf %55, %5 : vector<2x32xf32>
    %57 = arith.addf %52, %56 : vector<2x32xf32>
    %c0_18 = arith.constant 0 : index
    %c0_19 = arith.constant 0 : index
    %58 = vector.load %arg6[%c0_18, %c0_19] : memref<2x32xf32, #tpu.memory_space<vmem>>, vector<2x32xf32>
    tpu.vector_store %arg6[%c0_18, %c0_19], %57 {strides = array<i32>} : memref<2x32xf32, #tpu.memory_space<vmem>>, vector<2x32xf32>,
    %59 = vector.broadcast %42 : vector<2x1xf32> to vector<2x32xf32>
    %60 = arith.mulf %59, %37 : vector<2x32xf32>
    %c0_20 = arith.constant 0 : index
    %c0_21 = arith.constant 0 : index
    %c0_22 = arith.constant 0 : index
    %61 = vector.load %arg4[%c0_20, %c0_21, %c0_22] : memref<1x2x32xf32, #tpu.memory_space<vmem>>, vector<1x2x32xf32>
    %62 = vector.shape_cast %61 : vector<1x2x32xf32> to vector<2x32xf32>
    %63 = vector.shape_cast %60 : vector<2x32xf32> to vector<1x2x32xf32>
    tpu.vector_store %arg4[%c0_20, %c0_21, %c0_22], %63 {strides = array<i32>} : memref<1x2x32xf32, #tpu.memory_space<vmem>>, vector<1x2x32xf32>,
    return
  }
  func.func @transform_0(%arg0: i32) -> (i32, i32) {
    %c0_i32 = arith.constant 0 : i32
    %c0_i32_0 = arith.constant 0 : i32
    %c0_i32_1 = arith.constant 0 : i32
    return %c0_i32, %c0_i32_0 : i32, i32
  }
  func.func @transform_1(%arg0: i32) -> (i32, i32, i32) {
    %c31_i32 = arith.constant 31 : i32
    %0 = arith.subi %c31_i32, %arg0 : i32
    %c0_i32 = arith.constant 0 : i32
    %c0_i32_0 = arith.constant 0 : i32
    %c0_i32_1 = arith.constant 0 : i32
    return %0, %c0_i32, %c0_i32_0 : i32, i32, i32
  }
  func.func @transform_2(%arg0: i32) -> (i32, i32) {
    %c0_i32 = arith.constant 0 : i32
    %c0_i32_0 = arith.constant 0 : i32
    %c0_i32_1 = arith.constant 0 : i32
    return %c0_i32, %c0_i32_0 : i32, i32
  }
  func.func @transform_3(%arg0: i32) -> (i32, i32, i32) {
    %c31_i32 = arith.constant 31 : i32
    %0 = arith.subi %c31_i32, %arg0 : i32
    %c0_i32 = arith.constant 0 : i32
    %c0_i32_0 = arith.constant 0 : i32
    %c0_i32_1 = arith.constant 0 : i32
    return %0, %c0_i32, %c0_i32_0 : i32, i32, i32
  }
}

module attributes {stable_mosaic.version = 11 : i64} {
  func.func @_lstm_step_kernel(%arg0: i32, %arg1: memref<2x1xi32, #tpu.memory_space<vmem>>, %arg2: memref<1x2x128xf32, #tpu.memory_space<vmem>>, %arg3: memref<32x128xf32, #tpu.memory_space<vmem>>, %arg4: memref<1x2x32xf32, #tpu.memory_space<vmem>>, %arg5: memref<2x32xf32, #tpu.memory_space<vmem>>, %arg6: memref<2x32xf32, #tpu.memory_space<vmem>>) attributes {dimension_semantics = [#tpu.dimension_semantics<arbitrary>], iteration_bounds = array<i64: 32>, scalar_prefetch = 0 : i64, scratch_operands = 2 : i64, tpu.core_type = #tpu.core_type<tc>, window_params = [{pipeline_mode = #tpu.pipeline_mode<synchronous>, transform_indices = @transform_0, window_bounds = array<i64: 2, 1>}, {transform_indices = @transform_1, window_bounds = array<i64: 1, 2, 128>}, {pipeline_mode = #tpu.pipeline_mode<synchronous>, transform_indices = @transform_2, window_bounds = array<i64: 32, 128>}, {transform_indices = @transform_3, window_bounds = array<i64: 1, 2, 32>}]} {
    %c0_i32 = arith.constant 0 : i32
    %0 = arith.cmpi eq, %arg0, %c0_i32 : i32
    %1 = arith.extui %0 : i1 to i32
    %c0_i32_0 = arith.constant 0 : i32
    %2 = arith.cmpi ne, %1, %c0_i32_0 : i32
    scf.if %2 {
      %cst_23 = arith.constant 0.000000e+00 : f32
      %63 = vector.broadcast %cst_23 : f32 to vector<2x32xf32>
      %c0_24 = arith.constant 0 : index
      %c0_25 = arith.constant 0 : index
      %64 = vector.load %arg5[%c0_24, %c0_25] : memref<2x32xf32, #tpu.memory_space<vmem>>, vector<2x32xf32>
      tpu.vector_store %arg5[%c0_24, %c0_25], %63 {strides = array<i32>} : memref<2x32xf32, #tpu.memory_space<vmem>>, vector<2x32xf32>,
      %cst_26 = arith.constant 0.000000e+00 : f32
      %65 = vector.broadcast %cst_26 : f32 to vector<2x32xf32>
      %c0_27 = arith.constant 0 : index
      %c0_28 = arith.constant 0 : index
      %66 = vector.load %arg6[%c0_27, %c0_28] : memref<2x32xf32, #tpu.memory_space<vmem>>, vector<2x32xf32>
      tpu.vector_store %arg6[%c0_27, %c0_28], %65 {strides = array<i32>} : memref<2x32xf32, #tpu.memory_space<vmem>>, vector<2x32xf32>,
    } else {
    }
    %c0 = arith.constant 0 : index
    %c0_1 = arith.constant 0 : index
    %3 = vector.load %arg5[%c0, %c0_1] : memref<2x32xf32, #tpu.memory_space<vmem>>, vector<2x32xf32>
    %c0_2 = arith.constant 0 : index
    %c0_3 = arith.constant 0 : index
    %4 = vector.load %arg6[%c0_2, %c0_3] : memref<2x32xf32, #tpu.memory_space<vmem>>, vector<2x32xf32>
    %c0_4 = arith.constant 0 : index
    %c0_5 = arith.constant 0 : index
    %c0_6 = arith.constant 0 : index
    %5 = vector.load %arg2[%c0_4, %c0_5, %c0_6] : memref<1x2x128xf32, #tpu.memory_space<vmem>>, vector<1x2x128xf32>
    %6 = vector.shape_cast %5 : vector<1x2x128xf32> to vector<2x128xf32>
    %7 = arith.truncf %3 : vector<2x32xf32> to vector<2x32xbf16>
    %c0_7 = arith.constant 0 : index
    %c0_8 = arith.constant 0 : index
    %8 = vector.load %arg3[%c0_7, %c0_8] : memref<32x128xf32, #tpu.memory_space<vmem>>, vector<32x128xf32>
    %9 = arith.truncf %8 : vector<32x128xf32> to vector<32x128xbf16>
    %cst = arith.constant dense<0.000000e+00> : vector<2x128xf32>
    %10 = tpu.matmul %7, %9, %cst {dimension_numbers = #tpu.dot_dimension_numbers<[1], [0], [0], [1], [0, 0, 1, 1], [], []>} : vector<2x32xbf16>, vector<32x128xbf16>, vector<2x128xf32> -> vector<2x128xf32>
    %11 = arith.addf %6, %10 : vector<2x128xf32>
    %12 = vector.extract_strided_slice %11 {offsets = [0, 0], sizes = [2, 32], strides = [1, 1]} : vector<2x128xf32> to vector<2x32xf32>
    %13 = arith.negf %12 : vector<2x32xf32>
    %14 = math.exp %13 : vector<2x32xf32>
    %cst_9 = arith.constant 1.000000e+00 : f32
    %15 = vector.broadcast %cst_9 : f32 to vector<2x32xf32>
    %16 = arith.addf %15, %14 : vector<2x32xf32>
    %17 = arith.divf %15, %16 : vector<2x32xf32>
    %18 = vector.extract_strided_slice %11 {offsets = [0, 32], sizes = [2, 32], strides = [1, 1]} : vector<2x128xf32> to vector<2x32xf32>
    %19 = arith.negf %18 : vector<2x32xf32>
    %20 = math.exp %19 : vector<2x32xf32>
    %cst_10 = arith.constant 1.000000e+00 : f32
    %21 = vector.broadcast %cst_10 : f32 to vector<2x32xf32>
    %22 = arith.addf %21, %20 : vector<2x32xf32>
    %23 = arith.divf %21, %22 : vector<2x32xf32>
    %24 = vector.extract_strided_slice %11 {offsets = [0, 64], sizes = [2, 32], strides = [1, 1]} : vector<2x128xf32> to vector<2x32xf32>
    %25 = math.tanh %24 : vector<2x32xf32>
    %26 = vector.extract_strided_slice %11 {offsets = [0, 96], sizes = [2, 32], strides = [1, 1]} : vector<2x128xf32> to vector<2x32xf32>
    %27 = arith.negf %26 : vector<2x32xf32>
    %28 = math.exp %27 : vector<2x32xf32>
    %cst_11 = arith.constant 1.000000e+00 : f32
    %29 = vector.broadcast %cst_11 : f32 to vector<2x32xf32>
    %30 = arith.addf %29, %28 : vector<2x32xf32>
    %31 = arith.divf %29, %30 : vector<2x32xf32>
    %32 = arith.mulf %23, %4 : vector<2x32xf32>
    %33 = arith.mulf %17, %25 : vector<2x32xf32>
    %34 = arith.addf %32, %33 : vector<2x32xf32>
    %35 = math.tanh %34 : vector<2x32xf32>
    %36 = arith.mulf %31, %35 : vector<2x32xf32>
    %c0_12 = arith.constant 0 : index
    %c0_13 = arith.constant 0 : index
    %37 = vector.load %arg1[%c0_12, %c0_13] : memref<2x1xi32, #tpu.memory_space<vmem>>, vector<2x1xi32>
    %38 = vector.broadcast %arg0 : i32 to vector<2x1xi32>
    %39 = arith.cmpi slt, %38, %37 : vector<2x1xi32>
    %40 = arith.extui %39 : vector<2x1xi1> to vector<2x1xi32>
    %41 = arith.sitofp %40 : vector<2x1xi32> to vector<2x1xf32>
    %42 = vector.broadcast %41 : vector<2x1xf32> to vector<2x32xf32>
    %43 = arith.mulf %42, %36 : vector<2x32xf32>
    %cst_14 = arith.constant 1.000000e+00 : f32
    %44 = vector.broadcast %cst_14 : f32 to vector<2x1xf32>
    %45 = arith.subf %44, %41 : vector<2x1xf32>
    %46 = vector.broadcast %45 : vector<2x1xf32> to vector<2x32xf32>
    %47 = arith.mulf %46, %3 : vector<2x32xf32>
    %48 = arith.addf %43, %47 : vector<2x32xf32>
    %c0_15 = arith.constant 0 : index
    %c0_16 = arith.constant 0 : index
    %49 = vector.load %arg5[%c0_15, %c0_16] : memref<2x32xf32, #tpu.memory_space<vmem>>, vector<2x32xf32>
    tpu.vector_store %arg5[%c0_15, %c0_16], %48 {strides = array<i32>} : memref<2x32xf32, #tpu.memory_space<vmem>>, vector<2x32xf32>,
    %50 = vector.broadcast %41 : vector<2x1xf32> to vector<2x32xf32>
    %51 = arith.mulf %50, %34 : vector<2x32xf32>
    %cst_17 = arith.constant 1.000000e+00 : f32
    %52 = vector.broadcast %cst_17 : f32 to vector<2x1xf32>
    %53 = arith.subf %52, %41 : vector<2x1xf32>
    %54 = vector.broadcast %53 : vector<2x1xf32> to vector<2x32xf32>
    %55 = arith.mulf %54, %4 : vector<2x32xf32>
    %56 = arith.addf %51, %55 : vector<2x32xf32>
    %c0_18 = arith.constant 0 : index
    %c0_19 = arith.constant 0 : index
    %57 = vector.load %arg6[%c0_18, %c0_19] : memref<2x32xf32, #tpu.memory_space<vmem>>, vector<2x32xf32>
    tpu.vector_store %arg6[%c0_18, %c0_19], %56 {strides = array<i32>} : memref<2x32xf32, #tpu.memory_space<vmem>>, vector<2x32xf32>,
    %58 = vector.broadcast %41 : vector<2x1xf32> to vector<2x32xf32>
    %59 = arith.mulf %58, %36 : vector<2x32xf32>
    %c0_20 = arith.constant 0 : index
    %c0_21 = arith.constant 0 : index
    %c0_22 = arith.constant 0 : index
    %60 = vector.load %arg4[%c0_20, %c0_21, %c0_22] : memref<1x2x32xf32, #tpu.memory_space<vmem>>, vector<1x2x32xf32>
    %61 = vector.shape_cast %60 : vector<1x2x32xf32> to vector<2x32xf32>
    %62 = vector.shape_cast %59 : vector<2x32xf32> to vector<1x2x32xf32>
    tpu.vector_store %arg4[%c0_20, %c0_21, %c0_22], %62 {strides = array<i32>} : memref<1x2x32xf32, #tpu.memory_space<vmem>>, vector<1x2x32xf32>,
    return
  }
  func.func @transform_0(%arg0: i32) -> (i32, i32) {
    %c0_i32 = arith.constant 0 : i32
    %c0_i32_0 = arith.constant 0 : i32
    %c0_i32_1 = arith.constant 0 : i32
    return %c0_i32, %c0_i32_0 : i32, i32
  }
  func.func @transform_1(%arg0: i32) -> (i32, i32, i32) {
    %c0_i32 = arith.constant 0 : i32
    %c0_i32_0 = arith.constant 0 : i32
    %c0_i32_1 = arith.constant 0 : i32
    return %arg0, %c0_i32, %c0_i32_0 : i32, i32, i32
  }
  func.func @transform_2(%arg0: i32) -> (i32, i32) {
    %c0_i32 = arith.constant 0 : i32
    %c0_i32_0 = arith.constant 0 : i32
    %c0_i32_1 = arith.constant 0 : i32
    return %c0_i32, %c0_i32_0 : i32, i32
  }
  func.func @transform_3(%arg0: i32) -> (i32, i32, i32) {
    %c0_i32 = arith.constant 0 : i32
    %c0_i32_0 = arith.constant 0 : i32
    %c0_i32_1 = arith.constant 0 : i32
    return %arg0, %c0_i32, %c0_i32_0 : i32, i32, i32
  }
}

module attributes {stable_mosaic.version = 11 : i64} {
  func.func @_linear_kernel(%arg0: i32, %arg1: memref<32x32xf32, #tpu.memory_space<vmem>>, %arg2: memref<32x128xf32, #tpu.memory_space<vmem>>, %arg3: memref<1x128xf32, #tpu.memory_space<vmem>>, %arg4: memref<32x128xf32, #tpu.memory_space<vmem>>) attributes {dimension_semantics = [#tpu.dimension_semantics<parallel>], iteration_bounds = array<i64: 1>, scalar_prefetch = 0 : i64, scratch_operands = 0 : i64, tpu.core_type = #tpu.core_type<tc>, window_params = [{transform_indices = @transform_0, window_bounds = array<i64: 32, 32>}, {pipeline_mode = #tpu.pipeline_mode<synchronous>, transform_indices = @transform_1, window_bounds = array<i64: 32, 128>}, {pipeline_mode = #tpu.pipeline_mode<synchronous>, transform_indices = @transform_2, window_bounds = array<i64: 1, 128>}, {transform_indices = @transform_3, window_bounds = array<i64: 32, 128>}]} {
    %c0 = arith.constant 0 : index
    %c0_0 = arith.constant 0 : index
    %0 = vector.load %arg1[%c0, %c0_0] : memref<32x32xf32, #tpu.memory_space<vmem>>, vector<32x32xf32>
    %1 = arith.truncf %0 : vector<32x32xf32> to vector<32x32xbf16>
    %c0_1 = arith.constant 0 : index
    %c0_2 = arith.constant 0 : index
    %2 = vector.load %arg2[%c0_1, %c0_2] : memref<32x128xf32, #tpu.memory_space<vmem>>, vector<32x128xf32>
    %3 = arith.truncf %2 : vector<32x128xf32> to vector<32x128xbf16>
    %cst = arith.constant dense<0.000000e+00> : vector<32x128xf32>
    %4 = tpu.matmul %1, %3, %cst {dimension_numbers = #tpu.dot_dimension_numbers<[1], [0], [0], [1], [0, 0, 1, 1], [], []>} : vector<32x32xbf16>, vector<32x128xbf16>, vector<32x128xf32> -> vector<32x128xf32>
    %c0_3 = arith.constant 0 : index
    %c0_4 = arith.constant 0 : index
    %5 = vector.load %arg3[%c0_3, %c0_4] : memref<1x128xf32, #tpu.memory_space<vmem>>, vector<1x128xf32>
    %6 = vector.broadcast %5 : vector<1x128xf32> to vector<32x128xf32>
    %7 = arith.addf %4, %6 : vector<32x128xf32>
    %c0_5 = arith.constant 0 : index
    %c0_6 = arith.constant 0 : index
    %8 = vector.load %arg4[%c0_5, %c0_6] : memref<32x128xf32, #tpu.memory_space<vmem>>, vector<32x128xf32>
    tpu.vector_store %arg4[%c0_5, %c0_6], %7 {strides = array<i32>} : memref<32x128xf32, #tpu.memory_space<vmem>>, vector<32x128xf32>,
    return
  }
  func.func @transform_0(%arg0: i32) -> (i32, i32) {
    %c0_i32 = arith.constant 0 : i32
    %c0_i32_0 = arith.constant 0 : i32
    return %arg0, %c0_i32 : i32, i32
  }
  func.func @transform_1(%arg0: i32) -> (i32, i32) {
    %c0_i32 = arith.constant 0 : i32
    %c0_i32_0 = arith.constant 0 : i32
    %c0_i32_1 = arith.constant 0 : i32
    return %c0_i32, %c0_i32_0 : i32, i32
  }
  func.func @transform_2(%arg0: i32) -> (i32, i32) {
    %c0_i32 = arith.constant 0 : i32
    %c0_i32_0 = arith.constant 0 : i32
    %c0_i32_1 = arith.constant 0 : i32
    return %c0_i32, %c0_i32_0 : i32, i32
  }
  func.func @transform_3(%arg0: i32) -> (i32, i32) {
    %c0_i32 = arith.constant 0 : i32
    %c0_i32_0 = arith.constant 0 : i32
    return %arg0, %c0_i32 : i32, i32
  }
}

module attributes {stable_mosaic.version = 11 : i64} {
  func.func @_emb_kernel(%arg0: i32, %arg1: memref<32x48xf32, #tpu.memory_space<vmem>>, %arg2: memref<48x32xf32, #tpu.memory_space<vmem>>, %arg3: memref<32x64xf32, #tpu.memory_space<vmem>>, %arg4: memref<1x64xf32, #tpu.memory_space<vmem>>, %arg5: memref<32x64xf32, #tpu.memory_space<vmem>>, %arg6: memref<1x64xf32, #tpu.memory_space<vmem>>, %arg7: memref<32x32xf32, #tpu.memory_space<vmem>>) attributes {dimension_semantics = [#tpu.dimension_semantics<parallel>], iteration_bounds = array<i64: 1>, scalar_prefetch = 0 : i64, scratch_operands = 0 : i64, tpu.core_type = #tpu.core_type<tc>, window_params = [{transform_indices = @transform_0, window_bounds = array<i64: 32, 48>}, {pipeline_mode = #tpu.pipeline_mode<synchronous>, transform_indices = @transform_1, window_bounds = array<i64: 48, 32>}, {pipeline_mode = #tpu.pipeline_mode<synchronous>, transform_indices = @transform_2, window_bounds = array<i64: 32, 64>}, {pipeline_mode = #tpu.pipeline_mode<synchronous>, transform_indices = @transform_3, window_bounds = array<i64: 1, 64>}, {pipeline_mode = #tpu.pipeline_mode<synchronous>, transform_indices = @transform_4, window_bounds = array<i64: 32, 64>}, {pipeline_mode = #tpu.pipeline_mode<synchronous>, transform_indices = @transform_5, window_bounds = array<i64: 1, 64>}, {transform_indices = @transform_6, window_bounds = array<i64: 32, 32>}]} {
    %c0 = arith.constant 0 : index
    %c0_0 = arith.constant 0 : index
    %0 = vector.load %arg1[%c0, %c0_0] : memref<32x48xf32, #tpu.memory_space<vmem>>, vector<32x48xf32>
    %1 = arith.truncf %0 : vector<32x48xf32> to vector<32x48xbf16>
    %c0_1 = arith.constant 0 : index
    %c0_2 = arith.constant 0 : index
    %2 = vector.load %arg2[%c0_1, %c0_2] : memref<48x32xf32, #tpu.memory_space<vmem>>, vector<48x32xf32>
    %3 = arith.truncf %2 : vector<48x32xf32> to vector<48x32xbf16>
    %cst = arith.constant dense<0.000000e+00> : vector<32x32xf32>
    %4 = tpu.matmul %1, %3, %cst {dimension_numbers = #tpu.dot_dimension_numbers<[1], [0], [0], [1], [0, 0, 1, 1], [], []>} : vector<32x48xbf16>, vector<48x32xbf16>, vector<32x32xf32> -> vector<32x32xf32>
    %5 = arith.truncf %4 : vector<32x32xf32> to vector<32x32xbf16>
    %c0_3 = arith.constant 0 : index
    %c0_4 = arith.constant 0 : index
    %6 = vector.load %arg3[%c0_3, %c0_4] : memref<32x64xf32, #tpu.memory_space<vmem>>, vector<32x64xf32>
    %7 = arith.truncf %6 : vector<32x64xf32> to vector<32x64xbf16>
    %cst_5 = arith.constant dense<0.000000e+00> : vector<32x64xf32>
    %8 = tpu.matmul %5, %7, %cst_5 {dimension_numbers = #tpu.dot_dimension_numbers<[1], [0], [0], [1], [0, 0, 1, 1], [], []>} : vector<32x32xbf16>, vector<32x64xbf16>, vector<32x64xf32> -> vector<32x64xf32>
    %c0_6 = arith.constant 0 : index
    %c0_7 = arith.constant 0 : index
    %9 = vector.load %arg4[%c0_6, %c0_7] : memref<1x64xf32, #tpu.memory_space<vmem>>, vector<1x64xf32>
    %10 = vector.broadcast %9 : vector<1x64xf32> to vector<32x64xf32>
    %11 = arith.addf %8, %10 : vector<32x64xf32>
    %12 = vector.extract_strided_slice %11 {offsets = [0, 0], sizes = [32, 32], strides = [1, 1]} : vector<32x64xf32> to vector<32x32xf32>
    %cst_8 = arith.constant 0.000000e+00 : f32
    %13 = vector.broadcast %cst_8 : f32 to vector<32x32xf32>
    %14 = arith.maximumf %12, %13 : vector<32x32xf32>
    %15 = vector.extract_strided_slice %11 {offsets = [0, 32], sizes = [32, 32], strides = [1, 1]} : vector<32x64xf32> to vector<32x32xf32>
    %16 = arith.negf %15 : vector<32x32xf32>
    %17 = math.exp %16 : vector<32x32xf32>
    %cst_9 = arith.constant 1.000000e+00 : f32
    %18 = vector.broadcast %cst_9 : f32 to vector<32x32xf32>
    %19 = arith.addf %18, %17 : vector<32x32xf32>
    %20 = arith.divf %18, %19 : vector<32x32xf32>
    %21 = arith.mulf %20, %14 : vector<32x32xf32>
    %cst_10 = arith.constant 1.000000e+00 : f32
    %22 = vector.broadcast %cst_10 : f32 to vector<32x32xf32>
    %23 = arith.subf %22, %20 : vector<32x32xf32>
    %24 = arith.mulf %23, %4 : vector<32x32xf32>
    %25 = arith.addf %21, %24 : vector<32x32xf32>
    %26 = arith.truncf %25 : vector<32x32xf32> to vector<32x32xbf16>
    %c0_11 = arith.constant 0 : index
    %c0_12 = arith.constant 0 : index
    %27 = vector.load %arg5[%c0_11, %c0_12] : memref<32x64xf32, #tpu.memory_space<vmem>>, vector<32x64xf32>
    %28 = arith.truncf %27 : vector<32x64xf32> to vector<32x64xbf16>
    %cst_13 = arith.constant dense<0.000000e+00> : vector<32x64xf32>
    %29 = tpu.matmul %26, %28, %cst_13 {dimension_numbers = #tpu.dot_dimension_numbers<[1], [0], [0], [1], [0, 0, 1, 1], [], []>} : vector<32x32xbf16>, vector<32x64xbf16>, vector<32x64xf32> -> vector<32x64xf32>
    %c0_14 = arith.constant 0 : index
    %c0_15 = arith.constant 0 : index
    %30 = vector.load %arg6[%c0_14, %c0_15] : memref<1x64xf32, #tpu.memory_space<vmem>>, vector<1x64xf32>
    %31 = vector.broadcast %30 : vector<1x64xf32> to vector<32x64xf32>
    %32 = arith.addf %29, %31 : vector<32x64xf32>
    %33 = vector.extract_strided_slice %32 {offsets = [0, 0], sizes = [32, 32], strides = [1, 1]} : vector<32x64xf32> to vector<32x32xf32>
    %cst_16 = arith.constant 0.000000e+00 : f32
    %34 = vector.broadcast %cst_16 : f32 to vector<32x32xf32>
    %35 = arith.maximumf %33, %34 : vector<32x32xf32>
    %36 = vector.extract_strided_slice %32 {offsets = [0, 32], sizes = [32, 32], strides = [1, 1]} : vector<32x64xf32> to vector<32x32xf32>
    %37 = arith.negf %36 : vector<32x32xf32>
    %38 = math.exp %37 : vector<32x32xf32>
    %cst_17 = arith.constant 1.000000e+00 : f32
    %39 = vector.broadcast %cst_17 : f32 to vector<32x32xf32>
    %40 = arith.addf %39, %38 : vector<32x32xf32>
    %41 = arith.divf %39, %40 : vector<32x32xf32>
    %42 = arith.mulf %41, %35 : vector<32x32xf32>
    %cst_18 = arith.constant 1.000000e+00 : f32
    %43 = vector.broadcast %cst_18 : f32 to vector<32x32xf32>
    %44 = arith.subf %43, %41 : vector<32x32xf32>
    %45 = arith.mulf %44, %25 : vector<32x32xf32>
    %46 = arith.addf %42, %45 : vector<32x32xf32>
    %c0_19 = arith.constant 0 : index
    %c0_20 = arith.constant 0 : index
    %47 = vector.load %arg7[%c0_19, %c0_20] : memref<32x32xf32, #tpu.memory_space<vmem>>, vector<32x32xf32>
    tpu.vector_store %arg7[%c0_19, %c0_20], %46 {strides = array<i32>} : memref<32x32xf32, #tpu.memory_space<vmem>>, vector<32x32xf32>,
    return
  }
  func.func @transform_0(%arg0: i32) -> (i32, i32) {
    %c0_i32 = arith.constant 0 : i32
    %c0_i32_0 = arith.constant 0 : i32
    return %arg0, %c0_i32 : i32, i32
  }
  func.func @transform_1(%arg0: i32) -> (i32, i32) {
    %c0_i32 = arith.constant 0 : i32
    %c0_i32_0 = arith.constant 0 : i32
    %c0_i32_1 = arith.constant 0 : i32
    return %c0_i32, %c0_i32_0 : i32, i32
  }
  func.func @transform_2(%arg0: i32) -> (i32, i32) {
    %c0_i32 = arith.constant 0 : i32
    %c0_i32_0 = arith.constant 0 : i32
    %c0_i32_1 = arith.constant 0 : i32
    return %c0_i32, %c0_i32_0 : i32, i32
  }
  func.func @transform_3(%arg0: i32) -> (i32, i32) {
    %c0_i32 = arith.constant 0 : i32
    %c0_i32_0 = arith.constant 0 : i32
    %c0_i32_1 = arith.constant 0 : i32
    return %c0_i32, %c0_i32_0 : i32, i32
  }
  func.func @transform_4(%arg0: i32) -> (i32, i32) {
    %c0_i32 = arith.constant 0 : i32
    %c0_i32_0 = arith.constant 0 : i32
    %c0_i32_1 = arith.constant 0 : i32
    return %c0_i32, %c0_i32_0 : i32, i32
  }
  func.func @transform_5(%arg0: i32) -> (i32, i32) {
    %c0_i32 = arith.constant 0 : i32
    %c0_i32_0 = arith.constant 0 : i32
    %c0_i32_1 = arith.constant 0 : i32
    return %c0_i32, %c0_i32_0 : i32, i32
  }
  func.func @transform_6(%arg0: i32) -> (i32, i32) {
    %c0_i32 = arith.constant 0 : i32
    %c0_i32_0 = arith.constant 0 : i32
    return %arg0, %c0_i32 : i32, i32
  }
}

module attributes {stable_mosaic.version = 11 : i64} {
  func.func @_lstm_step_kernel(%arg0: i32, %arg1: memref<2x1xi32, #tpu.memory_space<vmem>>, %arg2: memref<1x2x128xf32, #tpu.memory_space<vmem>>, %arg3: memref<32x128xf32, #tpu.memory_space<vmem>>, %arg4: memref<1x2x32xf32, #tpu.memory_space<vmem>>, %arg5: memref<2x32xf32, #tpu.memory_space<vmem>>, %arg6: memref<2x32xf32, #tpu.memory_space<vmem>>) attributes {dimension_semantics = [#tpu.dimension_semantics<arbitrary>], iteration_bounds = array<i64: 16>, scalar_prefetch = 0 : i64, scratch_operands = 2 : i64, tpu.core_type = #tpu.core_type<tc>, window_params = [{pipeline_mode = #tpu.pipeline_mode<synchronous>, transform_indices = @transform_0, window_bounds = array<i64: 2, 1>}, {transform_indices = @transform_1, window_bounds = array<i64: 1, 2, 128>}, {pipeline_mode = #tpu.pipeline_mode<synchronous>, transform_indices = @transform_2, window_bounds = array<i64: 32, 128>}, {transform_indices = @transform_3, window_bounds = array<i64: 1, 2, 32>}]} {
    %c0_i32 = arith.constant 0 : i32
    %0 = arith.cmpi eq, %arg0, %c0_i32 : i32
    %1 = arith.extui %0 : i1 to i32
    %c0_i32_0 = arith.constant 0 : i32
    %2 = arith.cmpi ne, %1, %c0_i32_0 : i32
    scf.if %2 {
      %cst_23 = arith.constant 0.000000e+00 : f32
      %64 = vector.broadcast %cst_23 : f32 to vector<2x32xf32>
      %c0_24 = arith.constant 0 : index
      %c0_25 = arith.constant 0 : index
      %65 = vector.load %arg5[%c0_24, %c0_25] : memref<2x32xf32, #tpu.memory_space<vmem>>, vector<2x32xf32>
      tpu.vector_store %arg5[%c0_24, %c0_25], %64 {strides = array<i32>} : memref<2x32xf32, #tpu.memory_space<vmem>>, vector<2x32xf32>,
      %cst_26 = arith.constant 0.000000e+00 : f32
      %66 = vector.broadcast %cst_26 : f32 to vector<2x32xf32>
      %c0_27 = arith.constant 0 : index
      %c0_28 = arith.constant 0 : index
      %67 = vector.load %arg6[%c0_27, %c0_28] : memref<2x32xf32, #tpu.memory_space<vmem>>, vector<2x32xf32>
      tpu.vector_store %arg6[%c0_27, %c0_28], %66 {strides = array<i32>} : memref<2x32xf32, #tpu.memory_space<vmem>>, vector<2x32xf32>,
    } else {
    }
    %c15_i32 = arith.constant 15 : i32
    %3 = arith.subi %c15_i32, %arg0 : i32
    %c0 = arith.constant 0 : index
    %c0_1 = arith.constant 0 : index
    %4 = vector.load %arg5[%c0, %c0_1] : memref<2x32xf32, #tpu.memory_space<vmem>>, vector<2x32xf32>
    %c0_2 = arith.constant 0 : index
    %c0_3 = arith.constant 0 : index
    %5 = vector.load %arg6[%c0_2, %c0_3] : memref<2x32xf32, #tpu.memory_space<vmem>>, vector<2x32xf32>
    %c0_4 = arith.constant 0 : index
    %c0_5 = arith.constant 0 : index
    %c0_6 = arith.constant 0 : index
    %6 = vector.load %arg2[%c0_4, %c0_5, %c0_6] : memref<1x2x128xf32, #tpu.memory_space<vmem>>, vector<1x2x128xf32>
    %7 = vector.shape_cast %6 : vector<1x2x128xf32> to vector<2x128xf32>
    %8 = arith.truncf %4 : vector<2x32xf32> to vector<2x32xbf16>
    %c0_7 = arith.constant 0 : index
    %c0_8 = arith.constant 0 : index
    %9 = vector.load %arg3[%c0_7, %c0_8] : memref<32x128xf32, #tpu.memory_space<vmem>>, vector<32x128xf32>
    %10 = arith.truncf %9 : vector<32x128xf32> to vector<32x128xbf16>
    %cst = arith.constant dense<0.000000e+00> : vector<2x128xf32>
    %11 = tpu.matmul %8, %10, %cst {dimension_numbers = #tpu.dot_dimension_numbers<[1], [0], [0], [1], [0, 0, 1, 1], [], []>} : vector<2x32xbf16>, vector<32x128xbf16>, vector<2x128xf32> -> vector<2x128xf32>
    %12 = arith.addf %7, %11 : vector<2x128xf32>
    %13 = vector.extract_strided_slice %12 {offsets = [0, 0], sizes = [2, 32], strides = [1, 1]} : vector<2x128xf32> to vector<2x32xf32>
    %14 = arith.negf %13 : vector<2x32xf32>
    %15 = math.exp %14 : vector<2x32xf32>
    %cst_9 = arith.constant 1.000000e+00 : f32
    %16 = vector.broadcast %cst_9 : f32 to vector<2x32xf32>
    %17 = arith.addf %16, %15 : vector<2x32xf32>
    %18 = arith.divf %16, %17 : vector<2x32xf32>
    %19 = vector.extract_strided_slice %12 {offsets = [0, 32], sizes = [2, 32], strides = [1, 1]} : vector<2x128xf32> to vector<2x32xf32>
    %20 = arith.negf %19 : vector<2x32xf32>
    %21 = math.exp %20 : vector<2x32xf32>
    %cst_10 = arith.constant 1.000000e+00 : f32
    %22 = vector.broadcast %cst_10 : f32 to vector<2x32xf32>
    %23 = arith.addf %22, %21 : vector<2x32xf32>
    %24 = arith.divf %22, %23 : vector<2x32xf32>
    %25 = vector.extract_strided_slice %12 {offsets = [0, 64], sizes = [2, 32], strides = [1, 1]} : vector<2x128xf32> to vector<2x32xf32>
    %26 = math.tanh %25 : vector<2x32xf32>
    %27 = vector.extract_strided_slice %12 {offsets = [0, 96], sizes = [2, 32], strides = [1, 1]} : vector<2x128xf32> to vector<2x32xf32>
    %28 = arith.negf %27 : vector<2x32xf32>
    %29 = math.exp %28 : vector<2x32xf32>
    %cst_11 = arith.constant 1.000000e+00 : f32
    %30 = vector.broadcast %cst_11 : f32 to vector<2x32xf32>
    %31 = arith.addf %30, %29 : vector<2x32xf32>
    %32 = arith.divf %30, %31 : vector<2x32xf32>
    %33 = arith.mulf %24, %5 : vector<2x32xf32>
    %34 = arith.mulf %18, %26 : vector<2x32xf32>
    %35 = arith.addf %33, %34 : vector<2x32xf32>
    %36 = math.tanh %35 : vector<2x32xf32>
    %37 = arith.mulf %32, %36 : vector<2x32xf32>
    %c0_12 = arith.constant 0 : index
    %c0_13 = arith.constant 0 : index
    %38 = vector.load %arg1[%c0_12, %c0_13] : memref<2x1xi32, #tpu.memory_space<vmem>>, vector<2x1xi32>
    %39 = vector.broadcast %3 : i32 to vector<2x1xi32>
    %40 = arith.cmpi slt, %39, %38 : vector<2x1xi32>
    %41 = arith.extui %40 : vector<2x1xi1> to vector<2x1xi32>
    %42 = arith.sitofp %41 : vector<2x1xi32> to vector<2x1xf32>
    %43 = vector.broadcast %42 : vector<2x1xf32> to vector<2x32xf32>
    %44 = arith.mulf %43, %37 : vector<2x32xf32>
    %cst_14 = arith.constant 1.000000e+00 : f32
    %45 = vector.broadcast %cst_14 : f32 to vector<2x1xf32>
    %46 = arith.subf %45, %42 : vector<2x1xf32>
    %47 = vector.broadcast %46 : vector<2x1xf32> to vector<2x32xf32>
    %48 = arith.mulf %47, %4 : vector<2x32xf32>
    %49 = arith.addf %44, %48 : vector<2x32xf32>
    %c0_15 = arith.constant 0 : index
    %c0_16 = arith.constant 0 : index
    %50 = vector.load %arg5[%c0_15, %c0_16] : memref<2x32xf32, #tpu.memory_space<vmem>>, vector<2x32xf32>
    tpu.vector_store %arg5[%c0_15, %c0_16], %49 {strides = array<i32>} : memref<2x32xf32, #tpu.memory_space<vmem>>, vector<2x32xf32>,
    %51 = vector.broadcast %42 : vector<2x1xf32> to vector<2x32xf32>
    %52 = arith.mulf %51, %35 : vector<2x32xf32>
    %cst_17 = arith.constant 1.000000e+00 : f32
    %53 = vector.broadcast %cst_17 : f32 to vector<2x1xf32>
    %54 = arith.subf %53, %42 : vector<2x1xf32>
    %55 = vector.broadcast %54 : vector<2x1xf32> to vector<2x32xf32>
    %56 = arith.mulf %55, %5 : vector<2x32xf32>
    %57 = arith.addf %52, %56 : vector<2x32xf32>
    %c0_18 = arith.constant 0 : index
    %c0_19 = arith.constant 0 : index
    %58 = vector.load %arg6[%c0_18, %c0_19] : memref<2x32xf32, #tpu.memory_space<vmem>>, vector<2x32xf32>
    tpu.vector_store %arg6[%c0_18, %c0_19], %57 {strides = array<i32>} : memref<2x32xf32, #tpu.memory_space<vmem>>, vector<2x32xf32>,
    %59 = vector.broadcast %42 : vector<2x1xf32> to vector<2x32xf32>
    %60 = arith.mulf %59, %37 : vector<2x32xf32>
    %c0_20 = arith.constant 0 : index
    %c0_21 = arith.constant 0 : index
    %c0_22 = arith.constant 0 : index
    %61 = vector.load %arg4[%c0_20, %c0_21, %c0_22] : memref<1x2x32xf32, #tpu.memory_space<vmem>>, vector<1x2x32xf32>
    %62 = vector.shape_cast %61 : vector<1x2x32xf32> to vector<2x32xf32>
    %63 = vector.shape_cast %60 : vector<2x32xf32> to vector<1x2x32xf32>
    tpu.vector_store %arg4[%c0_20, %c0_21, %c0_22], %63 {strides = array<i32>} : memref<1x2x32xf32, #tpu.memory_space<vmem>>, vector<1x2x32xf32>,
    return
  }
  func.func @transform_0(%arg0: i32) -> (i32, i32) {
    %c0_i32 = arith.constant 0 : i32
    %c0_i32_0 = arith.constant 0 : i32
    %c0_i32_1 = arith.constant 0 : i32
    return %c0_i32, %c0_i32_0 : i32, i32
  }
  func.func @transform_1(%arg0: i32) -> (i32, i32, i32) {
    %c15_i32 = arith.constant 15 : i32
    %0 = arith.subi %c15_i32, %arg0 : i32
    %c0_i32 = arith.constant 0 : i32
    %c0_i32_0 = arith.constant 0 : i32
    %c0_i32_1 = arith.constant 0 : i32
    return %0, %c0_i32, %c0_i32_0 : i32, i32, i32
  }
  func.func @transform_2(%arg0: i32) -> (i32, i32) {
    %c0_i32 = arith.constant 0 : i32
    %c0_i32_0 = arith.constant 0 : i32
    %c0_i32_1 = arith.constant 0 : i32
    return %c0_i32, %c0_i32_0 : i32, i32
  }
  func.func @transform_3(%arg0: i32) -> (i32, i32, i32) {
    %c15_i32 = arith.constant 15 : i32
    %0 = arith.subi %c15_i32, %arg0 : i32
    %c0_i32 = arith.constant 0 : i32
    %c0_i32_0 = arith.constant 0 : i32
    %c0_i32_1 = arith.constant 0 : i32
    return %0, %c0_i32, %c0_i32_0 : i32, i32, i32
  }
}

module attributes {stable_mosaic.version = 11 : i64} {
  func.func @_lstm_step_kernel(%arg0: i32, %arg1: memref<2x1xi32, #tpu.memory_space<vmem>>, %arg2: memref<1x2x128xf32, #tpu.memory_space<vmem>>, %arg3: memref<32x128xf32, #tpu.memory_space<vmem>>, %arg4: memref<1x2x32xf32, #tpu.memory_space<vmem>>, %arg5: memref<2x32xf32, #tpu.memory_space<vmem>>, %arg6: memref<2x32xf32, #tpu.memory_space<vmem>>) attributes {dimension_semantics = [#tpu.dimension_semantics<arbitrary>], iteration_bounds = array<i64: 16>, scalar_prefetch = 0 : i64, scratch_operands = 2 : i64, tpu.core_type = #tpu.core_type<tc>, window_params = [{pipeline_mode = #tpu.pipeline_mode<synchronous>, transform_indices = @transform_0, window_bounds = array<i64: 2, 1>}, {transform_indices = @transform_1, window_bounds = array<i64: 1, 2, 128>}, {pipeline_mode = #tpu.pipeline_mode<synchronous>, transform_indices = @transform_2, window_bounds = array<i64: 32, 128>}, {transform_indices = @transform_3, window_bounds = array<i64: 1, 2, 32>}]} {
    %c0_i32 = arith.constant 0 : i32
    %0 = arith.cmpi eq, %arg0, %c0_i32 : i32
    %1 = arith.extui %0 : i1 to i32
    %c0_i32_0 = arith.constant 0 : i32
    %2 = arith.cmpi ne, %1, %c0_i32_0 : i32
    scf.if %2 {
      %cst_23 = arith.constant 0.000000e+00 : f32
      %63 = vector.broadcast %cst_23 : f32 to vector<2x32xf32>
      %c0_24 = arith.constant 0 : index
      %c0_25 = arith.constant 0 : index
      %64 = vector.load %arg5[%c0_24, %c0_25] : memref<2x32xf32, #tpu.memory_space<vmem>>, vector<2x32xf32>
      tpu.vector_store %arg5[%c0_24, %c0_25], %63 {strides = array<i32>} : memref<2x32xf32, #tpu.memory_space<vmem>>, vector<2x32xf32>,
      %cst_26 = arith.constant 0.000000e+00 : f32
      %65 = vector.broadcast %cst_26 : f32 to vector<2x32xf32>
      %c0_27 = arith.constant 0 : index
      %c0_28 = arith.constant 0 : index
      %66 = vector.load %arg6[%c0_27, %c0_28] : memref<2x32xf32, #tpu.memory_space<vmem>>, vector<2x32xf32>
      tpu.vector_store %arg6[%c0_27, %c0_28], %65 {strides = array<i32>} : memref<2x32xf32, #tpu.memory_space<vmem>>, vector<2x32xf32>,
    } else {
    }
    %c0 = arith.constant 0 : index
    %c0_1 = arith.constant 0 : index
    %3 = vector.load %arg5[%c0, %c0_1] : memref<2x32xf32, #tpu.memory_space<vmem>>, vector<2x32xf32>
    %c0_2 = arith.constant 0 : index
    %c0_3 = arith.constant 0 : index
    %4 = vector.load %arg6[%c0_2, %c0_3] : memref<2x32xf32, #tpu.memory_space<vmem>>, vector<2x32xf32>
    %c0_4 = arith.constant 0 : index
    %c0_5 = arith.constant 0 : index
    %c0_6 = arith.constant 0 : index
    %5 = vector.load %arg2[%c0_4, %c0_5, %c0_6] : memref<1x2x128xf32, #tpu.memory_space<vmem>>, vector<1x2x128xf32>
    %6 = vector.shape_cast %5 : vector<1x2x128xf32> to vector<2x128xf32>
    %7 = arith.truncf %3 : vector<2x32xf32> to vector<2x32xbf16>
    %c0_7 = arith.constant 0 : index
    %c0_8 = arith.constant 0 : index
    %8 = vector.load %arg3[%c0_7, %c0_8] : memref<32x128xf32, #tpu.memory_space<vmem>>, vector<32x128xf32>
    %9 = arith.truncf %8 : vector<32x128xf32> to vector<32x128xbf16>
    %cst = arith.constant dense<0.000000e+00> : vector<2x128xf32>
    %10 = tpu.matmul %7, %9, %cst {dimension_numbers = #tpu.dot_dimension_numbers<[1], [0], [0], [1], [0, 0, 1, 1], [], []>} : vector<2x32xbf16>, vector<32x128xbf16>, vector<2x128xf32> -> vector<2x128xf32>
    %11 = arith.addf %6, %10 : vector<2x128xf32>
    %12 = vector.extract_strided_slice %11 {offsets = [0, 0], sizes = [2, 32], strides = [1, 1]} : vector<2x128xf32> to vector<2x32xf32>
    %13 = arith.negf %12 : vector<2x32xf32>
    %14 = math.exp %13 : vector<2x32xf32>
    %cst_9 = arith.constant 1.000000e+00 : f32
    %15 = vector.broadcast %cst_9 : f32 to vector<2x32xf32>
    %16 = arith.addf %15, %14 : vector<2x32xf32>
    %17 = arith.divf %15, %16 : vector<2x32xf32>
    %18 = vector.extract_strided_slice %11 {offsets = [0, 32], sizes = [2, 32], strides = [1, 1]} : vector<2x128xf32> to vector<2x32xf32>
    %19 = arith.negf %18 : vector<2x32xf32>
    %20 = math.exp %19 : vector<2x32xf32>
    %cst_10 = arith.constant 1.000000e+00 : f32
    %21 = vector.broadcast %cst_10 : f32 to vector<2x32xf32>
    %22 = arith.addf %21, %20 : vector<2x32xf32>
    %23 = arith.divf %21, %22 : vector<2x32xf32>
    %24 = vector.extract_strided_slice %11 {offsets = [0, 64], sizes = [2, 32], strides = [1, 1]} : vector<2x128xf32> to vector<2x32xf32>
    %25 = math.tanh %24 : vector<2x32xf32>
    %26 = vector.extract_strided_slice %11 {offsets = [0, 96], sizes = [2, 32], strides = [1, 1]} : vector<2x128xf32> to vector<2x32xf32>
    %27 = arith.negf %26 : vector<2x32xf32>
    %28 = math.exp %27 : vector<2x32xf32>
    %cst_11 = arith.constant 1.000000e+00 : f32
    %29 = vector.broadcast %cst_11 : f32 to vector<2x32xf32>
    %30 = arith.addf %29, %28 : vector<2x32xf32>
    %31 = arith.divf %29, %30 : vector<2x32xf32>
    %32 = arith.mulf %23, %4 : vector<2x32xf32>
    %33 = arith.mulf %17, %25 : vector<2x32xf32>
    %34 = arith.addf %32, %33 : vector<2x32xf32>
    %35 = math.tanh %34 : vector<2x32xf32>
    %36 = arith.mulf %31, %35 : vector<2x32xf32>
    %c0_12 = arith.constant 0 : index
    %c0_13 = arith.constant 0 : index
    %37 = vector.load %arg1[%c0_12, %c0_13] : memref<2x1xi32, #tpu.memory_space<vmem>>, vector<2x1xi32>
    %38 = vector.broadcast %arg0 : i32 to vector<2x1xi32>
    %39 = arith.cmpi slt, %38, %37 : vector<2x1xi32>
    %40 = arith.extui %39 : vector<2x1xi1> to vector<2x1xi32>
    %41 = arith.sitofp %40 : vector<2x1xi32> to vector<2x1xf32>
    %42 = vector.broadcast %41 : vector<2x1xf32> to vector<2x32xf32>
    %43 = arith.mulf %42, %36 : vector<2x32xf32>
    %cst_14 = arith.constant 1.000000e+00 : f32
    %44 = vector.broadcast %cst_14 : f32 to vector<2x1xf32>
    %45 = arith.subf %44, %41 : vector<2x1xf32>
    %46 = vector.broadcast %45 : vector<2x1xf32> to vector<2x32xf32>
    %47 = arith.mulf %46, %3 : vector<2x32xf32>
    %48 = arith.addf %43, %47 : vector<2x32xf32>
    %c0_15 = arith.constant 0 : index
    %c0_16 = arith.constant 0 : index
    %49 = vector.load %arg5[%c0_15, %c0_16] : memref<2x32xf32, #tpu.memory_space<vmem>>, vector<2x32xf32>
    tpu.vector_store %arg5[%c0_15, %c0_16], %48 {strides = array<i32>} : memref<2x32xf32, #tpu.memory_space<vmem>>, vector<2x32xf32>,
    %50 = vector.broadcast %41 : vector<2x1xf32> to vector<2x32xf32>
    %51 = arith.mulf %50, %34 : vector<2x32xf32>
    %cst_17 = arith.constant 1.000000e+00 : f32
    %52 = vector.broadcast %cst_17 : f32 to vector<2x1xf32>
    %53 = arith.subf %52, %41 : vector<2x1xf32>
    %54 = vector.broadcast %53 : vector<2x1xf32> to vector<2x32xf32>
    %55 = arith.mulf %54, %4 : vector<2x32xf32>
    %56 = arith.addf %51, %55 : vector<2x32xf32>
    %c0_18 = arith.constant 0 : index
    %c0_19 = arith.constant 0 : index
    %57 = vector.load %arg6[%c0_18, %c0_19] : memref<2x32xf32, #tpu.memory_space<vmem>>, vector<2x32xf32>
    tpu.vector_store %arg6[%c0_18, %c0_19], %56 {strides = array<i32>} : memref<2x32xf32, #tpu.memory_space<vmem>>, vector<2x32xf32>,
    %58 = vector.broadcast %41 : vector<2x1xf32> to vector<2x32xf32>
    %59 = arith.mulf %58, %36 : vector<2x32xf32>
    %c0_20 = arith.constant 0 : index
    %c0_21 = arith.constant 0 : index
    %c0_22 = arith.constant 0 : index
    %60 = vector.load %arg4[%c0_20, %c0_21, %c0_22] : memref<1x2x32xf32, #tpu.memory_space<vmem>>, vector<1x2x32xf32>
    %61 = vector.shape_cast %60 : vector<1x2x32xf32> to vector<2x32xf32>
    %62 = vector.shape_cast %59 : vector<2x32xf32> to vector<1x2x32xf32>
    tpu.vector_store %arg4[%c0_20, %c0_21, %c0_22], %62 {strides = array<i32>} : memref<1x2x32xf32, #tpu.memory_space<vmem>>, vector<1x2x32xf32>,
    return
  }
  func.func @transform_0(%arg0: i32) -> (i32, i32) {
    %c0_i32 = arith.constant 0 : i32
    %c0_i32_0 = arith.constant 0 : i32
    %c0_i32_1 = arith.constant 0 : i32
    return %c0_i32, %c0_i32_0 : i32, i32
  }
  func.func @transform_1(%arg0: i32) -> (i32, i32, i32) {
    %c0_i32 = arith.constant 0 : i32
    %c0_i32_0 = arith.constant 0 : i32
    %c0_i32_1 = arith.constant 0 : i32
    return %arg0, %c0_i32, %c0_i32_0 : i32, i32, i32
  }
  func.func @transform_2(%arg0: i32) -> (i32, i32) {
    %c0_i32 = arith.constant 0 : i32
    %c0_i32_0 = arith.constant 0 : i32
    %c0_i32_1 = arith.constant 0 : i32
    return %c0_i32, %c0_i32_0 : i32, i32
  }
  func.func @transform_3(%arg0: i32) -> (i32, i32, i32) {
    %c0_i32 = arith.constant 0 : i32
    %c0_i32_0 = arith.constant 0 : i32
    %c0_i32_1 = arith.constant 0 : i32
    return %arg0, %c0_i32, %c0_i32_0 : i32, i32, i32
  }
}

module attributes {stable_mosaic.version = 11 : i64} {
  func.func @_bidaf_att_kernel(%arg0: i32, %arg1: memref<2xi32, #tpu.memory_space<smem>>, %arg2: memref<2xi32, #tpu.memory_space<smem>>, %arg3: memref<1x32x64xf32, #tpu.memory_space<vmem>>, %arg4: memref<1x16x64xf32, #tpu.memory_space<vmem>>, %arg5: memref<1x64xf32, #tpu.memory_space<vmem>>, %arg6: memref<1x64xf32, #tpu.memory_space<vmem>>, %arg7: memref<1x64xf32, #tpu.memory_space<vmem>>, %arg8: memref<1x1xf32, #tpu.memory_space<vmem>>, %arg9: memref<1x32x256xf32, #tpu.memory_space<vmem>>) attributes {dimension_semantics = [#tpu.dimension_semantics<parallel>], iteration_bounds = array<i64: 2>, scalar_prefetch = 2 : i64, scratch_operands = 0 : i64, tpu.core_type = #tpu.core_type<tc>, window_params = [{transform_indices = @transform_0, window_bounds = array<i64: 1, 32, 64>}, {transform_indices = @transform_1, window_bounds = array<i64: 1, 16, 64>}, {pipeline_mode = #tpu.pipeline_mode<synchronous>, transform_indices = @transform_2, window_bounds = array<i64: 1, 64>}, {pipeline_mode = #tpu.pipeline_mode<synchronous>, transform_indices = @transform_3, window_bounds = array<i64: 1, 64>}, {pipeline_mode = #tpu.pipeline_mode<synchronous>, transform_indices = @transform_4, window_bounds = array<i64: 1, 64>}, {pipeline_mode = #tpu.pipeline_mode<synchronous>, transform_indices = @transform_5, window_bounds = array<i64: 1, 1>}, {transform_indices = @transform_6, window_bounds = array<i64: 1, 32, 256>}]} {
    %c0 = arith.constant 0 : index
    %c0_0 = arith.constant 0 : index
    %c0_1 = arith.constant 0 : index
    %0 = vector.load %arg3[%c0, %c0_0, %c0_1] : memref<1x32x64xf32, #tpu.memory_space<vmem>>, vector<1x32x64xf32>
    %1 = vector.shape_cast %0 : vector<1x32x64xf32> to vector<32x64xf32>
    %c0_2 = arith.constant 0 : index
    %c0_3 = arith.constant 0 : index
    %c0_4 = arith.constant 0 : index
    %2 = vector.load %arg4[%c0_2, %c0_3, %c0_4] : memref<1x16x64xf32, #tpu.memory_space<vmem>>, vector<1x16x64xf32>
    %3 = vector.shape_cast %2 : vector<1x16x64xf32> to vector<16x64xf32>
    %c0_5 = arith.constant 0 : index
    %c0_6 = arith.constant 0 : index
    %4 = vector.load %arg5[%c0_5, %c0_6] : memref<1x64xf32, #tpu.memory_space<vmem>>, vector<1x64xf32>
    %5 = vector.broadcast %4 : vector<1x64xf32> to vector<32x64xf32>
    %6 = arith.mulf %1, %5 : vector<32x64xf32>
    %cst = arith.constant dense<0.000000e+00> : vector<32xf32>
    %7 = vector.multi_reduction <add>, %6, %cst [1] : vector<32x64xf32> to vector<32xf32>
    %8 = vector.shape_cast %7 : vector<32xf32> to vector<32x1xf32>
    %c0_7 = arith.constant 0 : index
    %c0_8 = arith.constant 0 : index
    %9 = vector.load %arg6[%c0_7, %c0_8] : memref<1x64xf32, #tpu.memory_space<vmem>>, vector<1x64xf32>
    %cst_9 = arith.constant dense<0.000000e+00> : vector<1x16xf32>
    %10 = tpu.matmul %9, %3, %cst_9 {dimension_numbers = #tpu.dot_dimension_numbers<[1], [1], [0], [0], [0, 0, 1, 0], [], []>} : vector<1x64xf32>, vector<16x64xf32>, vector<1x16xf32> -> vector<1x16xf32>
    %c0_10 = arith.constant 0 : index
    %c0_11 = arith.constant 0 : index
    %11 = vector.load %arg7[%c0_10, %c0_11] : memref<1x64xf32, #tpu.memory_space<vmem>>, vector<1x64xf32>
    %12 = vector.broadcast %11 : vector<1x64xf32> to vector<32x64xf32>
    %13 = arith.mulf %1, %12 : vector<32x64xf32>
    %14 = arith.truncf %13 : vector<32x64xf32> to vector<32x64xbf16>
    %15 = arith.truncf %3 : vector<16x64xf32> to vector<16x64xbf16>
    %cst_12 = arith.constant dense<0.000000e+00> : vector<32x16xf32>
    %16 = tpu.matmul %14, %15, %cst_12 {dimension_numbers = #tpu.dot_dimension_numbers<[1], [1], [0], [0], [0, 0, 1, 0], [], []>} : vector<32x64xbf16>, vector<16x64xbf16>, vector<32x16xf32> -> vector<32x16xf32>
    %17 = vector.broadcast %8 : vector<32x1xf32> to vector<32x16xf32>
    %18 = vector.broadcast %10 : vector<1x16xf32> to vector<32x16xf32>
    %19 = arith.addf %17, %18 : vector<32x16xf32>
    %20 = arith.addf %19, %16 : vector<32x16xf32>
    %c0_13 = arith.constant 0 : index
    %c0_14 = arith.constant 0 : index
    %21 = vector.load %arg8[%c0_13, %c0_14] : memref<1x1xf32, #tpu.memory_space<vmem>>, vector<1x1xf32>
    %22 = vector.extract %21[0, 0] : f32 from vector<1x1xf32>
    %23 = vector.broadcast %22 : f32 to vector<32x16xf32>
    %24 = arith.addf %20, %23 : vector<32x16xf32>
    %25 = tpu.iota {dimensions = array<i32: 1>} : vector<32x16xi32>
    %26 = tpu.iota {dimensions = array<i32: 0>} : vector<32x16xi32>
    %27 = arith.index_cast %arg0 : i32 to index
    %28 = memref.load %arg2[%27] : memref<2xi32, #tpu.memory_space<smem>>
    %29 = vector.broadcast %28 : i32 to vector<32x16xi32>
    %30 = arith.cmpi slt, %25, %29 : vector<32x16xi32>
    %cst_15 = arith.constant -1.000000e+30 : f32
    %31 = vector.broadcast %cst_15 : f32 to vector<32x16xf32>
    %32 = arith.select %30, %24, %31 : vector<32x16xi1>, vector<32x16xf32>
    %cst_16 = arith.constant dense<0xFF800000> : vector<32xf32>
    %33 = vector.multi_reduction <maximumf>, %32, %cst_16 [1] : vector<32x16xf32> to vector<32xf32>
    %34 = vector.shape_cast %33 : vector<32xf32> to vector<32x1xf32>
    %35 = vector.broadcast %34 : vector<32x1xf32> to vector<32x16xf32>
    %36 = arith.subf %32, %35 : vector<32x16xf32>
    %37 = math.exp %36 : vector<32x16xf32>
    %cst_17 = arith.constant dense<0.000000e+00> : vector<32xf32>
    %38 = vector.multi_reduction <add>, %37, %cst_17 [1] : vector<32x16xf32> to vector<32xf32>
    %39 = vector.shape_cast %38 : vector<32xf32> to vector<32x1xf32>
    %40 = vector.broadcast %39 : vector<32x1xf32> to vector<32x16xf32>
    %41 = arith.divf %37, %40 : vector<32x16xf32>
    %42 = arith.index_cast %arg0 : i32 to index
    %43 = memref.load %arg1[%42] : memref<2xi32, #tpu.memory_space<smem>>
    %44 = vector.broadcast %43 : i32 to vector<32x16xi32>
    %45 = arith.cmpi slt, %26, %44 : vector<32x16xi32>
    %cst_18 = arith.constant -1.000000e+30 : f32
    %46 = vector.broadcast %cst_18 : f32 to vector<32x16xf32>
    %47 = arith.select %45, %24, %46 : vector<32x16xi1>, vector<32x16xf32>
    %cst_19 = arith.constant dense<0xFF800000> : vector<16xf32>
    %48 = vector.multi_reduction <maximumf>, %47, %cst_19 [0] : vector<32x16xf32> to vector<16xf32>
    %49 = vector.shape_cast %48 : vector<16xf32> to vector<1x16xf32>
    %50 = vector.broadcast %49 : vector<1x16xf32> to vector<32x16xf32>
    %51 = arith.subf %47, %50 : vector<32x16xf32>
    %52 = math.exp %51 : vector<32x16xf32>
    %cst_20 = arith.constant dense<0.000000e+00> : vector<16xf32>
    %53 = vector.multi_reduction <add>, %52, %cst_20 [0] : vector<32x16xf32> to vector<16xf32>
    %54 = vector.shape_cast %53 : vector<16xf32> to vector<1x16xf32>
    %55 = vector.broadcast %54 : vector<1x16xf32> to vector<32x16xf32>
    %56 = arith.divf %52, %55 : vector<32x16xf32>
    %57 = arith.truncf %41 : vector<32x16xf32> to vector<32x16xbf16>
    %58 = arith.truncf %3 : vector<16x64xf32> to vector<16x64xbf16>
    %cst_21 = arith.constant dense<0.000000e+00> : vector<32x64xf32>
    %59 = tpu.matmul %57, %58, %cst_21 {dimension_numbers = #tpu.dot_dimension_numbers<[1], [0], [0], [1], [0, 0, 1, 1], [], []>} : vector<32x16xbf16>, vector<16x64xbf16>, vector<32x64xf32> -> vector<32x64xf32>
    %60 = arith.truncf %56 : vector<32x16xf32> to vector<32x16xbf16>
    %61 = arith.truncf %1 : vector<32x64xf32> to vector<32x64xbf16>
    %cst_22 = arith.constant dense<0.000000e+00> : vector<16x64xf32>
    %62 = tpu.matmul %60, %61, %cst_22 {dimension_numbers = #tpu.dot_dimension_numbers<[0], [0], [1], [1], [0, 1, 1, 1], [], []>} : vector<32x16xbf16>, vector<32x64xbf16>, vector<16x64xf32> -> vector<16x64xf32>
    %63 = arith.truncf %41 : vector<32x16xf32> to vector<32x16xbf16>
    %64 = arith.truncf %62 : vector<16x64xf32> to vector<16x64xbf16>
    %cst_23 = arith.constant dense<0.000000e+00> : vector<32x64xf32>
    %65 = tpu.matmul %63, %64, %cst_23 {dimension_numbers = #tpu.dot_dimension_numbers<[1], [0], [0], [1], [0, 0, 1, 1], [], []>} : vector<32x16xbf16>, vector<16x64xbf16>, vector<32x64xf32> -> vector<32x64xf32>
    %c0_24 = arith.constant 0 : index
    %c0_25 = arith.constant 0 : index
    %c0_26 = arith.constant 0 : index
    %66 = vector.load %arg9[%c0_24, %c0_25, %c0_26] : memref<1x32x256xf32, #tpu.memory_space<vmem>>, vector<1x32x64xf32>
    %67 = vector.shape_cast %66 : vector<1x32x64xf32> to vector<32x64xf32>
    %68 = vector.shape_cast %1 : vector<32x64xf32> to vector<1x32x64xf32>
    tpu.vector_store %arg9[%c0_24, %c0_25, %c0_26], %68 {strides = array<i32>} : memref<1x32x256xf32, #tpu.memory_space<vmem>>, vector<1x32x64xf32>,
    %c0_27 = arith.constant 0 : index
    %c0_28 = arith.constant 0 : index
    %c64 = arith.constant 64 : index
    %69 = vector.load %arg9[%c0_27, %c0_28, %c64] : memref<1x32x256xf32, #tpu.memory_space<vmem>>, vector<1x32x64xf32>
    %70 = vector.shape_cast %69 : vector<1x32x64xf32> to vector<32x64xf32>
    %71 = vector.shape_cast %59 : vector<32x64xf32> to vector<1x32x64xf32>
    tpu.vector_store %arg9[%c0_27, %c0_28, %c64], %71 {strides = array<i32>} : memref<1x32x256xf32, #tpu.memory_space<vmem>>, vector<1x32x64xf32>,
    %72 = arith.mulf %1, %59 : vector<32x64xf32>
    %c0_29 = arith.constant 0 : index
    %c0_30 = arith.constant 0 : index
    %c128 = arith.constant 128 : index
    %73 = vector.load %arg9[%c0_29, %c0_30, %c128] : memref<1x32x256xf32, #tpu.memory_space<vmem>>, vector<1x32x64xf32>
    %74 = vector.shape_cast %73 : vector<1x32x64xf32> to vector<32x64xf32>
    %75 = vector.shape_cast %72 : vector<32x64xf32> to vector<1x32x64xf32>
    tpu.vector_store %arg9[%c0_29, %c0_30, %c128], %75 {strides = array<i32>} : memref<1x32x256xf32, #tpu.memory_space<vmem>>, vector<1x32x64xf32>,
    %76 = arith.mulf %1, %65 : vector<32x64xf32>
    %c0_31 = arith.constant 0 : index
    %c0_32 = arith.constant 0 : index
    %c192 = arith.constant 192 : index
    %77 = vector.load %arg9[%c0_31, %c0_32, %c192] : memref<1x32x256xf32, #tpu.memory_space<vmem>>, vector<1x32x64xf32>
    %78 = vector.shape_cast %77 : vector<1x32x64xf32> to vector<32x64xf32>
    %79 = vector.shape_cast %76 : vector<32x64xf32> to vector<1x32x64xf32>
    tpu.vector_store %arg9[%c0_31, %c0_32, %c192], %79 {strides = array<i32>} : memref<1x32x256xf32, #tpu.memory_space<vmem>>, vector<1x32x64xf32>,
    return
  }
  func.func @transform_0(%arg0: i32, %arg1: memref<2xi32, #tpu.memory_space<smem>>, %arg2: memref<2xi32, #tpu.memory_space<smem>>) -> (i32, i32, i32) {
    %c0_i32 = arith.constant 0 : i32
    %c0_i32_0 = arith.constant 0 : i32
    %c0_i32_1 = arith.constant 0 : i32
    return %arg0, %c0_i32, %c0_i32_0 : i32, i32, i32
  }
  func.func @transform_1(%arg0: i32, %arg1: memref<2xi32, #tpu.memory_space<smem>>, %arg2: memref<2xi32, #tpu.memory_space<smem>>) -> (i32, i32, i32) {
    %c0_i32 = arith.constant 0 : i32
    %c0_i32_0 = arith.constant 0 : i32
    %c0_i32_1 = arith.constant 0 : i32
    return %arg0, %c0_i32, %c0_i32_0 : i32, i32, i32
  }
  func.func @transform_2(%arg0: i32, %arg1: memref<2xi32, #tpu.memory_space<smem>>, %arg2: memref<2xi32, #tpu.memory_space<smem>>) -> (i32, i32) {
    %c0_i32 = arith.constant 0 : i32
    %c0_i32_0 = arith.constant 0 : i32
    %c0_i32_1 = arith.constant 0 : i32
    return %c0_i32, %c0_i32_0 : i32, i32
  }
  func.func @transform_3(%arg0: i32, %arg1: memref<2xi32, #tpu.memory_space<smem>>, %arg2: memref<2xi32, #tpu.memory_space<smem>>) -> (i32, i32) {
    %c0_i32 = arith.constant 0 : i32
    %c0_i32_0 = arith.constant 0 : i32
    %c0_i32_1 = arith.constant 0 : i32
    return %c0_i32, %c0_i32_0 : i32, i32
  }
  func.func @transform_4(%arg0: i32, %arg1: memref<2xi32, #tpu.memory_space<smem>>, %arg2: memref<2xi32, #tpu.memory_space<smem>>) -> (i32, i32) {
    %c0_i32 = arith.constant 0 : i32
    %c0_i32_0 = arith.constant 0 : i32
    %c0_i32_1 = arith.constant 0 : i32
    return %c0_i32, %c0_i32_0 : i32, i32
  }
  func.func @transform_5(%arg0: i32, %arg1: memref<2xi32, #tpu.memory_space<smem>>, %arg2: memref<2xi32, #tpu.memory_space<smem>>) -> (i32, i32) {
    %c0_i32 = arith.constant 0 : i32
    %c0_i32_0 = arith.constant 0 : i32
    %c0_i32_1 = arith.constant 0 : i32
    return %c0_i32, %c0_i32_0 : i32, i32
  }
  func.func @transform_6(%arg0: i32, %arg1: memref<2xi32, #tpu.memory_space<smem>>, %arg2: memref<2xi32, #tpu.memory_space<smem>>) -> (i32, i32, i32) {
    %c0_i32 = arith.constant 0 : i32
    %c0_i32_0 = arith.constant 0 : i32
    %c0_i32_1 = arith.constant 0 : i32
    return %arg0, %c0_i32, %c0_i32_0 : i32, i32, i32
  }
}

module attributes {stable_mosaic.version = 11 : i64} {
  func.func @_linear_kernel(%arg0: i32, %arg1: memref<64x256xf32, #tpu.memory_space<vmem>>, %arg2: memref<256x128xf32, #tpu.memory_space<vmem>>, %arg3: memref<1x128xf32, #tpu.memory_space<vmem>>, %arg4: memref<64x128xf32, #tpu.memory_space<vmem>>) attributes {dimension_semantics = [#tpu.dimension_semantics<parallel>], iteration_bounds = array<i64: 1>, scalar_prefetch = 0 : i64, scratch_operands = 0 : i64, tpu.core_type = #tpu.core_type<tc>, window_params = [{transform_indices = @transform_0, window_bounds = array<i64: 64, 256>}, {pipeline_mode = #tpu.pipeline_mode<synchronous>, transform_indices = @transform_1, window_bounds = array<i64: 256, 128>}, {pipeline_mode = #tpu.pipeline_mode<synchronous>, transform_indices = @transform_2, window_bounds = array<i64: 1, 128>}, {transform_indices = @transform_3, window_bounds = array<i64: 64, 128>}]} {
    %c0 = arith.constant 0 : index
    %c0_0 = arith.constant 0 : index
    %0 = vector.load %arg1[%c0, %c0_0] : memref<64x256xf32, #tpu.memory_space<vmem>>, vector<64x256xf32>
    %1 = arith.truncf %0 : vector<64x256xf32> to vector<64x256xbf16>
    %c0_1 = arith.constant 0 : index
    %c0_2 = arith.constant 0 : index
    %2 = vector.load %arg2[%c0_1, %c0_2] : memref<256x128xf32, #tpu.memory_space<vmem>>, vector<256x128xf32>
    %3 = arith.truncf %2 : vector<256x128xf32> to vector<256x128xbf16>
    %cst = arith.constant dense<0.000000e+00> : vector<64x128xf32>
    %4 = tpu.matmul %1, %3, %cst {dimension_numbers = #tpu.dot_dimension_numbers<[1], [0], [0], [1], [0, 0, 1, 1], [], []>} : vector<64x256xbf16>, vector<256x128xbf16>, vector<64x128xf32> -> vector<64x128xf32>
    %c0_3 = arith.constant 0 : index
    %c0_4 = arith.constant 0 : index
    %5 = vector.load %arg3[%c0_3, %c0_4] : memref<1x128xf32, #tpu.memory_space<vmem>>, vector<1x128xf32>
    %6 = vector.broadcast %5 : vector<1x128xf32> to vector<64x128xf32>
    %7 = arith.addf %4, %6 : vector<64x128xf32>
    %c0_5 = arith.constant 0 : index
    %c0_6 = arith.constant 0 : index
    %8 = vector.load %arg4[%c0_5, %c0_6] : memref<64x128xf32, #tpu.memory_space<vmem>>, vector<64x128xf32>
    tpu.vector_store %arg4[%c0_5, %c0_6], %7 {strides = array<i32>} : memref<64x128xf32, #tpu.memory_space<vmem>>, vector<64x128xf32>,
    return
  }
  func.func @transform_0(%arg0: i32) -> (i32, i32) {
    %c0_i32 = arith.constant 0 : i32
    %c0_i32_0 = arith.constant 0 : i32
    return %arg0, %c0_i32 : i32, i32
  }
  func.func @transform_1(%arg0: i32) -> (i32, i32) {
    %c0_i32 = arith.constant 0 : i32
    %c0_i32_0 = arith.constant 0 : i32
    %c0_i32_1 = arith.constant 0 : i32
    return %c0_i32, %c0_i32_0 : i32, i32
  }
  func.func @transform_2(%arg0: i32) -> (i32, i32) {
    %c0_i32 = arith.constant 0 : i32
    %c0_i32_0 = arith.constant 0 : i32
    %c0_i32_1 = arith.constant 0 : i32
    return %c0_i32, %c0_i32_0 : i32, i32
  }
  func.func @transform_3(%arg0: i32) -> (i32, i32) {
    %c0_i32 = arith.constant 0 : i32
    %c0_i32_0 = arith.constant 0 : i32
    return %arg0, %c0_i32 : i32, i32
  }
}

module attributes {stable_mosaic.version = 11 : i64} {
  func.func @_linear_kernel(%arg0: i32, %arg1: memref<64x64xf32, #tpu.memory_space<vmem>>, %arg2: memref<64x128xf32, #tpu.memory_space<vmem>>, %arg3: memref<1x128xf32, #tpu.memory_space<vmem>>, %arg4: memref<64x128xf32, #tpu.memory_space<vmem>>) attributes {dimension_semantics = [#tpu.dimension_semantics<parallel>], iteration_bounds = array<i64: 1>, scalar_prefetch = 0 : i64, scratch_operands = 0 : i64, tpu.core_type = #tpu.core_type<tc>, window_params = [{transform_indices = @transform_0, window_bounds = array<i64: 64, 64>}, {pipeline_mode = #tpu.pipeline_mode<synchronous>, transform_indices = @transform_1, window_bounds = array<i64: 64, 128>}, {pipeline_mode = #tpu.pipeline_mode<synchronous>, transform_indices = @transform_2, window_bounds = array<i64: 1, 128>}, {transform_indices = @transform_3, window_bounds = array<i64: 64, 128>}]} {
    %c0 = arith.constant 0 : index
    %c0_0 = arith.constant 0 : index
    %0 = vector.load %arg1[%c0, %c0_0] : memref<64x64xf32, #tpu.memory_space<vmem>>, vector<64x64xf32>
    %1 = arith.truncf %0 : vector<64x64xf32> to vector<64x64xbf16>
    %c0_1 = arith.constant 0 : index
    %c0_2 = arith.constant 0 : index
    %2 = vector.load %arg2[%c0_1, %c0_2] : memref<64x128xf32, #tpu.memory_space<vmem>>, vector<64x128xf32>
    %3 = arith.truncf %2 : vector<64x128xf32> to vector<64x128xbf16>
    %cst = arith.constant dense<0.000000e+00> : vector<64x128xf32>
    %4 = tpu.matmul %1, %3, %cst {dimension_numbers = #tpu.dot_dimension_numbers<[1], [0], [0], [1], [0, 0, 1, 1], [], []>} : vector<64x64xbf16>, vector<64x128xbf16>, vector<64x128xf32> -> vector<64x128xf32>
    %c0_3 = arith.constant 0 : index
    %c0_4 = arith.constant 0 : index
    %5 = vector.load %arg3[%c0_3, %c0_4] : memref<1x128xf32, #tpu.memory_space<vmem>>, vector<1x128xf32>
    %6 = vector.broadcast %5 : vector<1x128xf32> to vector<64x128xf32>
    %7 = arith.addf %4, %6 : vector<64x128xf32>
    %c0_5 = arith.constant 0 : index
    %c0_6 = arith.constant 0 : index
    %8 = vector.load %arg4[%c0_5, %c0_6] : memref<64x128xf32, #tpu.memory_space<vmem>>, vector<64x128xf32>
    tpu.vector_store %arg4[%c0_5, %c0_6], %7 {strides = array<i32>} : memref<64x128xf32, #tpu.memory_space<vmem>>, vector<64x128xf32>,
    return
  }
  func.func @transform_0(%arg0: i32) -> (i32, i32) {
    %c0_i32 = arith.constant 0 : i32
    %c0_i32_0 = arith.constant 0 : i32
    return %arg0, %c0_i32 : i32, i32
  }
  func.func @transform_1(%arg0: i32) -> (i32, i32) {
    %c0_i32 = arith.constant 0 : i32
    %c0_i32_0 = arith.constant 0 : i32
    %c0_i32_1 = arith.constant 0 : i32
    return %c0_i32, %c0_i32_0 : i32, i32
  }
  func.func @transform_2(%arg0: i32) -> (i32, i32) {
    %c0_i32 = arith.constant 0 : i32
    %c0_i32_0 = arith.constant 0 : i32
    %c0_i32_1 = arith.constant 0 : i32
    return %c0_i32, %c0_i32_0 : i32, i32
  }
  func.func @transform_3(%arg0: i32) -> (i32, i32) {
    %c0_i32 = arith.constant 0 : i32
    %c0_i32_0 = arith.constant 0 : i32
    return %arg0, %c0_i32 : i32, i32
  }
}

module attributes {stable_mosaic.version = 11 : i64} {
  func.func @_output_kernel(%arg0: i32, %arg1: memref<2xi32, #tpu.memory_space<smem>>, %arg2: memref<1x32x256xf32, #tpu.memory_space<vmem>>, %arg3: memref<1x32x64xf32, #tpu.memory_space<vmem>>, %arg4: memref<1x32x64xf32, #tpu.memory_space<vmem>>, %arg5: memref<1x256xf32, #tpu.memory_space<vmem>>, %arg6: memref<1x64xf32, #tpu.memory_space<vmem>>, %arg7: memref<1x256xf32, #tpu.memory_space<vmem>>, %arg8: memref<1x64xf32, #tpu.memory_space<vmem>>, %arg9: memref<1x2xf32, #tpu.memory_space<vmem>>, %arg10: memref<1x32x1xf32, #tpu.memory_space<vmem>>, %arg11: memref<1x32x1xf32, #tpu.memory_space<vmem>>) attributes {dimension_semantics = [#tpu.dimension_semantics<parallel>], iteration_bounds = array<i64: 2>, scalar_prefetch = 1 : i64, scratch_operands = 0 : i64, tpu.core_type = #tpu.core_type<tc>, window_params = [{transform_indices = @transform_0, window_bounds = array<i64: 1, 32, 256>}, {transform_indices = @transform_1, window_bounds = array<i64: 1, 32, 64>}, {transform_indices = @transform_2, window_bounds = array<i64: 1, 32, 64>}, {pipeline_mode = #tpu.pipeline_mode<synchronous>, transform_indices = @transform_3, window_bounds = array<i64: 1, 256>}, {pipeline_mode = #tpu.pipeline_mode<synchronous>, transform_indices = @transform_4, window_bounds = array<i64: 1, 64>}, {pipeline_mode = #tpu.pipeline_mode<synchronous>, transform_indices = @transform_5, window_bounds = array<i64: 1, 256>}, {pipeline_mode = #tpu.pipeline_mode<synchronous>, transform_indices = @transform_6, window_bounds = array<i64: 1, 64>}, {pipeline_mode = #tpu.pipeline_mode<synchronous>, transform_indices = @transform_7, window_bounds = array<i64: 1, 2>}, {transform_indices = @transform_8, window_bounds = array<i64: 1, 32, 1>}, {transform_indices = @transform_9, window_bounds = array<i64: 1, 32, 1>}]} {
    %c0 = arith.constant 0 : index
    %c0_0 = arith.constant 0 : index
    %c0_1 = arith.constant 0 : index
    %0 = vector.load %arg2[%c0, %c0_0, %c0_1] : memref<1x32x256xf32, #tpu.memory_space<vmem>>, vector<1x32x256xf32>
    %1 = vector.shape_cast %0 : vector<1x32x256xf32> to vector<32x256xf32>
    %c0_2 = arith.constant 0 : index
    %c0_3 = arith.constant 0 : index
    %c0_4 = arith.constant 0 : index
    %2 = vector.load %arg3[%c0_2, %c0_3, %c0_4] : memref<1x32x64xf32, #tpu.memory_space<vmem>>, vector<1x32x64xf32>
    %3 = vector.shape_cast %2 : vector<1x32x64xf32> to vector<32x64xf32>
    %c0_5 = arith.constant 0 : index
    %c0_6 = arith.constant 0 : index
    %c0_7 = arith.constant 0 : index
    %4 = vector.load %arg4[%c0_5, %c0_6, %c0_7] : memref<1x32x64xf32, #tpu.memory_space<vmem>>, vector<1x32x64xf32>
    %5 = vector.shape_cast %4 : vector<1x32x64xf32> to vector<32x64xf32>
    %c0_8 = arith.constant 0 : index
    %c0_9 = arith.constant 0 : index
    %6 = vector.load %arg5[%c0_8, %c0_9] : memref<1x256xf32, #tpu.memory_space<vmem>>, vector<1x256xf32>
    %7 = vector.broadcast %6 : vector<1x256xf32> to vector<32x256xf32>
    %8 = arith.mulf %1, %7 : vector<32x256xf32>
    %cst = arith.constant dense<0.000000e+00> : vector<32xf32>
    %9 = vector.multi_reduction <add>, %8, %cst [1] : vector<32x256xf32> to vector<32xf32>
    %10 = vector.shape_cast %9 : vector<32xf32> to vector<32x1xf32>
    %c0_10 = arith.constant 0 : index
    %c0_11 = arith.constant 0 : index
    %11 = vector.load %arg6[%c0_10, %c0_11] : memref<1x64xf32, #tpu.memory_space<vmem>>, vector<1x64xf32>
    %12 = vector.broadcast %11 : vector<1x64xf32> to vector<32x64xf32>
    %13 = arith.mulf %3, %12 : vector<32x64xf32>
    %cst_12 = arith.constant dense<0.000000e+00> : vector<32xf32>
    %14 = vector.multi_reduction <add>, %13, %cst_12 [1] : vector<32x64xf32> to vector<32xf32>
    %15 = vector.shape_cast %14 : vector<32xf32> to vector<32x1xf32>
    %16 = arith.addf %10, %15 : vector<32x1xf32>
    %c0_13 = arith.constant 0 : index
    %c0_14 = arith.constant 0 : index
    %17 = vector.load %arg9[%c0_13, %c0_14] : memref<1x2xf32, #tpu.memory_space<vmem>>, vector<1x1xf32>
    %18 = vector.extract %17[0, 0] : f32 from vector<1x1xf32>
    %19 = vector.broadcast %18 : f32 to vector<32x1xf32>
    %20 = arith.addf %16, %19 : vector<32x1xf32>
    %c0_15 = arith.constant 0 : index
    %c0_16 = arith.constant 0 : index
    %21 = vector.load %arg7[%c0_15, %c0_16] : memref<1x256xf32, #tpu.memory_space<vmem>>, vector<1x256xf32>
    %22 = vector.broadcast %21 : vector<1x256xf32> to vector<32x256xf32>
    %23 = arith.mulf %1, %22 : vector<32x256xf32>
    %cst_17 = arith.constant dense<0.000000e+00> : vector<32xf32>
    %24 = vector.multi_reduction <add>, %23, %cst_17 [1] : vector<32x256xf32> to vector<32xf32>
    %25 = vector.shape_cast %24 : vector<32xf32> to vector<32x1xf32>
    %c0_18 = arith.constant 0 : index
    %c0_19 = arith.constant 0 : index
    %26 = vector.load %arg8[%c0_18, %c0_19] : memref<1x64xf32, #tpu.memory_space<vmem>>, vector<1x64xf32>
    %27 = vector.broadcast %26 : vector<1x64xf32> to vector<32x64xf32>
    %28 = arith.mulf %5, %27 : vector<32x64xf32>
    %cst_20 = arith.constant dense<0.000000e+00> : vector<32xf32>
    %29 = vector.multi_reduction <add>, %28, %cst_20 [1] : vector<32x64xf32> to vector<32xf32>
    %30 = vector.shape_cast %29 : vector<32xf32> to vector<32x1xf32>
    %31 = arith.addf %25, %30 : vector<32x1xf32>
    %c0_21 = arith.constant 0 : index
    %c1 = arith.constant 1 : index
    %32 = vector.load %arg9[%c0_21, %c1] : memref<1x2xf32, #tpu.memory_space<vmem>>, vector<1x1xf32>
    %33 = vector.extract %32[0, 0] : f32 from vector<1x1xf32>
    %34 = vector.broadcast %33 : f32 to vector<32x1xf32>
    %35 = arith.addf %31, %34 : vector<32x1xf32>
    %36 = tpu.iota {dimensions = array<i32: 0>} : vector<32x1xi32>
    %37 = arith.index_cast %arg0 : i32 to index
    %38 = memref.load %arg1[%37] : memref<2xi32, #tpu.memory_space<smem>>
    %39 = vector.broadcast %38 : i32 to vector<32x1xi32>
    %40 = arith.cmpi slt, %36, %39 : vector<32x1xi32>
    %cst_22 = arith.constant -1.000000e+30 : f32
    %41 = vector.broadcast %cst_22 : f32 to vector<32x1xf32>
    %42 = arith.select %40, %20, %41 : vector<32x1xi1>, vector<32x1xf32>
    %cst_23 = arith.constant dense<0xFF800000> : vector<1xf32>
    %43 = vector.multi_reduction <maximumf>, %42, %cst_23 [0] : vector<32x1xf32> to vector<1xf32>
    %44 = vector.shape_cast %43 : vector<1xf32> to vector<1x1xf32>
    %45 = vector.broadcast %44 : vector<1x1xf32> to vector<32x1xf32>
    %46 = arith.subf %42, %45 : vector<32x1xf32>
    %47 = math.exp %46 : vector<32x1xf32>
    %cst_24 = arith.constant dense<0.000000e+00> : vector<1xf32>
    %48 = vector.multi_reduction <add>, %47, %cst_24 [0] : vector<32x1xf32> to vector<1xf32>
    %49 = vector.shape_cast %48 : vector<1xf32> to vector<1x1xf32>
    %50 = math.log %49 : vector<1x1xf32>
    %51 = vector.broadcast %50 : vector<1x1xf32> to vector<32x1xf32>
    %52 = arith.subf %46, %51 : vector<32x1xf32>
    %c0_25 = arith.constant 0 : index
    %c0_26 = arith.constant 0 : index
    %c0_27 = arith.constant 0 : index
    %53 = vector.load %arg10[%c0_25, %c0_26, %c0_27] : memref<1x32x1xf32, #tpu.memory_space<vmem>>, vector<1x32x1xf32>
    %54 = vector.shape_cast %53 : vector<1x32x1xf32> to vector<32x1xf32>
    %55 = vector.shape_cast %52 : vector<32x1xf32> to vector<1x32x1xf32>
    tpu.vector_store %arg10[%c0_25, %c0_26, %c0_27], %55 {strides = array<i32>} : memref<1x32x1xf32, #tpu.memory_space<vmem>>, vector<1x32x1xf32>,
    %cst_28 = arith.constant -1.000000e+30 : f32
    %56 = vector.broadcast %cst_28 : f32 to vector<32x1xf32>
    %57 = arith.select %40, %35, %56 : vector<32x1xi1>, vector<32x1xf32>
    %cst_29 = arith.constant dense<0xFF800000> : vector<1xf32>
    %58 = vector.multi_reduction <maximumf>, %57, %cst_29 [0] : vector<32x1xf32> to vector<1xf32>
    %59 = vector.shape_cast %58 : vector<1xf32> to vector<1x1xf32>
    %60 = vector.broadcast %59 : vector<1x1xf32> to vector<32x1xf32>
    %61 = arith.subf %57, %60 : vector<32x1xf32>
    %62 = math.exp %61 : vector<32x1xf32>
    %cst_30 = arith.constant dense<0.000000e+00> : vector<1xf32>
    %63 = vector.multi_reduction <add>, %62, %cst_30 [0] : vector<32x1xf32> to vector<1xf32>
    %64 = vector.shape_cast %63 : vector<1xf32> to vector<1x1xf32>
    %65 = math.log %64 : vector<1x1xf32>
    %66 = vector.broadcast %65 : vector<1x1xf32> to vector<32x1xf32>
    %67 = arith.subf %61, %66 : vector<32x1xf32>
    %c0_31 = arith.constant 0 : index
    %c0_32 = arith.constant 0 : index
    %c0_33 = arith.constant 0 : index
    %68 = vector.load %arg11[%c0_31, %c0_32, %c0_33] : memref<1x32x1xf32, #tpu.memory_space<vmem>>, vector<1x32x1xf32>
    %69 = vector.shape_cast %68 : vector<1x32x1xf32> to vector<32x1xf32>
    %70 = vector.shape_cast %67 : vector<32x1xf32> to vector<1x32x1xf32>
    tpu.vector_store %arg11[%c0_31, %c0_32, %c0_33], %70 {strides = array<i32>} : memref<1x32x1xf32, #tpu.memory_space<vmem>>, vector<1x32x1xf32>,
    return
  }
  func.func @transform_0(%arg0: i32, %arg1: memref<2xi32, #tpu.memory_space<smem>>) -> (i32, i32, i32) {
    %c0_i32 = arith.constant 0 : i32
    %c0_i32_0 = arith.constant 0 : i32
    %c0_i32_1 = arith.constant 0 : i32
    return %arg0, %c0_i32, %c0_i32_0 : i32, i32, i32
  }
  func.func @transform_1(%arg0: i32, %arg1: memref<2xi32, #tpu.memory_space<smem>>) -> (i32, i32, i32) {
    %c0_i32 = arith.constant 0 : i32
    %c0_i32_0 = arith.constant 0 : i32
    %c0_i32_1 = arith.constant 0 : i32
    return %arg0, %c0_i32, %c0_i32_0 : i32, i32, i32
  }
  func.func @transform_2(%arg0: i32, %arg1: memref<2xi32, #tpu.memory_space<smem>>) -> (i32, i32, i32) {
    %c0_i32 = arith.constant 0 : i32
    %c0_i32_0 = arith.constant 0 : i32
    %c0_i32_1 = arith.constant 0 : i32
    return %arg0, %c0_i32, %c0_i32_0 : i32, i32, i32
  }
  func.func @transform_3(%arg0: i32, %arg1: memref<2xi32, #tpu.memory_space<smem>>) -> (i32, i32) {
    %c0_i32 = arith.constant 0 : i32
    %c0_i32_0 = arith.constant 0 : i32
    %c0_i32_1 = arith.constant 0 : i32
    return %c0_i32, %c0_i32_0 : i32, i32
  }
  func.func @transform_4(%arg0: i32, %arg1: memref<2xi32, #tpu.memory_space<smem>>) -> (i32, i32) {
    %c0_i32 = arith.constant 0 : i32
    %c0_i32_0 = arith.constant 0 : i32
    %c0_i32_1 = arith.constant 0 : i32
    return %c0_i32, %c0_i32_0 : i32, i32
  }
  func.func @transform_5(%arg0: i32, %arg1: memref<2xi32, #tpu.memory_space<smem>>) -> (i32, i32) {
    %c0_i32 = arith.constant 0 : i32
    %c0_i32_0 = arith.constant 0 : i32
    %c0_i32_1 = arith.constant 0 : i32
    return %c0_i32, %c0_i32_0 : i32, i32
  }
  func.func @transform_6(%arg0: i32, %arg1: memref<2xi32, #tpu.memory_space<smem>>) -> (i32, i32) {
    %c0_i32 = arith.constant 0 : i32
    %c0_i32_0 = arith.constant 0 : i32
    %c0_i32_1 = arith.constant 0 : i32
    return %c0_i32, %c0_i32_0 : i32, i32
  }
  func.func @transform_7(%arg0: i32, %arg1: memref<2xi32, #tpu.memory_space<smem>>) -> (i32, i32) {
    %c0_i32 = arith.constant 0 : i32
    %c0_i32_0 = arith.constant 0 : i32
    %c0_i32_1 = arith.constant 0 : i32
    return %c0_i32, %c0_i32_0 : i32, i32
  }
  func.func @transform_8(%arg0: i32, %arg1: memref<2xi32, #tpu.memory_space<smem>>) -> (i32, i32, i32) {
    %c0_i32 = arith.constant 0 : i32
    %c0_i32_0 = arith.constant 0 : i32
    %c0_i32_1 = arith.constant 0 : i32
    return %arg0, %c0_i32, %c0_i32_0 : i32, i32, i32
  }
  func.func @transform_9(%arg0: i32, %arg1: memref<2xi32, #tpu.memory_space<smem>>) -> (i32, i32, i32) {
    %c0_i32 = arith.constant 0 : i32
    %c0_i32_0 = arith.constant 0 : i32
    %c0_i32_1 = arith.constant 0 : i32
    return %arg0, %c0_i32, %c0_i32_0 : i32, i32, i32
  }
}

</mosaic_0001>

<llo_original>
// kernel: bidaf_forward.28
$region0: #{bidaf_forward.28}
  #allocation0 [shape = 'u32[]', space=smem, size = 0x4, offset = 0x4, fixed_abs, tag = 'smem constant byte address 0x4 - core index']
  #allocation1 [shape = 'u32[72,128]{1,0:T(1,128)}', space=vmem, size = 0x9000, scoped, tag = 'internal scratch']
  %s0 = inlined_call_operand.vmem [shape: f32[64,32], index: 0, kind: input, shape index: {}]
  %s1 = inlined_call_operand.vmem [shape: f32[32,128], index: 1, kind: input, shape index: {}]
  %s2 = inlined_call_operand.vmem [shape: f32[1,128], index: 2, kind: input, shape index: {}]
  %s3 = inlined_call_operand.vmem [shape: f32[64,128], index: 3, kind: output, shape index: {}]
  %s4 = sld [smem:[#allocation0]]
  $region22: #{bidaf_forward.28} parent=0
    _
  %s6 = ssub.s32 1, %s4
  %s7 = scalar_select 0, %s6, %s4
  // Predicated region
  $region2: #{bidaf_forward.28} parent=0 // pred_check
    _
  $region3: #{bidaf_forward.28} parent=0 // pred_check_branch
    %9 = sbr.rel (0) target = $region5
  $region4: #{bidaf_forward.28} parent=0 // pred_region
    _
  $region5: #{bidaf_forward.28} parent=0 // pred_fallthru
    _
  // Predicated region
  $region6: #{bidaf_forward.28} parent=0 // pred_check
    _
  $region7: #{bidaf_forward.28} parent=0 // pred_check_branch
    %11 = sbr.rel (0) target = $region9
  $region8: #{bidaf_forward.28} parent=0 // pred_region
    _
  $region9: #{bidaf_forward.28} parent=0 // pred_fallthru
    _
  // Predicated region
  $region10: #{bidaf_forward.28} parent=0 // pred_check
    _
  $region11: #{bidaf_forward.28} parent=0 // pred_check_branch
    %13 = sbr.rel (0) target = $region13
  $region12: #{bidaf_forward.28} parent=0 // pred_region
    _
  $region13: #{bidaf_forward.28} parent=0 // pred_fallthru
    _
  %v15 = vld [vmem:[%s0] sm:$0xff]
  %v16 = vld [vmem:[%s0 + $0x8] sm:$0xff]
  %v17 = vld [vmem:[%s0 + $0x10] sm:$0xff]
  %v18 = vld [vmem:[%s0 + $0x18] sm:$0xff]
  %v19 = vld [vmem:[%s0 + $0x20] sm:$0xff]
  %v20 = vld [vmem:[%s0 + $0x28] sm:$0xff]
  %v21 = vld [vmem:[%s0 + $0x30] sm:$0xff]
  %v22 = vld [vmem:[%s0 + $0x38] sm:$0xff]
  %v23 = vpack.c.bf16 %v16, %v15
  %v24 = vpack.c.bf16 %v18, %v17
  %v25 = vpack.c.bf16 %v20, %v19
  %v26 = vpack.c.bf16 %v22, %v21
  %v27 = vld [vmem:[%s1] sm:$0xff]
  %v28 = vld [vmem:[%s1 + $0x8] sm:$0xff]
  %v29 = vld [vmem:[%s1 + $0x10] sm:$0xff]
  %v30 = vld [vmem:[%s1 + $0x18] sm:$0xff]
  %v31 = vpack.c.bf16 %v28, %v27
  %v32 = vpack.c.bf16 %v30, %v29
  %v33 = vld [vmem:[%s2] sm:$0x1]
  %v35 = vperm.slane %v33, 0
  %vm37 = vcmask 261120
  %v39 = vsel %vm37, %v23, 0
  %v42 = vsel %vm37, %v24, 0
  %v45 = vsel %vm37, %v25, 0
  %v48 = vsel %vm37, %v26, 0
  %50 = vmatpush.bf16.msra.mxu0 0
  %51 = vmatpush.bf16.msra.mxu0 0
  %52 = vmatpush.bf16.msra.mxu0 0
  %53 = vmatpush.bf16.msra.mxu0 0
  %54 = vmatpush.bf16.msra.mxu0 0
  %55 = vmatpush.bf16.msra.mxu0 0
  %56 = vmatpush.bf16.msra.mxu0 %v32
  %57 = vmatpush.bf16.msra.mxu0 %v31
  %58 = vmatmul.bf16.gmra.mxu0 %v39
  %v59 = vpop.f32.mrf.mxu0
  %v60 = vadd.f32 %v35, %v59
  %v61 = vpop.f32.mrf.mxu0
  %v62 = vadd.f32 %v35, %v61
  %63 = vmatmul.bf16.gmra.mxu0 %v42
  %v64 = vpop.f32.mrf.mxu0
  %v65 = vadd.f32 %v35, %v64
  %v66 = vpop.f32.mrf.mxu0
  %v67 = vadd.f32 %v35, %v66
  %68 = vmatmul.bf16.gmra.mxu0 %v45
  %v69 = vpop.f32.mrf.mxu0
  %v70 = vadd.f32 %v35, %v69
  %v71 = vpop.f32.mrf.mxu0
  %v72 = vadd.f32 %v35, %v71
  %73 = vmatmul.bf16.gmra.mxu0 %v48
  %v74 = vpop.f32.mrf.mxu0
  %v75 = vadd.f32 %v35, %v74
  %v76 = vpop.f32.mrf.mxu0
  %v77 = vadd.f32 %v35, %v76
  %78 = vdwg.mxu0
  %79 = vst [vmem:[%s3] sm:$0xff] %v60
  %80 = vst [vmem:[%s3 + $0x8] sm:$0xff] %v62
  %81 = vst [vmem:[%s3 + $0x10] sm:$0xff] %v65
  %82 = vst [vmem:[%s3 + $0x18] sm:$0xff] %v67
  %83 = vst [vmem:[%s3 + $0x20] sm:$0xff] %v70
  %84 = vst [vmem:[%s3 + $0x28] sm:$0xff] %v72
  %85 = vst [vmem:[%s3 + $0x30] sm:$0xff] %v75
  %86 = vst [vmem:[%s3 + $0x38] sm:$0xff] %v77
  // Predicated region
  $region14: #{bidaf_forward.28} parent=0 // pred_check
    _
  $region15: #{bidaf_forward.28} parent=0 // pred_check_branch
    %88 = sbr.rel (0) target = $region17
  $region16: #{bidaf_forward.28} parent=0 // pred_region
    _
  $region17: #{bidaf_forward.28} parent=0 // pred_fallthru
    _
  // Predicated region
  $region18: #{bidaf_forward.28} parent=0 // pred_check
    _
  $region19: #{bidaf_forward.28} parent=0 // pred_check_branch
    %90 = sbr.rel (0) target = $region21
  $region20: #{bidaf_forward.28} parent=0 // pred_region
    _
  $region21: #{bidaf_forward.28} parent=0 // pred_fallthru
    _

// kernel: bidaf_forward.29
$region0: #{bidaf_forward.29}
  #allocation0 [shape = 'u32[]', space=smem, size = 0x4, offset = 0x4, fixed_abs, tag = 'smem constant byte address 0x4 - core index']
  #allocation1 [shape = 'u32[72,128]{1,0:T(1,128)}', space=vmem, size = 0x9000, scoped, tag = 'internal scratch']
  #allocation2 [shape = 'f32[2,32]{1,0:T(2,128)}', space=vmem, size = 0x400, scoped, tag = 'scratch operand']
  #allocation3 [shape = 'f32[2,32]{1,0:T(2,128)}', space=vmem, size = 0x400, scoped, tag = 'scratch operand']
  %s0 = inlined_call_operand.vmem [shape: s32[2,1], index: 0, kind: input, shape index: {}]
  %s1 = inlined_call_operand.vmem [shape: f32[32,2,128], index: 1, kind: input, shape index: {}]
  %s2 = inlined_call_operand.vmem [shape: f32[32,128], index: 2, kind: input, shape index: {}]
  %s3 = inlined_call_operand.vmem [shape: f32[32,2,32], index: 3, kind: output, shape index: {}]
  %s4 = sld [smem:[#allocation0]]
  $region49: #{bidaf_forward.29} parent=0
    _
  %s6 = ssub.s32 1, %s4
  %s7 = scalar_select 0, %s6, %s4
  loop: start=0, step=1, limit=34
  $region2: #{bidaf_forward.29} parent=0 // loop_pre_header
    _
  $region3: #{bidaf_forward.29} parent=0 // loop_header
    %s9 = sphi 0, %s13
    %p10 = scmp.ge.s32.totalorder %s9, 34
    %s17 = sphi 0, %s17
    %s19 = sphi 0, %s17
    %s20 = sphi 0, %s19
    %s34 = sphi 0, %s20
    %s42 = sphi 0, %s44
    %s45 = sphi 0, %s42
    %s46 = sphi 0, %s45
    %s62 = sphi 0, %s46
    %s66 = sphi 0, %s66
    %s68 = sphi 0, %s66
    %s69 = sphi 0, %s68
    %s83 = sphi 0, %s69
    %s91 = sphi 0, %s93
    %s94 = sphi 0, %s91
    %s95 = sphi 0, %s94
    %s111 = sphi 0, %s95
  $region4: #{bidaf_forward.29} parent=0 // loop_header_branch
    %12 = sbr.rel (%p10) target = $region8
  $region5: #{bidaf_forward.29} parent=0 // loop_body
    %s14 = ssub.s32 %s9, 1
    %s15 = ssub.s32 %s9, 2
    %s16 = sadd.s32 %s9, 1
    %s18 = sadd.s32 %s17, 1
    %p21 = scmp.eq.s32.totalorder %s9, 31
    %p22 = scmp.ne.s32.totalorder %s17, %s19
    %p23 = scmp.eq.s32.totalorder %s9, 0
    %p24 = por %p22, %p23
    %p25 = scmp.ne.s32.totalorder %s17, %s19
    %p26 = scmp.eq.s32.totalorder %s14, 31
    %p27 = por %p25, %p26
    %p28 = scmp.ne.s32.totalorder %s19, %s20
    %p29 = scmp.eq.s32.totalorder %s14, 0
    %p30 = por %p28, %p29
    %p31 = scmp.ne.s32.totalorder %s19, %s20
    %p32 = scmp.eq.s32.totalorder %s15, 31
    %p33 = por %p31, %p32
    %p35 = scmp.ne.s32.totalorder %s20, %s34
    %p36 = scmp.eq.s32.totalorder %s15, 0
    %p37 = por %p35, %p36
    %s38 = ssub.s32 31, %s9
    %s39 = ssub.s32 31, %s16
    %s40 = ssub.s32 %s38, %s39
    %p41 = scmp.eq.s32.totalorder %s40, 0
    %s43 = sadd.s32 %s42, 1
    %s44 = scalar_select %p41, %s42, %s43
    %p47 = pneg %p41
    %p48 = scmp.eq.s32.totalorder %s9, 31
    %p49 = por %p47, %p48
    %p50 = scmp.ne.s32.totalorder %s42, %s45
    %p51 = scmp.eq.s32.totalorder %s9, 0
    %p52 = por %p50, %p51
    %p53 = scmp.ne.s32.totalorder %s42, %s45
    %p54 = scmp.eq.s32.totalorder %s14, 31
    %p55 = por %p53, %p54
    %p56 = scmp.ne.s32.totalorder %s45, %s46
    %p57 = scmp.eq.s32.totalorder %s14, 0
    %p58 = por %p56, %p57
    %p59 = scmp.ne.s32.totalorder %s45, %s46
    %p60 = scmp.eq.s32.totalorder %s15, 31
    %p61 = por %p59, %p60
    %p63 = scmp.ne.s32.totalorder %s46, %s62
    %p64 = scmp.eq.s32.totalorder %s15, 0
    %p65 = por %p63, %p64
    %s67 = sadd.s32 %s66, 1
    %p70 = scmp.eq.s32.totalorder %s9, 31
    %p71 = scmp.ne.s32.totalorder %s66, %s68
    %p72 = scmp.eq.s32.totalorder %s9, 0
    %p73 = por %p71, %p72
    %p74 = scmp.ne.s32.totalorder %s66, %s68
    %p75 = scmp.eq.s32.totalorder %s14, 31
    %p76 = por %p74, %p75
    %p77 = scmp.ne.s32.totalorder %s68, %s69
    %p78 = scmp.eq.s32.totalorder %s14, 0
    %p79 = por %p77, %p78
    %p80 = scmp.ne.s32.totalorder %s68, %s69
    %p81 = scmp.eq.s32.totalorder %s15, 31
    %p82 = por %p80, %p81
    %p84 = scmp.ne.s32.totalorder %s69, %s83
    %p85 = scmp.eq.s32.totalorder %s15, 0
    %p86 = por %p84, %p85
    %s87 = ssub.s32 31, %s9
    %s88 = ssub.s32 31, %s16
    %s89 = ssub.s32 %s87, %s88
    %p90 = scmp.eq.s32.totalorder %s89, 0
    %s92 = sadd.s32 %s91, 1
    %s93 = scalar_select %p90, %s91, %s92
    %p96 = pneg %p90
    %p97 = scmp.eq.s32.totalorder %s9, 31
    %p98 = por %p96, %p97
    %p99 = scmp.ne.s32.totalorder %s91, %s94
    %p100 = scmp.eq.s32.totalorder %s9, 0
    %p101 = por %p99, %p100
    %p102 = scmp.ne.s32.totalorder %s91, %s94
    %p103 = scmp.eq.s32.totalorder %s14, 31
    %p104 = por %p102, %p103
    %p105 = scmp.ne.s32.totalorder %s94, %s95
    %p106 = scmp.eq.s32.totalorder %s14, 0
    %p107 = por %p105, %p106
    %p108 = scmp.ne.s32.totalorder %s94, %s95
    %p109 = scmp.eq.s32.totalorder %s15, 31
    %p110 = por %p108, %p109
    %p112 = scmp.ne.s32.totalorder %s95, %s111
    %p113 = scmp.eq.s32.totalorder %s15, 0
    %p114 = por %p112, %p113
    %p115 = scmp.le.s32.totalorder 1, %s9
    %p116 = scmp.lt.s32.totalorder %s9, 33
    %p117 = pnand %p115, %p116
    %p118 = pneg %p117
    // Predicated region
    $region9: #{bidaf_forward.29} parent=5 // pred_check
      _
    $region10: #{bidaf_forward.29} parent=5 // pred_check_branch
      %120 = sbr.rel (%p117) target = $region12
    $region11: #{bidaf_forward.29} parent=5 // pred_region
      %s121 = ssub.s32 %s9, 1
      // Predicated region
      $region13: #{bidaf_forward.29} parent=11 // pred_check
        %p122 = pneg %p30
      $region14: #{bidaf_forward.29} parent=11 // pred_check_branch
        %124 = sbr.rel (%p122) target = $region16
      $region15: #{bidaf_forward.29} parent=11 // pred_region
        _
      $region16: #{bidaf_forward.29} parent=11 // pred_fallthru
        _
      // Predicated region
      $region17: #{bidaf_forward.29} parent=11 // pred_check
        %p125 = pneg %p79
      $region18: #{bidaf_forward.29} parent=11 // pred_check_branch
        %127 = sbr.rel (%p125) target = $region20
      $region19: #{bidaf_forward.29} parent=11 // pred_region
        _
      $region20: #{bidaf_forward.29} parent=11 // pred_fallthru
        _
    $region12: #{bidaf_forward.29} parent=5 // pred_fallthru
      _
    %p128 = scmp.lt.s32.totalorder %s9, 32
    // Predicated region
    $region21: #{bidaf_forward.29} parent=5 // pred_check
      %p129 = pneg %p128
    $region22: #{bidaf_forward.29} parent=5 // pred_check_branch
      %131 = sbr.rel (%p129) target = $region24
    $region23: #{bidaf_forward.29} parent=5 // pred_region
      // Predicated region
      $region25: #{bidaf_forward.29} parent=23 // pred_check
        %p132 = pneg %p52
      $region26: #{bidaf_forward.29} parent=23 // pred_check_branch
        %134 = sbr.rel (%p132) target = $region28
      $region27: #{bidaf_forward.29} parent=23 // pred_region
        %s135 = ssub.s32 31, %s9
        %p136 = scmp.lt.s32.totalorder %s135, 31
        %s137 = scalar_select %p136, %s135, 31
        %s138 = smul.addr %s137, 2
        %s139 = scalar_lea.vmem %s1, %s138
        %s140 = ssub.s32 31, %s9
      $region28: #{bidaf_forward.29} parent=23 // pred_fallthru
        _
    $region24: #{bidaf_forward.29} parent=5 // pred_fallthru
      _
    %p141 = scmp.le.s32.totalorder 1, %s9
    %p142 = scmp.lt.s32.totalorder %s9, 33
    %p143 = pnand %p141, %p142
    %p144 = pneg %p143
    // Predicated region
    $region29: #{bidaf_forward.29} parent=5 // pred_check
      _
    $region30: #{bidaf_forward.29} parent=5 // pred_check_branch
      %146 = sbr.rel (%p143) target = $region32
    $region31: #{bidaf_forward.29} parent=5 // pred_region
      %s147 = ssub.s32 %s9, 1
      %p148 = pneg %p30
      %p149 = pneg %p27
      %s150 = ssub.s32 31, %s14
      %p151 = scmp.lt.s32.totalorder %s150, 31
      %s152 = scalar_select %p151, %s150, 31
      %s153 = smul.addr %s152, 2
      %s154 = scalar_lea.vmem %s1, %s153
      %p155 = pneg %p58
      %p156 = pneg %p55
      %p157 = pneg %p79
      %p158 = pneg %p76
      %p159 = pneg %p107
      %p160 = pneg %p104
      %s161 = ssub.s32 31, %s14
      %p162 = scmp.lt.s32.totalorder %s161, 31
      %s163 = scalar_select %p162, %s161, 31
      %s164 = smul.addr %s163, 2
      %s165 = scalar_lea.vmem %s3, %s164
      %s166 = ssub.s32 31, %s14
      %p167 = scmp.lt.s32.totalorder %s166, 31
      %s168 = scalar_select %p167, %s166, 31
      %s169 = smul.addr %s168, 2
      %s170 = scalar_lea.vmem %s1, %s169
      %s171 = ssub.s32 31, %s14
      %s172 = ssub.s32 31, %s14
      %p173 = scmp.lt.s32.totalorder %s172, 31
      %s174 = scalar_select %p173, %s172, 31
      %s175 = smul.addr %s174, 2
      %s176 = scalar_lea.vmem %s3, %s175
      %s177 = ssub.s32 31, %s14
      %p179 = scmp.eq.s32.totalorder %s14, 0
      // Predicated region
      $region33: #{bidaf_forward.29} parent=31 // pred_check
        %p180 = pneg %p179
      $region34: #{bidaf_forward.29} parent=31 // pred_check_branch
        %182 = sbr.rel (%p180) target = $region36
      $region35: #{bidaf_forward.29} parent=31 // pred_region
        %vm183 = vcmask 254976
        %184 = vst.msk [vmem:[#allocation2] sm:$0x3] %vm183, 0.0
        %185 = vst.msk [vmem:[#allocation3] sm:$0x3] %vm183, 0.0
      $region36: #{bidaf_forward.29} parent=31 // pred_fallthru
        _
      %s186 = ssub.s32 31, %s14
      %v187 = vld [vmem:[#allocation2] sm:$0x3]
      %v188 = vld [vmem:[#allocation3] sm:$0x3]
      %v189 = vld [vmem:[%s170] sm:$0x3]
      %v190 = vpack.c.bf16 %v187, %v187
      %v191 = vld [vmem:[%s2] sm:$0xff]
      %v192 = vld [vmem:[%s2 + $0x8] sm:$0xff]
      %v193 = vld [vmem:[%s2 + $0x10] sm:$0xff]
      %v194 = vld [vmem:[%s2 + $0x18] sm:$0xff]
      %v195 = vpack.c.bf16 %v192, %v191
      %v196 = vpack.c.bf16 %v194, %v193
      %vm197 = vcmask 261120
      %v199 = vsel %vm197, %v190, 0
      %201 = vmatpush.bf16.msra.mxu0 0
      %202 = vmatpush.bf16.msra.mxu0 0
      %203 = vmatpush.bf16.msra.mxu0 0
      %204 = vmatpush.bf16.msra.mxu0 0
      %205 = vmatpush.bf16.msra.mxu0 0
      %206 = vmatpush.bf16.msra.mxu0 0
      %207 = vmatpush.bf16.msra.mxu0 %v196
      %208 = vmatpush.bf16.msra.mxu0 %v195
      %209 = vmatmul.bf16.gmra.mxu0 %v199
      %v210 = vpop.f32.mrf.mxu0
      %v211 = vadd.f32 0.0, %v210
      %v212 = vpop.f32.mrf.mxu0
      %213 = vdwg.mxu0
      %v214 = vadd.f32 %v189, %v211
      %v215 = vxor.u32 %v214, 2147483648
      %v216 = vmul.f32 %v215, 1.442695
      %v217 = vpow.pop %v216
      %v218 = vadd.f32 %v217, 1.0
      %v219 = vrcp.pop %v218
      %v220 = vmul.f32 %v218, %v219
      %v221 = vsub.f32 1.0, %v220
      %v222 = vmul.f32 %v219, %v221
      %v223 = vadd.f32 %v219, %v222
      %vm224 = vweird.f32 %v218
      %vm225 = vweird.f32 %v219
      %vm226 = vmor %vm224, %vm225
      %v227 = vsel %vm226, %v219, %v223
      %v228 = vand.u32 2147483647, %v218
      %vm229 = vcmp.eq.f32.partialorder %v228, 8.507059e+37
      %v230 = vand.u32 %v218, 2147483648
      %v231 = vor.u32 1.1754944e-38, %v230
      %v232 = vsel %vm229, %v231, %v227
      %v233 = vmul.f32 1.0, %v232
      %v234 = vtanh.pop %v214
      %236 = vrot.lane.b32.xlu0 %v188, 32
      %v237 = vpop.permute.xlu0 %236
      %v239 = vmul.f32 %v233, %v237
      %241 = vrot.lane.b32.xlu0 %v234, 64
      %v242 = vpop.permute.xlu0 %241
      %v244 = vmul.f32 %v233, %v242
      %246 = vrot.lane.b32.xlu0 %v244, 32
      %v247 = vpop.permute.xlu0 %246
      %v249 = vadd.f32 %v239, %v247
      %v250 = vtanh.pop %v249
      %252 = vrot.lane.b32.xlu0 %v250, 64
      %v253 = vpop.permute.xlu0 %252
      %v255 = vmul.f32 %v233, %v253
      %v256 = vld [vmem:[%s0] sm:$0x3]
      %v257 = vstv %s186
      %vm258 = vcmp.lt.s32.totalorder %v257, %v256
      %v259 = vsel %vm258, 1, 0
      %v260 = vcvt.s32.f32 %v259
      %262 = vset.pattern.permute.xlu0 0
      %263 = vperm.xlu0 %262, %v260
      %v264 = vpop.permute.xlu0 %263
      %v266 = vmul.f32 %v264, %v255
      %v267 = vsub.f32 1.0, %v260
      %269 = vset.pattern.permute.xlu0 0
      %270 = vperm.xlu0 %269, %v267
      %v271 = vpop.permute.xlu0 %270
      %v273 = vmul.f32 %v271, %v187
      %275 = vrot.lane.b32.xlu0 %v273, 96
      %v276 = vpop.permute.xlu0 %275
      %v278 = vadd.f32 %v266, %v276
      %280 = vrot.lane.b32.xlu0 %v278, 32
      %v281 = vpop.permute.xlu0 %280
      %vm283 = vcmask 254976
      %284 = vst.msk [vmem:[#allocation2] sm:$0x3] %vm283, %v281
      %v285 = vmul.f32 %v264, %v249
      %v286 = vmul.f32 %v271, %v188
      %288 = vrot.lane.b32.xlu0 %v286, 32
      %v289 = vpop.permute.xlu0 %288
      %v291 = vadd.f32 %v285, %v289
      %293 = vrot.lane.b32.xlu0 %v291, 96
      %v294 = vpop.permute.xlu0 %293
      %296 = vst.msk [vmem:[#allocation3] sm:$0x3] %vm283, %v294
      %298 = vrot.lane.b32.xlu0 %v266, 32
      %v299 = vpop.permute.xlu0 %298
      %301 = vst.msk [vmem:[%s176] sm:$0x3] %vm283, %v299
      %s302 = ssub.s32 31, %s14
      %p303 = scmp.lt.s32.totalorder %s302, 31
      %s304 = scalar_select %p303, %s302, 31
      %s305 = smul.addr %s304, 2
      %s306 = scalar_lea.vmem %s3, %s305
      // Predicated region
      $region37: #{bidaf_forward.29} parent=31 // pred_check
        %p307 = pneg %p104
      $region38: #{bidaf_forward.29} parent=31 // pred_check_branch
        %309 = sbr.rel (%p307) target = $region40
      $region39: #{bidaf_forward.29} parent=31 // pred_region
        %s310 = ssub.s32 31, %s14
      $region40: #{bidaf_forward.29} parent=31 // pred_fallthru
        _
    $region32: #{bidaf_forward.29} parent=5 // pred_fallthru
      _
    %p311 = scmp.le.s32.totalorder 2, %s9
    // Predicated region
    $region41: #{bidaf_forward.29} parent=5 // pred_check
      %p312 = pneg %p311
    $region42: #{bidaf_forward.29} parent=5 // pred_check_branch
      %314 = sbr.rel (%p312) target = $region44
    $region43: #{bidaf_forward.29} parent=5 // pred_region
      %s315 = ssub.s32 %s9, 2
      // Predicated region
      $region45: #{bidaf_forward.29} parent=43 // pred_check
        %p316 = pneg %p110
      $region46: #{bidaf_forward.29} parent=43 // pred_check_branch
        %318 = sbr.rel (%p316) target = $region48
      $region47: #{bidaf_forward.29} parent=43 // pred_region
        %s319 = ssub.s32 31, %s15
        %p320 = scmp.lt.s32.totalorder %s319, 31
        %s321 = scalar_select %p320, %s319, 31
        %s322 = smul.addr %s321, 2
        %s323 = scalar_lea.vmem %s3, %s322
      $region48: #{bidaf_forward.29} parent=43 // pred_fallthru
        _
    $region44: #{bidaf_forward.29} parent=5 // pred_fallthru
      _
  $region6: #{bidaf_forward.29} parent=0 // loop_footer
    %s13 = sadd.s32 1, %s9
  $region7: #{bidaf_forward.29} parent=0 // loop_footer_branch
    %8 = sbr.rel target = $region3
  $region8: #{bidaf_forward.29} parent=0 // loop_exit
    _

// kernel: bidaf_forward.27
$region0: #{bidaf_forward.27}
  #allocation0 [shape = 'u32[]', space=smem, size = 0x4, offset = 0x4, fixed_abs, tag = 'smem constant byte address 0x4 - core index']
  #allocation1 [shape = 'u32[72,128]{1,0:T(1,128)}', space=vmem, size = 0x9000, scoped, tag = 'internal scratch']
  #allocation2 [shape = 'f32[2,32]{1,0:T(2,128)}', space=vmem, size = 0x400, scoped, tag = 'scratch operand']
  #allocation3 [shape = 'f32[2,32]{1,0:T(2,128)}', space=vmem, size = 0x400, scoped, tag = 'scratch operand']
  %s0 = inlined_call_operand.vmem [shape: s32[2,1], index: 0, kind: input, shape index: {}]
  %s1 = inlined_call_operand.vmem [shape: f32[32,2,128], index: 1, kind: input, shape index: {}]
  %s2 = inlined_call_operand.vmem [shape: f32[32,128], index: 2, kind: input, shape index: {}]
  %s3 = inlined_call_operand.vmem [shape: f32[32,2,32], index: 3, kind: output, shape index: {}]
  %s4 = sld [smem:[#allocation0]]
  $region49: #{bidaf_forward.27} parent=0
    _
  %s6 = ssub.s32 1, %s4
  %s7 = scalar_select 0, %s6, %s4
  loop: start=0, step=1, limit=34
  $region2: #{bidaf_forward.27} parent=0 // loop_pre_header
    _
  $region3: #{bidaf_forward.27} parent=0 // loop_header
    %s9 = sphi 0, %s13
    %p10 = scmp.ge.s32.totalorder %s9, 34
    %s17 = sphi 0, %s17
    %s19 = sphi 0, %s17
    %s20 = sphi 0, %s19
    %s34 = sphi 0, %s20
    %s40 = sphi 0, %s42
    %s43 = sphi 0, %s40
    %s44 = sphi 0, %s43
    %s60 = sphi 0, %s44
    %s64 = sphi 0, %s64
    %s66 = sphi 0, %s64
    %s67 = sphi 0, %s66
    %s81 = sphi 0, %s67
    %s87 = sphi 0, %s89
    %s90 = sphi 0, %s87
    %s91 = sphi 0, %s90
    %s107 = sphi 0, %s91
  $region4: #{bidaf_forward.27} parent=0 // loop_header_branch
    %12 = sbr.rel (%p10) target = $region8
  $region5: #{bidaf_forward.27} parent=0 // loop_body
    %s14 = ssub.s32 %s9, 1
    %s15 = ssub.s32 %s9, 2
    %s16 = sadd.s32 %s9, 1
    %s18 = sadd.s32 %s17, 1
    %p21 = scmp.eq.s32.totalorder %s9, 31
    %p22 = scmp.ne.s32.totalorder %s17, %s19
    %p23 = scmp.eq.s32.totalorder %s9, 0
    %p24 = por %p22, %p23
    %p25 = scmp.ne.s32.totalorder %s17, %s19
    %p26 = scmp.eq.s32.totalorder %s14, 31
    %p27 = por %p25, %p26
    %p28 = scmp.ne.s32.totalorder %s19, %s20
    %p29 = scmp.eq.s32.totalorder %s14, 0
    %p30 = por %p28, %p29
    %p31 = scmp.ne.s32.totalorder %s19, %s20
    %p32 = scmp.eq.s32.totalorder %s15, 31
    %p33 = por %p31, %p32
    %p35 = scmp.ne.s32.totalorder %s20, %s34
    %p36 = scmp.eq.s32.totalorder %s15, 0
    %p37 = por %p35, %p36
    %s38 = ssub.s32 %s9, %s16
    %p39 = scmp.eq.s32.totalorder %s38, 0
    %s41 = sadd.s32 %s40, 1
    %s42 = scalar_select %p39, %s40, %s41
    %p45 = pneg %p39
    %p46 = scmp.eq.s32.totalorder %s9, 31
    %p47 = por %p45, %p46
    %p48 = scmp.ne.s32.totalorder %s40, %s43
    %p49 = scmp.eq.s32.totalorder %s9, 0
    %p50 = por %p48, %p49
    %p51 = scmp.ne.s32.totalorder %s40, %s43
    %p52 = scmp.eq.s32.totalorder %s14, 31
    %p53 = por %p51, %p52
    %p54 = scmp.ne.s32.totalorder %s43, %s44
    %p55 = scmp.eq.s32.totalorder %s14, 0
    %p56 = por %p54, %p55
    %p57 = scmp.ne.s32.totalorder %s43, %s44
    %p58 = scmp.eq.s32.totalorder %s15, 31
    %p59 = por %p57, %p58
    %p61 = scmp.ne.s32.totalorder %s44, %s60
    %p62 = scmp.eq.s32.totalorder %s15, 0
    %p63 = por %p61, %p62
    %s65 = sadd.s32 %s64, 1
    %p68 = scmp.eq.s32.totalorder %s9, 31
    %p69 = scmp.ne.s32.totalorder %s64, %s66
    %p70 = scmp.eq.s32.totalorder %s9, 0
    %p71 = por %p69, %p70
    %p72 = scmp.ne.s32.totalorder %s64, %s66
    %p73 = scmp.eq.s32.totalorder %s14, 31
    %p74 = por %p72, %p73
    %p75 = scmp.ne.s32.totalorder %s66, %s67
    %p76 = scmp.eq.s32.totalorder %s14, 0
    %p77 = por %p75, %p76
    %p78 = scmp.ne.s32.totalorder %s66, %s67
    %p79 = scmp.eq.s32.totalorder %s15, 31
    %p80 = por %p78, %p79
    %p82 = scmp.ne.s32.totalorder %s67, %s81
    %p83 = scmp.eq.s32.totalorder %s15, 0
    %p84 = por %p82, %p83
    %s85 = ssub.s32 %s9, %s16
    %p86 = scmp.eq.s32.totalorder %s85, 0
    %s88 = sadd.s32 %s87, 1
    %s89 = scalar_select %p86, %s87, %s88
    %p92 = pneg %p86
    %p93 = scmp.eq.s32.totalorder %s9, 31
    %p94 = por %p92, %p93
    %p95 = scmp.ne.s32.totalorder %s87, %s90
    %p96 = scmp.eq.s32.totalorder %s9, 0
    %p97 = por %p95, %p96
    %p98 = scmp.ne.s32.totalorder %s87, %s90
    %p99 = scmp.eq.s32.totalorder %s14, 31
    %p100 = por %p98, %p99
    %p101 = scmp.ne.s32.totalorder %s90, %s91
    %p102 = scmp.eq.s32.totalorder %s14, 0
    %p103 = por %p101, %p102
    %p104 = scmp.ne.s32.totalorder %s90, %s91
    %p105 = scmp.eq.s32.totalorder %s15, 31
    %p106 = por %p104, %p105
    %p108 = scmp.ne.s32.totalorder %s91, %s107
    %p109 = scmp.eq.s32.totalorder %s15, 0
    %p110 = por %p108, %p109
    %p111 = scmp.le.s32.totalorder 1, %s9
    %p112 = scmp.lt.s32.totalorder %s9, 33
    %p113 = pnand %p111, %p112
    %p114 = pneg %p113
    // Predicated region
    $region9: #{bidaf_forward.27} parent=5 // pred_check
      _
    $region10: #{bidaf_forward.27} parent=5 // pred_check_branch
      %116 = sbr.rel (%p113) target = $region12
    $region11: #{bidaf_forward.27} parent=5 // pred_region
      %s117 = ssub.s32 %s9, 1
      // Predicated region
      $region13: #{bidaf_forward.27} parent=11 // pred_check
        %p118 = pneg %p30
      $region14: #{bidaf_forward.27} parent=11 // pred_check_branch
        %120 = sbr.rel (%p118) target = $region16
      $region15: #{bidaf_forward.27} parent=11 // pred_region
        _
      $region16: #{bidaf_forward.27} parent=11 // pred_fallthru
        _
      // Predicated region
      $region17: #{bidaf_forward.27} parent=11 // pred_check
        %p121 = pneg %p77
      $region18: #{bidaf_forward.27} parent=11 // pred_check_branch
        %123 = sbr.rel (%p121) target = $region20
      $region19: #{bidaf_forward.27} parent=11 // pred_region
        _
      $region20: #{bidaf_forward.27} parent=11 // pred_fallthru
        _
    $region12: #{bidaf_forward.27} parent=5 // pred_fallthru
      _
    %p124 = scmp.lt.s32.totalorder %s9, 32
    // Predicated region
    $region21: #{bidaf_forward.27} parent=5 // pred_check
      %p125 = pneg %p124
    $region22: #{bidaf_forward.27} parent=5 // pred_check_branch
      %127 = sbr.rel (%p125) target = $region24
    $region23: #{bidaf_forward.27} parent=5 // pred_region
      // Predicated region
      $region25: #{bidaf_forward.27} parent=23 // pred_check
        %p128 = pneg %p50
      $region26: #{bidaf_forward.27} parent=23 // pred_check_branch
        %130 = sbr.rel (%p128) target = $region28
      $region27: #{bidaf_forward.27} parent=23 // pred_region
        %p131 = scmp.lt.s32.totalorder %s9, 31
        %s132 = scalar_select %p131, %s9, 31
        %s133 = smul.addr %s132, 2
        %s134 = scalar_lea.vmem %s1, %s133
      $region28: #{bidaf_forward.27} parent=23 // pred_fallthru
        _
    $region24: #{bidaf_forward.27} parent=5 // pred_fallthru
      _
    %p135 = scmp.le.s32.totalorder 1, %s9
    %p136 = scmp.lt.s32.totalorder %s9, 33
    %p137 = pnand %p135, %p136
    %p138 = pneg %p137
    // Predicated region
    $region29: #{bidaf_forward.27} parent=5 // pred_check
      _
    $region30: #{bidaf_forward.27} parent=5 // pred_check_branch
      %140 = sbr.rel (%p137) target = $region32
    $region31: #{bidaf_forward.27} parent=5 // pred_region
      %s141 = ssub.s32 %s9, 1
      %p142 = pneg %p30
      %p143 = pneg %p27
      %p144 = scmp.lt.s32.totalorder %s14, 31
      %s145 = scalar_select %p144, %s14, 31
      %s146 = smul.addr %s145, 2
      %s147 = scalar_lea.vmem %s1, %s146
      %p148 = pneg %p56
      %p149 = pneg %p53
      %p150 = pneg %p77
      %p151 = pneg %p74
      %p152 = pneg %p103
      %p153 = pneg %p100
      %p154 = scmp.lt.s32.totalorder %s14, 31
      %s155 = scalar_select %p154, %s14, 31
      %s156 = smul.addr %s155, 2
      %s157 = scalar_lea.vmem %s3, %s156
      %p158 = scmp.lt.s32.totalorder %s14, 31
      %s159 = scalar_select %p158, %s14, 31
      %s160 = smul.addr %s159, 2
      %s161 = scalar_lea.vmem %s1, %s160
      %p162 = scmp.lt.s32.totalorder %s14, 31
      %s163 = scalar_select %p162, %s14, 31
      %s164 = smul.addr %s163, 2
      %s165 = scalar_lea.vmem %s3, %s164
      %p167 = scmp.eq.s32.totalorder %s14, 0
      // Predicated region
      $region33: #{bidaf_forward.27} parent=31 // pred_check
        %p168 = pneg %p167
      $region34: #{bidaf_forward.27} parent=31 // pred_check_branch
        %170 = sbr.rel (%p168) target = $region36
      $region35: #{bidaf_forward.27} parent=31 // pred_region
        %vm171 = vcmask 254976
        %172 = vst.msk [vmem:[#allocation2] sm:$0x3] %vm171, 0.0
        %173 = vst.msk [vmem:[#allocation3] sm:$0x3] %vm171, 0.0
      $region36: #{bidaf_forward.27} parent=31 // pred_fallthru
        _
      %v174 = vld [vmem:[#allocation2] sm:$0x3]
      %v175 = vld [vmem:[#allocation3] sm:$0x3]
      %v176 = vld [vmem:[%s161] sm:$0x3]
      %v177 = vpack.c.bf16 %v174, %v174
      %v178 = vld [vmem:[%s2] sm:$0xff]
      %v179 = vld [vmem:[%s2 + $0x8] sm:$0xff]
      %v180 = vld [vmem:[%s2 + $0x10] sm:$0xff]
      %v181 = vld [vmem:[%s2 + $0x18] sm:$0xff]
      %v182 = vpack.c.bf16 %v179, %v178
      %v183 = vpack.c.bf16 %v181, %v180
      %vm184 = vcmask 261120
      %v186 = vsel %vm184, %v177, 0
      %188 = vmatpush.bf16.msra.mxu0 0
      %189 = vmatpush.bf16.msra.mxu0 0
      %190 = vmatpush.bf16.msra.mxu0 0
      %191 = vmatpush.bf16.msra.mxu0 0
      %192 = vmatpush.bf16.msra.mxu0 0
      %193 = vmatpush.bf16.msra.mxu0 0
      %194 = vmatpush.bf16.msra.mxu0 %v183
      %195 = vmatpush.bf16.msra.mxu0 %v182
      %196 = vmatmul.bf16.gmra.mxu0 %v186
      %v197 = vpop.f32.mrf.mxu0
      %v198 = vadd.f32 0.0, %v197
      %v199 = vpop.f32.mrf.mxu0
      %200 = vdwg.mxu0
      %v201 = vadd.f32 %v176, %v198
      %v202 = vxor.u32 %v201, 2147483648
      %v203 = vmul.f32 %v202, 1.442695
      %v204 = vpow.pop %v203
      %v205 = vadd.f32 %v204, 1.0
      %v206 = vrcp.pop %v205
      %v207 = vmul.f32 %v205, %v206
      %v208 = vsub.f32 1.0, %v207
      %v209 = vmul.f32 %v206, %v208
      %v210 = vadd.f32 %v206, %v209
      %vm211 = vweird.f32 %v205
      %vm212 = vweird.f32 %v206
      %vm213 = vmor %vm211, %vm212
      %v214 = vsel %vm213, %v206, %v210
      %v215 = vand.u32 2147483647, %v205
      %vm216 = vcmp.eq.f32.partialorder %v215, 8.507059e+37
      %v217 = vand.u32 %v205, 2147483648
      %v218 = vor.u32 1.1754944e-38, %v217
      %v219 = vsel %vm216, %v218, %v214
      %v220 = vmul.f32 1.0, %v219
      %v221 = vtanh.pop %v201
      %223 = vrot.lane.b32.xlu0 %v175, 32
      %v224 = vpop.permute.xlu0 %223
      %v226 = vmul.f32 %v220, %v224
      %228 = vrot.lane.b32.xlu0 %v221, 64
      %v229 = vpop.permute.xlu0 %228
      %v231 = vmul.f32 %v220, %v229
      %233 = vrot.lane.b32.xlu0 %v231, 32
      %v234 = vpop.permute.xlu0 %233
      %v236 = vadd.f32 %v226, %v234
      %v237 = vtanh.pop %v236
      %239 = vrot.lane.b32.xlu0 %v237, 64
      %v240 = vpop.permute.xlu0 %239
      %v242 = vmul.f32 %v220, %v240
      %v243 = vld [vmem:[%s0] sm:$0x3]
      %v244 = vstv %s14
      %vm245 = vcmp.lt.s32.totalorder %v244, %v243
      %v246 = vsel %vm245, 1, 0
      %v247 = vcvt.s32.f32 %v246
      %249 = vset.pattern.permute.xlu0 0
      %250 = vperm.xlu0 %249, %v247
      %v251 = vpop.permute.xlu0 %250
      %v253 = vmul.f32 %v251, %v242
      %v254 = vsub.f32 1.0, %v247
      %256 = vset.pattern.permute.xlu0 0
      %257 = vperm.xlu0 %256, %v254
      %v258 = vpop.permute.xlu0 %257
      %v260 = vmul.f32 %v258, %v174
      %262 = vrot.lane.b32.xlu0 %v260, 96
      %v263 = vpop.permute.xlu0 %262
      %v265 = vadd.f32 %v253, %v263
      %267 = vrot.lane.b32.xlu0 %v265, 32
      %v268 = vpop.permute.xlu0 %267
      %vm270 = vcmask 254976
      %271 = vst.msk [vmem:[#allocation2] sm:$0x3] %vm270, %v268
      %v272 = vmul.f32 %v251, %v236
      %v273 = vmul.f32 %v258, %v175
      %275 = vrot.lane.b32.xlu0 %v273, 32
      %v276 = vpop.permute.xlu0 %275
      %v278 = vadd.f32 %v272, %v276
      %280 = vrot.lane.b32.xlu0 %v278, 96
      %v281 = vpop.permute.xlu0 %280
      %283 = vst.msk [vmem:[#allocation3] sm:$0x3] %vm270, %v281
      %285 = vrot.lane.b32.xlu0 %v253, 32
      %v286 = vpop.permute.xlu0 %285
      %288 = vst.msk [vmem:[%s165] sm:$0x3] %vm270, %v286
      %p289 = scmp.lt.s32.totalorder %s14, 31
      %s290 = scalar_select %p289, %s14, 31
      %s291 = smul.addr %s290, 2
      %s292 = scalar_lea.vmem %s3, %s291
      // Predicated region
      $region37: #{bidaf_forward.27} parent=31 // pred_check
        %p293 = pneg %p100
      $region38: #{bidaf_forward.27} parent=31 // pred_check_branch
        %295 = sbr.rel (%p293) target = $region40
      $region39: #{bidaf_forward.27} parent=31 // pred_region
        _
      $region40: #{bidaf_forward.27} parent=31 // pred_fallthru
        _
    $region32: #{bidaf_forward.27} parent=5 // pred_fallthru
      _
    %p296 = scmp.le.s32.totalorder 2, %s9
    // Predicated region
    $region41: #{bidaf_forward.27} parent=5 // pred_check
      %p297 = pneg %p296
    $region42: #{bidaf_forward.27} parent=5 // pred_check_branch
      %299 = sbr.rel (%p297) target = $region44
    $region43: #{bidaf_forward.27} parent=5 // pred_region
      %s300 = ssub.s32 %s9, 2
      // Predicated region
      $region45: #{bidaf_forward.27} parent=43 // pred_check
        %p301 = pneg %p106
      $region46: #{bidaf_forward.27} parent=43 // pred_check_branch
        %303 = sbr.rel (%p301) target = $region48
      $region47: #{bidaf_forward.27} parent=43 // pred_region
        %p304 = scmp.lt.s32.totalorder %s15, 31
        %s305 = scalar_select %p304, %s15, 31
        %s306 = smul.addr %s305, 2
        %s307 = scalar_lea.vmem %s3, %s306
      $region48: #{bidaf_forward.27} parent=43 // pred_fallthru
        _
    $region44: #{bidaf_forward.27} parent=5 // pred_fallthru
      _
  $region6: #{bidaf_forward.27} parent=0 // loop_footer
    %s13 = sadd.s32 1, %s9
  $region7: #{bidaf_forward.27} parent=0 // loop_footer_branch
    %8 = sbr.rel target = $region3
  $region8: #{bidaf_forward.27} parent=0 // loop_exit
    _

// kernel: bidaf_forward.24
$region0: #{bidaf_forward.24}
  #allocation0 [shape = 'u32[]', space=smem, size = 0x4, offset = 0x4, fixed_abs, tag = 'smem constant byte address 0x4 - core index']
  #allocation1 [shape = 'u32[72,128]{1,0:T(1,128)}', space=vmem, size = 0x9000, scoped, tag = 'internal scratch']
  %s0 = inlined_call_operand.vmem [shape: f32[64,48], index: 0, kind: input, shape index: {}]
  %s1 = inlined_call_operand.vmem [shape: f32[48,32], index: 1, kind: input, shape index: {}]
  %s2 = inlined_call_operand.vmem [shape: f32[32,64], index: 2, kind: input, shape index: {}]
  %s3 = inlined_call_operand.vmem [shape: f32[1,64], index: 3, kind: input, shape index: {}]
  %s4 = inlined_call_operand.vmem [shape: f32[32,64], index: 4, kind: input, shape index: {}]
  %s5 = inlined_call_operand.vmem [shape: f32[1,64], index: 5, kind: input, shape index: {}]
  %s6 = inlined_call_operand.vmem [shape: f32[64,32], index: 6, kind: output, shape index: {}]
  %s7 = sld [smem:[#allocation0]]
  $region34: #{bidaf_forward.24} parent=0
    _
  %s9 = ssub.s32 1, %s7
  %s10 = scalar_select 0, %s9, %s7
  // Predicated region
  $region2: #{bidaf_forward.24} parent=0 // pred_check
    _
  $region3: #{bidaf_forward.24} parent=0 // pred_check_branch
    %12 = sbr.rel (0) target = $region5
  $region4: #{bidaf_forward.24} parent=0 // pred_region
    _
  $region5: #{bidaf_forward.24} parent=0 // pred_fallthru
    _
  // Predicated region
  $region6: #{bidaf_forward.24} parent=0 // pred_check
    _
  $region7: #{bidaf_forward.24} parent=0 // pred_check_branch
    %14 = sbr.rel (0) target = $region9
  $region8: #{bidaf_forward.24} parent=0 // pred_region
    _
  $region9: #{bidaf_forward.24} parent=0 // pred_fallthru
    _
  // Predicated region
  $region10: #{bidaf_forward.24} parent=0 // pred_check
    _
  $region11: #{bidaf_forward.24} parent=0 // pred_check_branch
    %16 = sbr.rel (0) target = $region13
  $region12: #{bidaf_forward.24} parent=0 // pred_region
    _
  $region13: #{bidaf_forward.24} parent=0 // pred_fallthru
    _
  // Predicated region
  $region14: #{bidaf_forward.24} parent=0 // pred_check
    _
  $region15: #{bidaf_forward.24} parent=0 // pred_check_branch
    %18 = sbr.rel (0) target = $region17
  $region16: #{bidaf_forward.24} parent=0 // pred_region
    _
  $region17: #{bidaf_forward.24} parent=0 // pred_fallthru
    _
  // Predicated region
  $region18: #{bidaf_forward.24} parent=0 // pred_check
    _
  $region19: #{bidaf_forward.24} parent=0 // pred_check_branch
    %20 = sbr.rel (0) target = $region21
  $region20: #{bidaf_forward.24} parent=0 // pred_region
    _
  $region21: #{bidaf_forward.24} parent=0 // pred_fallthru
    _
  // Predicated region
  $region22: #{bidaf_forward.24} parent=0 // pred_check
    _
  $region23: #{bidaf_forward.24} parent=0 // pred_check_branch
    %22 = sbr.rel (0) target = $region25
  $region24: #{bidaf_forward.24} parent=0 // pred_region
    _
  $region25: #{bidaf_forward.24} parent=0 // pred_fallthru
    _
  %v24 = vld [vmem:[%s0] sm:$0xff]
  %v25 = vld [vmem:[%s0 + $0x8] sm:$0xff]
  %v26 = vld [vmem:[%s0 + $0x10] sm:$0xff]
  %v27 = vld [vmem:[%s0 + $0x18] sm:$0xff]
  %v28 = vld [vmem:[%s0 + $0x20] sm:$0xff]
  %v29 = vld [vmem:[%s0 + $0x28] sm:$0xff]
  %v30 = vld [vmem:[%s0 + $0x30] sm:$0xff]
  %v31 = vld [vmem:[%s0 + $0x38] sm:$0xff]
  %v32 = vpack.c.bf16 %v25, %v24
  %v33 = vpack.c.bf16 %v27, %v26
  %v34 = vpack.c.bf16 %v29, %v28
  %v35 = vpack.c.bf16 %v31, %v30
  %v36 = vld [vmem:[%s1] sm:$0xff]
  %v37 = vld [vmem:[%s1 + $0x8] sm:$0xff]
  %v38 = vld [vmem:[%s1 + $0x10] sm:$0xff]
  %v39 = vld [vmem:[%s1 + $0x18] sm:$0xff]
  %v40 = vld [vmem:[%s1 + $0x20] sm:$0xff]
  %v41 = vld [vmem:[%s1 + $0x28] sm:$0xff]
  %v42 = vpack.c.bf16 %v37, %v36
  %v43 = vpack.c.bf16 %v39, %v38
  %v44 = vpack.c.bf16 %v41, %v40
  %vm45 = vcmask 392192
  %v47 = vsel %vm45, %v32, 0
  %v50 = vsel %vm45, %v33, 0
  %v53 = vsel %vm45, %v34, 0
  %v56 = vsel %vm45, %v35, 0
  %58 = vmatpush.bf16.msra.mxu0 0
  %59 = vmatpush.bf16.msra.mxu0 0
  %60 = vmatpush.bf16.msra.mxu0 0
  %61 = vmatpush.bf16.msra.mxu0 0
  %62 = vmatpush.bf16.msra.mxu0 0
  %63 = vmatpush.bf16.msra.mxu0 %v44
  %64 = vmatpush.bf16.msra.mxu0 %v43
  %65 = vmatpush.bf16.msra.mxu0 %v42
  %66 = vmatmul.bf16.gmra.mxu0 %v47
  %v67 = vpop.f32.mrf.mxu0
  %v68 = vadd.f32 0.0, %v67
  %v69 = vpop.f32.mrf.mxu0
  %v70 = vadd.f32 0.0, %v69
  %71 = vmatmul.bf16.gmra.mxu0 %v50
  %v72 = vpop.f32.mrf.mxu0
  %v73 = vadd.f32 0.0, %v72
  %v74 = vpop.f32.mrf.mxu0
  %v75 = vadd.f32 0.0, %v74
  %76 = vmatmul.bf16.gmra.mxu0 %v53
  %v77 = vpop.f32.mrf.mxu0
  %v78 = vadd.f32 0.0, %v77
  %v79 = vpop.f32.mrf.mxu0
  %v80 = vadd.f32 0.0, %v79
  %81 = vmatmul.bf16.gmra.mxu0 %v56
  %v82 = vpop.f32.mrf.mxu0
  %v83 = vadd.f32 0.0, %v82
  %v84 = vpop.f32.mrf.mxu0
  %v85 = vadd.f32 0.0, %v84
  %86 = vdwg.mxu0
  %v87 = vpack.c.bf16 %v70, %v68
  %v88 = vpack.c.bf16 %v75, %v73
  %v89 = vpack.c.bf16 %v80, %v78
  %v90 = vpack.c.bf16 %v85, %v83
  %v91 = vld [vmem:[%s2] sm:$0xff]
  %v92 = vld [vmem:[%s2 + $0x8] sm:$0xff]
  %v93 = vld [vmem:[%s2 + $0x10] sm:$0xff]
  %v94 = vld [vmem:[%s2 + $0x18] sm:$0xff]
  %v95 = vpack.c.bf16 %v92, %v91
  %v96 = vpack.c.bf16 %v94, %v93
  %v97 = vld [vmem:[%s3] sm:$0x1]
  %v99 = vperm.slane %v97, 0
  %vm101 = vcmask 261120
  %v103 = vsel %vm101, %v87, 0
  %v106 = vsel %vm101, %v88, 0
  %v109 = vsel %vm101, %v89, 0
  %v112 = vsel %vm101, %v90, 0
  %114 = vmatpush.bf16.msra.mxu0 0
  %115 = vmatpush.bf16.msra.mxu0 0
  %116 = vmatpush.bf16.msra.mxu0 0
  %117 = vmatpush.bf16.msra.mxu0 0
  %118 = vmatpush.bf16.msra.mxu0 0
  %119 = vmatpush.bf16.msra.mxu0 0
  %120 = vmatpush.bf16.msra.mxu0 %v96
  %121 = vmatpush.bf16.msra.mxu0 %v95
  %122 = vmatmul.bf16.gmra.mxu0 %v103
  %v123 = vpop.f32.mrf.mxu0
  %v124 = vadd.f32 %v99, %v123
  %v125 = vpop.f32.mrf.mxu0
  %v126 = vadd.f32 %v99, %v125
  %127 = vmatmul.bf16.gmra.mxu0 %v106
  %v128 = vpop.f32.mrf.mxu0
  %v129 = vadd.f32 %v99, %v128
  %v130 = vpop.f32.mrf.mxu0
  %v131 = vadd.f32 %v99, %v130
  %132 = vmatmul.bf16.gmra.mxu0 %v109
  %v133 = vpop.f32.mrf.mxu0
  %v134 = vadd.f32 %v99, %v133
  %v135 = vpop.f32.mrf.mxu0
  %v136 = vadd.f32 %v99, %v135
  %137 = vmatmul.bf16.gmra.mxu0 %v112
  %v138 = vpop.f32.mrf.mxu0
  %v139 = vadd.f32 %v99, %v138
  %v140 = vpop.f32.mrf.mxu0
  %v141 = vadd.f32 %v99, %v140
  %142 = vdwg.mxu0
  %v143 = vmax.f32 %v124, 0.0
  %v144 = vmax.f32 %v126, 0.0
  %v145 = vmax.f32 %v129, 0.0
  %v146 = vmax.f32 %v131, 0.0
  %v147 = vmax.f32 %v134, 0.0
  %v148 = vmax.f32 %v136, 0.0
  %v149 = vmax.f32 %v139, 0.0
  %v150 = vmax.f32 %v141, 0.0
  %v151 = vxor.u32 %v124, 2147483648
  %v152 = vxor.u32 %v126, 2147483648
  %v153 = vxor.u32 %v129, 2147483648
  %v154 = vxor.u32 %v131, 2147483648
  %v155 = vxor.u32 %v134, 2147483648
  %v156 = vxor.u32 %v136, 2147483648
  %v157 = vxor.u32 %v139, 2147483648
  %v158 = vxor.u32 %v141, 2147483648
  %v159 = vmul.f32 %v151, 1.442695
  %v160 = vpow.pop %v159
  %v161 = vmul.f32 %v152, 1.442695
  %v162 = vpow.pop %v161
  %v163 = vmul.f32 %v153, 1.442695
  %v164 = vpow.pop %v163
  %v165 = vmul.f32 %v154, 1.442695
  %v166 = vpow.pop %v165
  %v167 = vmul.f32 %v155, 1.442695
  %v168 = vpow.pop %v167
  %v169 = vmul.f32 %v156, 1.442695
  %v170 = vpow.pop %v169
  %v171 = vmul.f32 %v157, 1.442695
  %v172 = vpow.pop %v171
  %v173 = vmul.f32 %v158, 1.442695
  %v174 = vpow.pop %v173
  %v175 = vadd.f32 %v160, 1.0
  %v176 = vadd.f32 %v162, 1.0
  %v177 = vadd.f32 %v164, 1.0
  %v178 = vadd.f32 %v166, 1.0
  %v179 = vadd.f32 %v168, 1.0
  %v180 = vadd.f32 %v170, 1.0
  %v181 = vadd.f32 %v172, 1.0
  %v182 = vadd.f32 %v174, 1.0
  %v183 = vrcp.pop %v175
  %v184 = vmul.f32 %v175, %v183
  %v185 = vsub.f32 1.0, %v184
  %v186 = vmul.f32 %v183, %v185
  %v187 = vadd.f32 %v183, %v186
  %vm188 = vweird.f32 %v175
  %vm189 = vweird.f32 %v183
  %vm190 = vmor %vm188, %vm189
  %v191 = vsel %vm190, %v183, %v187
  %v192 = vand.u32 2147483647, %v175
  %vm193 = vcmp.eq.f32.partialorder %v192, 8.507059e+37
  %v194 = vand.u32 %v175, 2147483648
  %v195 = vor.u32 1.1754944e-38, %v194
  %v196 = vsel %vm193, %v195, %v191
  %v197 = vmul.f32 1.0, %v196
  %v198 = vrcp.pop %v176
  %v199 = vmul.f32 %v176, %v198
  %v200 = vsub.f32 1.0, %v199
  %v201 = vmul.f32 %v198, %v200
  %v202 = vadd.f32 %v198, %v201
  %vm203 = vweird.f32 %v176
  %vm204 = vweird.f32 %v198
  %vm205 = vmor %vm203, %vm204
  %v206 = vsel %vm205, %v198, %v202
  %v207 = vand.u32 2147483647, %v176
  %vm208 = vcmp.eq.f32.partialorder %v207, 8.507059e+37
  %v209 = vand.u32 %v176, 2147483648
  %v210 = vor.u32 1.1754944e-38, %v209
  %v211 = vsel %vm208, %v210, %v206
  %v212 = vmul.f32 1.0, %v211
  %v213 = vrcp.pop %v177
  %v214 = vmul.f32 %v177, %v213
  %v215 = vsub.f32 1.0, %v214
  %v216 = vmul.f32 %v213, %v215
  %v217 = vadd.f32 %v213, %v216
  %vm218 = vweird.f32 %v177
  %vm219 = vweird.f32 %v213
  %vm220 = vmor %vm218, %vm219
  %v221 = vsel %vm220, %v213, %v217
  %v222 = vand.u32 2147483647, %v177
  %vm223 = vcmp.eq.f32.partialorder %v222, 8.507059e+37
  %v224 = vand.u32 %v177, 2147483648
  %v225 = vor.u32 1.1754944e-38, %v224
  %v226 = vsel %vm223, %v225, %v221
  %v227 = vmul.f32 1.0, %v226
  %v228 = vrcp.pop %v178
  %v229 = vmul.f32 %v178, %v228
  %v230 = vsub.f32 1.0, %v229
  %v231 = vmul.f32 %v228, %v230
  %v232 = vadd.f32 %v228, %v231
  %vm233 = vweird.f32 %v178
  %vm234 = vweird.f32 %v228
  %vm235 = vmor %vm233, %vm234
  %v236 = vsel %vm235, %v228, %v232
  %v237 = vand.u32 2147483647, %v178
  %vm238 = vcmp.eq.f32.partialorder %v237, 8.507059e+37
  %v239 = vand.u32 %v178, 2147483648
  %v240 = vor.u32 1.1754944e-38, %v239
  %v241 = vsel %vm238, %v240, %v236
  %v242 = vmul.f32 1.0, %v241
  %v243 = vrcp.pop %v179
  %v244 = vmul.f32 %v179, %v243
  %v245 = vsub.f32 1.0, %v244
  %v246 = vmul.f32 %v243, %v245
  %v247 = vadd.f32 %v243, %v246
  %vm248 = vweird.f32 %v179
  %vm249 = vweird.f32 %v243
  %vm250 = vmor %vm248, %vm249
  %v251 = vsel %vm250, %v243, %v247
  %v252 = vand.u32 2147483647, %v179
  %vm253 = vcmp.eq.f32.partialorder %v252, 8.507059e+37
  %v254 = vand.u32 %v179, 2147483648
  %v255 = vor.u32 1.1754944e-38, %v254
  %v256 = vsel %vm253, %v255, %v251
  %v257 = vmul.f32 1.0, %v256
  %v258 = vrcp.pop %v180
  %v259 = vmul.f32 %v180, %v258
  %v260 = vsub.f32 1.0, %v259
  %v261 = vmul.f32 %v258, %v260
  %v262 = vadd.f32 %v258, %v261
  %vm263 = vweird.f32 %v180
  %vm264 = vweird.f32 %v258
  %vm265 = vmor %vm263, %vm264
  %v266 = vsel %vm265, %v258, %v262
  %v267 = vand.u32 2147483647, %v180
  %vm268 = vcmp.eq.f32.partialorder %v267, 8.507059e+37
  %v269 = vand.u32 %v180, 2147483648
  %v270 = vor.u32 1.1754944e-38, %v269
  %v271 = vsel %vm268, %v270, %v266
  %v272 = vmul.f32 1.0, %v271
  %v273 = vrcp.pop %v181
  %v274 = vmul.f32 %v181, %v273
  %v275 = vsub.f32 1.0, %v274
  %v276 = vmul.f32 %v273, %v275
  %v277 = vadd.f32 %v273, %v276
  %vm278 = vweird.f32 %v181
  %vm279 = vweird.f32 %v273
  %vm280 = vmor %vm278, %vm279
  %v281 = vsel %vm280, %v273, %v277
  %v282 = vand.u32 2147483647, %v181
  %vm283 = vcmp.eq.f32.partialorder %v282, 8.507059e+37
  %v284 = vand.u32 %v181, 2147483648
  %v285 = vor.u32 1.1754944e-38, %v284
  %v286 = vsel %vm283, %v285, %v281
  %v287 = vmul.f32 1.0, %v286
  %v288 = vrcp.pop %v182
  %v289 = vmul.f32 %v182, %v288
  %v290 = vsub.f32 1.0, %v289
  %v291 = vmul.f32 %v288, %v290
  %v292 = vadd.f32 %v288, %v291
  %vm293 = vweird.f32 %v182
  %vm294 = vweird.f32 %v288
  %vm295 = vmor %vm293, %vm294
  %v296 = vsel %vm295, %v288, %v292
  %v297 = vand.u32 2147483647, %v182
  %vm298 = vcmp.eq.f32.partialorder %v297, 8.507059e+37
  %v299 = vand.u32 %v182, 2147483648
  %v300 = vor.u32 1.1754944e-38, %v299
  %v301 = vsel %vm298, %v300, %v296
  %v302 = vmul.f32 1.0, %v301
  %311 = vrot.lane.b32.xlu0 %v143, 32
  %v312 = vpop.permute.xlu0 %311
  %313 = vrot.lane.b32.xlu0 %v144, 32
  %v314 = vpop.permute.xlu0 %313
  %315 = vrot.lane.b32.xlu0 %v145, 32
  %v316 = vpop.permute.xlu0 %315
  %317 = vrot.lane.b32.xlu0 %v146, 32
  %v318 = vpop.permute.xlu0 %317
  %319 = vrot.lane.b32.xlu0 %v147, 32
  %v320 = vpop.permute.xlu0 %319
  %321 = vrot.lane.b32.xlu0 %v148, 32
  %v322 = vpop.permute.xlu0 %321
  %323 = vrot.lane.b32.xlu0 %v149, 32
  %v324 = vpop.permute.xlu0 %323
  %325 = vrot.lane.b32.xlu0 %v150, 32
  %v326 = vpop.permute.xlu0 %325
  %v335 = vmul.f32 %v197, %v312
  %v336 = vmul.f32 %v212, %v314
  %v337 = vmul.f32 %v227, %v316
  %v338 = vmul.f32 %v242, %v318
  %v339 = vmul.f32 %v257, %v320
  %v340 = vmul.f32 %v272, %v322
  %v341 = vmul.f32 %v287, %v324
  %v342 = vmul.f32 %v302, %v326
  %v343 = vsub.f32 1.0, %v197
  %v344 = vsub.f32 1.0, %v212
  %v345 = vsub.f32 1.0, %v227
  %v346 = vsub.f32 1.0, %v242
  %v347 = vsub.f32 1.0, %v257
  %v348 = vsub.f32 1.0, %v272
  %v349 = vsub.f32 1.0, %v287
  %v350 = vsub.f32 1.0, %v302
  %359 = vrot.lane.b32.xlu0 %v68, 32
  %v360 = vpop.permute.xlu0 %359
  %361 = vrot.lane.b32.xlu0 %v70, 32
  %v362 = vpop.permute.xlu0 %361
  %363 = vrot.lane.b32.xlu0 %v73, 32
  %v364 = vpop.permute.xlu0 %363
  %365 = vrot.lane.b32.xlu0 %v75, 32
  %v366 = vpop.permute.xlu0 %365
  %367 = vrot.lane.b32.xlu0 %v78, 32
  %v368 = vpop.permute.xlu0 %367
  %369 = vrot.lane.b32.xlu0 %v80, 32
  %v370 = vpop.permute.xlu0 %369
  %371 = vrot.lane.b32.xlu0 %v83, 32
  %v372 = vpop.permute.xlu0 %371
  %373 = vrot.lane.b32.xlu0 %v85, 32
  %v374 = vpop.permute.xlu0 %373
  %v383 = vmul.f32 %v343, %v360
  %v384 = vmul.f32 %v344, %v362
  %v385 = vmul.f32 %v345, %v364
  %v386 = vmul.f32 %v346, %v366
  %v387 = vmul.f32 %v347, %v368
  %v388 = vmul.f32 %v348, %v370
  %v389 = vmul.f32 %v349, %v372
  %v390 = vmul.f32 %v350, %v374
  %v391 = vadd.f32 %v335, %v383
  %v392 = vadd.f32 %v336, %v384
  %v393 = vadd.f32 %v337, %v385
  %v394 = vadd.f32 %v338, %v386
  %v395 = vadd.f32 %v339, %v387
  %v396 = vadd.f32 %v340, %v388
  %v397 = vadd.f32 %v341, %v389
  %v398 = vadd.f32 %v342, %v390
  %v399 = vpack.c.bf16 %v392, %v391
  %v400 = vpack.c.bf16 %v394, %v393
  %v401 = vpack.c.bf16 %v396, %v395
  %v402 = vpack.c.bf16 %v398, %v397
  %v403 = vld [vmem:[%s4] sm:$0xff]
  %v404 = vld [vmem:[%s4 + $0x8] sm:$0xff]
  %v405 = vld [vmem:[%s4 + $0x10] sm:$0xff]
  %v406 = vld [vmem:[%s4 + $0x18] sm:$0xff]
  %v407 = vpack.c.bf16 %v404, %v403
  %v408 = vpack.c.bf16 %v406, %v405
  %v409 = vld [vmem:[%s5] sm:$0x1]
  %v411 = vperm.slane %v409, 0
  %417 = vrot.lane.b32.xlu0 %v399, 96
  %v418 = vpop.permute.xlu0 %417
  %419 = vrot.lane.b32.xlu0 %v400, 96
  %v420 = vpop.permute.xlu0 %419
  %421 = vrot.lane.b32.xlu0 %v401, 96
  %v422 = vpop.permute.xlu0 %421
  %423 = vrot.lane.b32.xlu0 %v402, 96
  %v424 = vpop.permute.xlu0 %423
  %v426 = vsel %vm101, %v418, 0
  %v429 = vsel %vm101, %v420, 0
  %v432 = vsel %vm101, %v422, 0
  %v435 = vsel %vm101, %v424, 0
  %437 = vmatpush.bf16.msra.mxu0 0
  %438 = vmatpush.bf16.msra.mxu0 0
  %439 = vmatpush.bf16.msra.mxu0 0
  %440 = vmatpush.bf16.msra.mxu0 0
  %441 = vmatpush.bf16.msra.mxu0 0
  %442 = vmatpush.bf16.msra.mxu0 0
  %443 = vmatpush.bf16.msra.mxu0 %v408
  %444 = vmatpush.bf16.msra.mxu0 %v407
  %445 = vmatmul.bf16.gmra.mxu0 %v426
  %v446 = vpop.f32.mrf.mxu0
  %v447 = vadd.f32 %v411, %v446
  %v448 = vpop.f32.mrf.mxu0
  %v449 = vadd.f32 %v411, %v448
  %450 = vmatmul.bf16.gmra.mxu0 %v429
  %v451 = vpop.f32.mrf.mxu0
  %v452 = vadd.f32 %v411, %v451
  %v453 = vpop.f32.mrf.mxu0
  %v454 = vadd.f32 %v411, %v453
  %455 = vmatmul.bf16.gmra.mxu0 %v432
  %v456 = vpop.f32.mrf.mxu0
  %v457 = vadd.f32 %v411, %v456
  %v458 = vpop.f32.mrf.mxu0
  %v459 = vadd.f32 %v411, %v458
  %460 = vmatmul.bf16.gmra.mxu0 %v435
  %v461 = vpop.f32.mrf.mxu0
  %v462 = vadd.f32 %v411, %v461
  %v463 = vpop.f32.mrf.mxu0
  %v464 = vadd.f32 %v411, %v463
  %465 = vdwg.mxu0
  %v466 = vmax.f32 %v447, 0.0
  %v467 = vmax.f32 %v449, 0.0
  %v468 = vmax.f32 %v452, 0.0
  %v469 = vmax.f32 %v454, 0.0
  %v470 = vmax.f32 %v457, 0.0
  %v471 = vmax.f32 %v459, 0.0
  %v472 = vmax.f32 %v462, 0.0
  %v473 = vmax.f32 %v464, 0.0
  %v474 = vxor.u32 %v447, 2147483648
  %v475 = vxor.u32 %v449, 2147483648
  %v476 = vxor.u32 %v452, 2147483648
  %v477 = vxor.u32 %v454, 2147483648
  %v478 = vxor.u32 %v457, 2147483648
  %v479 = vxor.u32 %v459, 2147483648
  %v480 = vxor.u32 %v462, 2147483648
  %v481 = vxor.u32 %v464, 2147483648
  %v482 = vmul.f32 %v474, 1.442695
  %v483 = vpow.pop %v482
  %v484 = vmul.f32 %v475, 1.442695
  %v485 = vpow.pop %v484
  %v486 = vmul.f32 %v476, 1.442695
  %v487 = vpow.pop %v486
  %v488 = vmul.f32 %v477, 1.442695
  %v489 = vpow.pop %v488
  %v490 = vmul.f32 %v478, 1.442695
  %v491 = vpow.pop %v490
  %v492 = vmul.f32 %v479, 1.442695
  %v493 = vpow.pop %v492
  %v494 = vmul.f32 %v480, 1.442695
  %v495 = vpow.pop %v494
  %v496 = vmul.f32 %v481, 1.442695
  %v497 = vpow.pop %v496
  %v498 = vadd.f32 %v483, 1.0
  %v499 = vadd.f32 %v485, 1.0
  %v500 = vadd.f32 %v487, 1.0
  %v501 = vadd.f32 %v489, 1.0
  %v502 = vadd.f32 %v491, 1.0
  %v503 = vadd.f32 %v493, 1.0
  %v504 = vadd.f32 %v495, 1.0
  %v505 = vadd.f32 %v497, 1.0
  %v506 = vrcp.pop %v498
  %v507 = vmul.f32 %v498, %v506
  %v508 = vsub.f32 1.0, %v507
  %v509 = vmul.f32 %v506, %v508
  %v510 = vadd.f32 %v506, %v509
  %vm511 = vweird.f32 %v498
  %vm512 = vweird.f32 %v506
  %vm513 = vmor %vm511, %vm512
  %v514 = vsel %vm513, %v506, %v510
  %v515 = vand.u32 2147483647, %v498
  %vm516 = vcmp.eq.f32.partialorder %v515, 8.507059e+37
  %v517 = vand.u32 %v498, 2147483648
  %v518 = vor.u32 1.1754944e-38, %v517
  %v519 = vsel %vm516, %v518, %v514
  %v520 = vmul.f32 1.0, %v519
  %v521 = vrcp.pop %v499
  %v522 = vmul.f32 %v499, %v521
  %v523 = vsub.f32 1.0, %v522
  %v524 = vmul.f32 %v521, %v523
  %v525 = vadd.f32 %v521, %v524
  %vm526 = vweird.f32 %v499
  %vm527 = vweird.f32 %v521
  %vm528 = vmor %vm526, %vm527
  %v529 = vsel %vm528, %v521, %v525
  %v530 = vand.u32 2147483647, %v499
  %vm531 = vcmp.eq.f32.partialorder %v530, 8.507059e+37
  %v532 = vand.u32 %v499, 2147483648
  %v533 = vor.u32 1.1754944e-38, %v532
  %v534 = vsel %vm531, %v533, %v529
  %v535 = vmul.f32 1.0, %v534
  %v536 = vrcp.pop %v500
  %v537 = vmul.f32 %v500, %v536
  %v538 = vsub.f32 1.0, %v537
  %v539 = vmul.f32 %v536, %v538
  %v540 = vadd.f32 %v536, %v539
  %vm541 = vweird.f32 %v500
  %vm542 = vweird.f32 %v536
  %vm543 = vmor %vm541, %vm542
  %v544 = vsel %vm543, %v536, %v540
  %v545 = vand.u32 2147483647, %v500
  %vm546 = vcmp.eq.f32.partialorder %v545, 8.507059e+37
  %v547 = vand.u32 %v500, 2147483648
  %v548 = vor.u32 1.1754944e-38, %v547
  %v549 = vsel %vm546, %v548, %v544
  %v550 = vmul.f32 1.0, %v549
  %v551 = vrcp.pop %v501
  %v552 = vmul.f32 %v501, %v551
  %v553 = vsub.f32 1.0, %v552
  %v554 = vmul.f32 %v551, %v553
  %v555 = vadd.f32 %v551, %v554
  %vm556 = vweird.f32 %v501
  %vm557 = vweird.f32 %v551
  %vm558 = vmor %vm556, %vm557
  %v559 = vsel %vm558, %v551, %v555
  %v560 = vand.u32 2147483647, %v501
  %vm561 = vcmp.eq.f32.partialorder %v560, 8.507059e+37
  %v562 = vand.u32 %v501, 2147483648
  %v563 = vor.u32 1.1754944e-38, %v562
  %v564 = vsel %vm561, %v563, %v559
  %v565 = vmul.f32 1.0, %v564
  %v566 = vrcp.pop %v502
  %v567 = vmul.f32 %v502, %v566
  %v568 = vsub.f32 1.0, %v567
  %v569 = vmul.f32 %v566, %v568
  %v570 = vadd.f32 %v566, %v569
  %vm571 = vweird.f32 %v502
  %vm572 = vweird.f32 %v566
  %vm573 = vmor %vm571, %vm572
  %v574 = vsel %vm573, %v566, %v570
  %v575 = vand.u32 2147483647, %v502
  %vm576 = vcmp.eq.f32.partialorder %v575, 8.507059e+37
  %v577 = vand.u32 %v502, 2147483648
  %v578 = vor.u32 1.1754944e-38, %v577
  %v579 = vsel %vm576, %v578, %v574
  %v580 = vmul.f32 1.0, %v579
  %v581 = vrcp.pop %v503
  %v582 = vmul.f32 %v503, %v581
  %v583 = vsub.f32 1.0, %v582
  %v584 = vmul.f32 %v581, %v583
  %v585 = vadd.f32 %v581, %v584
  %vm586 = vweird.f32 %v503
  %vm587 = vweird.f32 %v581
  %vm588 = vmor %vm586, %vm587
  %v589 = vsel %vm588, %v581, %v585
  %v590 = vand.u32 2147483647, %v503
  %vm591 = vcmp.eq.f32.partialorder %v590, 8.507059e+37
  %v592 = vand.u32 %v503, 2147483648
  %v593 = vor.u32 1.1754944e-38, %v592
  %v594 = vsel %vm591, %v593, %v589
  %v595 = vmul.f32 1.0, %v594
  %v596 = vrcp.pop %v504
  %v597 = vmul.f32 %v504, %v596
  %v598 = vsub.f32 1.0, %v597
  %v599 = vmul.f32 %v596, %v598
  %v600 = vadd.f32 %v596, %v599
  %vm601 = vweird.f32 %v504
  %vm602 = vweird.f32 %v596
  %vm603 = vmor %vm601, %vm602
  %v604 = vsel %vm603, %v596, %v600
  %v605 = vand.u32 2147483647, %v504
  %vm606 = vcmp.eq.f32.partialorder %v605, 8.507059e+37
  %v607 = vand.u32 %v504, 2147483648
  %v608 = vor.u32 1.1754944e-38, %v607
  %v609 = vsel %vm606, %v608, %v604
  %v610 = vmul.f32 1.0, %v609
  %v611 = vrcp.pop %v505
  %v612 = vmul.f32 %v505, %v611
  %v613 = vsub.f32 1.0, %v612
  %v614 = vmul.f32 %v611, %v613
  %v615 = vadd.f32 %v611, %v614
  %vm616 = vweird.f32 %v505
  %vm617 = vweird.f32 %v611
  %vm618 = vmor %vm616, %vm617
  %v619 = vsel %vm618, %v611, %v615
  %v620 = vand.u32 2147483647, %v505
  %vm621 = vcmp.eq.f32.partialorder %v620, 8.507059e+37
  %v622 = vand.u32 %v505, 2147483648
  %v623 = vor.u32 1.1754944e-38, %v622
  %v624 = vsel %vm621, %v623, %v619
  %v625 = vmul.f32 1.0, %v624
  %634 = vrot.lane.b32.xlu0 %v466, 32
  %v635 = vpop.permute.xlu0 %634
  %636 = vrot.lane.b32.xlu0 %v467, 32
  %v637 = vpop.permute.xlu0 %636
  %638 = vrot.lane.b32.xlu0 %v468, 32
  %v639 = vpop.permute.xlu0 %638
  %640 = vrot.lane.b32.xlu0 %v469, 32
  %v641 = vpop.permute.xlu0 %640
  %642 = vrot.lane.b32.xlu0 %v470, 32
  %v643 = vpop.permute.xlu0 %642
  %644 = vrot.lane.b32.xlu0 %v471, 32
  %v645 = vpop.permute.xlu0 %644
  %646 = vrot.lane.b32.xlu0 %v472, 32
  %v647 = vpop.permute.xlu0 %646
  %648 = vrot.lane.b32.xlu0 %v473, 32
  %v649 = vpop.permute.xlu0 %648
  %v658 = vmul.f32 %v520, %v635
  %v659 = vmul.f32 %v535, %v637
  %v660 = vmul.f32 %v550, %v639
  %v661 = vmul.f32 %v565, %v641
  %v662 = vmul.f32 %v580, %v643
  %v663 = vmul.f32 %v595, %v645
  %v664 = vmul.f32 %v610, %v647
  %v665 = vmul.f32 %v625, %v649
  %v666 = vsub.f32 1.0, %v520
  %v667 = vsub.f32 1.0, %v535
  %v668 = vsub.f32 1.0, %v550
  %v669 = vsub.f32 1.0, %v565
  %v670 = vsub.f32 1.0, %v580
  %v671 = vsub.f32 1.0, %v595
  %v672 = vsub.f32 1.0, %v610
  %v673 = vsub.f32 1.0, %v625
  %v674 = vmul.f32 %v666, %v391
  %v675 = vmul.f32 %v667, %v392
  %v676 = vmul.f32 %v668, %v393
  %v677 = vmul.f32 %v669, %v394
  %v678 = vmul.f32 %v670, %v395
  %v679 = vmul.f32 %v671, %v396
  %v680 = vmul.f32 %v672, %v397
  %v681 = vmul.f32 %v673, %v398
  %v682 = vadd.f32 %v658, %v674
  %v683 = vadd.f32 %v659, %v675
  %v684 = vadd.f32 %v660, %v676
  %v685 = vadd.f32 %v661, %v677
  %v686 = vadd.f32 %v662, %v678
  %v687 = vadd.f32 %v663, %v679
  %v688 = vadd.f32 %v664, %v680
  %v689 = vadd.f32 %v665, %v681
  %698 = vrot.lane.b32.xlu0 %v682, 96
  %v699 = vpop.permute.xlu0 %698
  %700 = vrot.lane.b32.xlu0 %v683, 96
  %v701 = vpop.permute.xlu0 %700
  %702 = vrot.lane.b32.xlu0 %v684, 96
  %v703 = vpop.permute.xlu0 %702
  %704 = vrot.lane.b32.xlu0 %v685, 96
  %v705 = vpop.permute.xlu0 %704
  %706 = vrot.lane.b32.xlu0 %v686, 96
  %v707 = vpop.permute.xlu0 %706
  %708 = vrot.lane.b32.xlu0 %v687, 96
  %v709 = vpop.permute.xlu0 %708
  %710 = vrot.lane.b32.xlu0 %v688, 96
  %v711 = vpop.permute.xlu0 %710
  %712 = vrot.lane.b32.xlu0 %v689, 96
  %v713 = vpop.permute.xlu0 %712
  %722 = vst.msk [vmem:[%s6] sm:$0xff] %vm101, %v699
  %723 = vst.msk [vmem:[%s6 + $0x8] sm:$0xff] %vm101, %v701
  %724 = vst.msk [vmem:[%s6 + $0x10] sm:$0xff] %vm101, %v703
  %725 = vst.msk [vmem:[%s6 + $0x18] sm:$0xff] %vm101, %v705
  %726 = vst.msk [vmem:[%s6 + $0x20] sm:$0xff] %vm101, %v707
  %727 = vst.msk [vmem:[%s6 + $0x28] sm:$0xff] %vm101, %v709
  %728 = vst.msk [vmem:[%s6 + $0x30] sm:$0xff] %vm101, %v711
  %729 = vst.msk [vmem:[%s6 + $0x38] sm:$0xff] %vm101, %v713
  // Predicated region
  $region26: #{bidaf_forward.24} parent=0 // pred_check
    _
  $region27: #{bidaf_forward.24} parent=0 // pred_check_branch
    %731 = sbr.rel (0) target = $region29
  $region28: #{bidaf_forward.24} parent=0 // pred_region
    _
  $region29: #{bidaf_forward.24} parent=0 // pred_fallthru
    _
  // Predicated region
  $region30: #{bidaf_forward.24} parent=0 // pred_check
    _
  $region31: #{bidaf_forward.24} parent=0 // pred_check_branch
    %733 = sbr.rel (0) target = $region33
  $region32: #{bidaf_forward.24} parent=0 // pred_region
    _
  $region33: #{bidaf_forward.24} parent=0 // pred_fallthru
    _

// kernel: bidaf_forward.32
$region0: #{bidaf_forward.32}
  #allocation0 [shape = 'u32[]', space=smem, size = 0x4, offset = 0x4, fixed_abs, tag = 'smem constant byte address 0x4 - core index']
  #allocation1 [shape = 'u32[72,128]{1,0:T(1,128)}', space=vmem, size = 0x9000, scoped, tag = 'internal scratch']
  %s0 = inlined_call_operand.vmem [shape: f32[32,32], index: 0, kind: input, shape index: {}]
  %s1 = inlined_call_operand.vmem [shape: f32[32,128], index: 1, kind: input, shape index: {}]
  %s2 = inlined_call_operand.vmem [shape: f32[1,128], index: 2, kind: input, shape index: {}]
  %s3 = inlined_call_operand.vmem [shape: f32[32,128], index: 3, kind: output, shape index: {}]
  %s4 = sld [smem:[#allocation0]]
  $region22: #{bidaf_forward.32} parent=0
    _
  %s6 = ssub.s32 1, %s4
  %s7 = scalar_select 0, %s6, %s4
  // Predicated region
  $region2: #{bidaf_forward.32} parent=0 // pred_check
    _
  $region3: #{bidaf_forward.32} parent=0 // pred_check_branch
    %9 = sbr.rel (0) target = $region5
  $region4: #{bidaf_forward.32} parent=0 // pred_region
    _
  $region5: #{bidaf_forward.32} parent=0 // pred_fallthru
    _
  // Predicated region
  $region6: #{bidaf_forward.32} parent=0 // pred_check
    _
  $region7: #{bidaf_forward.32} parent=0 // pred_check_branch
    %11 = sbr.rel (0) target = $region9
  $region8: #{bidaf_forward.32} parent=0 // pred_region
    _
  $region9: #{bidaf_forward.32} parent=0 // pred_fallthru
    _
  // Predicated region
  $region10: #{bidaf_forward.32} parent=0 // pred_check
    _
  $region11: #{bidaf_forward.32} parent=0 // pred_check_branch
    %13 = sbr.rel (0) target = $region13
  $region12: #{bidaf_forward.32} parent=0 // pred_region
    _
  $region13: #{bidaf_forward.32} parent=0 // pred_fallthru
    _
  %v15 = vld [vmem:[%s0] sm:$0xff]
  %v16 = vld [vmem:[%s0 + $0x8] sm:$0xff]
  %v17 = vld [vmem:[%s0 + $0x10] sm:$0xff]
  %v18 = vld [vmem:[%s0 + $0x18] sm:$0xff]
  %v19 = vpack.c.bf16 %v16, %v15
  %v20 = vpack.c.bf16 %v18, %v17
  %v21 = vld [vmem:[%s1] sm:$0xff]
  %v22 = vld [vmem:[%s1 + $0x8] sm:$0xff]
  %v23 = vld [vmem:[%s1 + $0x10] sm:$0xff]
  %v24 = vld [vmem:[%s1 + $0x18] sm:$0xff]
  %v25 = vpack.c.bf16 %v22, %v21
  %v26 = vpack.c.bf16 %v24, %v23
  %v27 = vld [vmem:[%s2] sm:$0x1]
  %v29 = vperm.slane %v27, 0
  %vm31 = vcmask 261120
  %v33 = vsel %vm31, %v19, 0
  %v36 = vsel %vm31, %v20, 0
  %38 = vmatpush.bf16.msra.mxu0 0
  %39 = vmatpush.bf16.msra.mxu0 0
  %40 = vmatpush.bf16.msra.mxu0 0
  %41 = vmatpush.bf16.msra.mxu0 0
  %42 = vmatpush.bf16.msra.mxu0 0
  %43 = vmatpush.bf16.msra.mxu0 0
  %44 = vmatpush.bf16.msra.mxu0 %v26
  %45 = vmatpush.bf16.msra.mxu0 %v25
  %46 = vmatmul.bf16.gmra.mxu0 %v33
  %v47 = vpop.f32.mrf.mxu0
  %v48 = vadd.f32 %v29, %v47
  %v49 = vpop.f32.mrf.mxu0
  %v50 = vadd.f32 %v29, %v49
  %51 = vmatmul.bf16.gmra.mxu0 %v36
  %v52 = vpop.f32.mrf.mxu0
  %v53 = vadd.f32 %v29, %v52
  %v54 = vpop.f32.mrf.mxu0
  %v55 = vadd.f32 %v29, %v54
  %56 = vdwg.mxu0
  %57 = vst [vmem:[%s3] sm:$0xff] %v48
  %58 = vst [vmem:[%s3 + $0x8] sm:$0xff] %v50
  %59 = vst [vmem:[%s3 + $0x10] sm:$0xff] %v53
  %60 = vst [vmem:[%s3 + $0x18] sm:$0xff] %v55
  // Predicated region
  $region14: #{bidaf_forward.32} parent=0 // pred_check
    _
  $region15: #{bidaf_forward.32} parent=0 // pred_check_branch
    %62 = sbr.rel (0) target = $region17
  $region16: #{bidaf_forward.32} parent=0 // pred_region
    _
  $region17: #{bidaf_forward.32} parent=0 // pred_fallthru
    _
  // Predicated region
  $region18: #{bidaf_forward.32} parent=0 // pred_check
    _
  $region19: #{bidaf_forward.32} parent=0 // pred_check_branch
    %64 = sbr.rel (0) target = $region21
  $region20: #{bidaf_forward.32} parent=0 // pred_region
    _
  $region21: #{bidaf_forward.32} parent=0 // pred_fallthru
    _

// kernel: bidaf_forward.33
$region0: #{bidaf_forward.33}
  #allocation0 [shape = 'u32[]', space=smem, size = 0x4, offset = 0x4, fixed_abs, tag = 'smem constant byte address 0x4 - core index']
  #allocation1 [shape = 'u32[72,128]{1,0:T(1,128)}', space=vmem, size = 0x9000, scoped, tag = 'internal scratch']
  #allocation2 [shape = 'f32[2,32]{1,0:T(2,128)}', space=vmem, size = 0x400, scoped, tag = 'scratch operand']
  #allocation3 [shape = 'f32[2,32]{1,0:T(2,128)}', space=vmem, size = 0x400, scoped, tag = 'scratch operand']
  %s0 = inlined_call_operand.vmem [shape: s32[2,1], index: 0, kind: input, shape index: {}]
  %s1 = inlined_call_operand.vmem [shape: f32[16,2,128], index: 1, kind: input, shape index: {}]
  %s2 = inlined_call_operand.vmem [shape: f32[32,128], index: 2, kind: input, shape index: {}]
  %s3 = inlined_call_operand.vmem [shape: f32[16,2,32], index: 3, kind: output, shape index: {}]
  %s4 = sld [smem:[#allocation0]]
  $region49: #{bidaf_forward.33} parent=0
    _
  %s6 = ssub.s32 1, %s4
  %s7 = scalar_select 0, %s6, %s4
  loop: start=0, step=1, limit=18
  $region2: #{bidaf_forward.33} parent=0 // loop_pre_header
    _
  $region3: #{bidaf_forward.33} parent=0 // loop_header
    %s9 = sphi 0, %s13
    %p10 = scmp.ge.s32.totalorder %s9, 18
    %s17 = sphi 0, %s17
    %s19 = sphi 0, %s17
    %s20 = sphi 0, %s19
    %s34 = sphi 0, %s20
    %s42 = sphi 0, %s44
    %s45 = sphi 0, %s42
    %s46 = sphi 0, %s45
    %s62 = sphi 0, %s46
    %s66 = sphi 0, %s66
    %s68 = sphi 0, %s66
    %s69 = sphi 0, %s68
    %s83 = sphi 0, %s69
    %s91 = sphi 0, %s93
    %s94 = sphi 0, %s91
    %s95 = sphi 0, %s94
    %s111 = sphi 0, %s95
  $region4: #{bidaf_forward.33} parent=0 // loop_header_branch
    %12 = sbr.rel (%p10) target = $region8
  $region5: #{bidaf_forward.33} parent=0 // loop_body
    %s14 = ssub.s32 %s9, 1
    %s15 = ssub.s32 %s9, 2
    %s16 = sadd.s32 %s9, 1
    %s18 = sadd.s32 %s17, 1
    %p21 = scmp.eq.s32.totalorder %s9, 15
    %p22 = scmp.ne.s32.totalorder %s17, %s19
    %p23 = scmp.eq.s32.totalorder %s9, 0
    %p24 = por %p22, %p23
    %p25 = scmp.ne.s32.totalorder %s17, %s19
    %p26 = scmp.eq.s32.totalorder %s14, 15
    %p27 = por %p25, %p26
    %p28 = scmp.ne.s32.totalorder %s19, %s20
    %p29 = scmp.eq.s32.totalorder %s14, 0
    %p30 = por %p28, %p29
    %p31 = scmp.ne.s32.totalorder %s19, %s20
    %p32 = scmp.eq.s32.totalorder %s15, 15
    %p33 = por %p31, %p32
    %p35 = scmp.ne.s32.totalorder %s20, %s34
    %p36 = scmp.eq.s32.totalorder %s15, 0
    %p37 = por %p35, %p36
    %s38 = ssub.s32 15, %s9
    %s39 = ssub.s32 15, %s16
    %s40 = ssub.s32 %s38, %s39
    %p41 = scmp.eq.s32.totalorder %s40, 0
    %s43 = sadd.s32 %s42, 1
    %s44 = scalar_select %p41, %s42, %s43
    %p47 = pneg %p41
    %p48 = scmp.eq.s32.totalorder %s9, 15
    %p49 = por %p47, %p48
    %p50 = scmp.ne.s32.totalorder %s42, %s45
    %p51 = scmp.eq.s32.totalorder %s9, 0
    %p52 = por %p50, %p51
    %p53 = scmp.ne.s32.totalorder %s42, %s45
    %p54 = scmp.eq.s32.totalorder %s14, 15
    %p55 = por %p53, %p54
    %p56 = scmp.ne.s32.totalorder %s45, %s46
    %p57 = scmp.eq.s32.totalorder %s14, 0
    %p58 = por %p56, %p57
    %p59 = scmp.ne.s32.totalorder %s45, %s46
    %p60 = scmp.eq.s32.totalorder %s15, 15
    %p61 = por %p59, %p60
    %p63 = scmp.ne.s32.totalorder %s46, %s62
    %p64 = scmp.eq.s32.totalorder %s15, 0
    %p65 = por %p63, %p64
    %s67 = sadd.s32 %s66, 1
    %p70 = scmp.eq.s32.totalorder %s9, 15
    %p71 = scmp.ne.s32.totalorder %s66, %s68
    %p72 = scmp.eq.s32.totalorder %s9, 0
    %p73 = por %p71, %p72
    %p74 = scmp.ne.s32.totalorder %s66, %s68
    %p75 = scmp.eq.s32.totalorder %s14, 15
    %p76 = por %p74, %p75
    %p77 = scmp.ne.s32.totalorder %s68, %s69
    %p78 = scmp.eq.s32.totalorder %s14, 0
    %p79 = por %p77, %p78
    %p80 = scmp.ne.s32.totalorder %s68, %s69
    %p81 = scmp.eq.s32.totalorder %s15, 15
    %p82 = por %p80, %p81
    %p84 = scmp.ne.s32.totalorder %s69, %s83
    %p85 = scmp.eq.s32.totalorder %s15, 0
    %p86 = por %p84, %p85
    %s87 = ssub.s32 15, %s9
    %s88 = ssub.s32 15, %s16
    %s89 = ssub.s32 %s87, %s88
    %p90 = scmp.eq.s32.totalorder %s89, 0
    %s92 = sadd.s32 %s91, 1
    %s93 = scalar_select %p90, %s91, %s92
    %p96 = pneg %p90
    %p97 = scmp.eq.s32.totalorder %s9, 15
    %p98 = por %p96, %p97
    %p99 = scmp.ne.s32.totalorder %s91, %s94
    %p100 = scmp.eq.s32.totalorder %s9, 0
    %p101 = por %p99, %p100
    %p102 = scmp.ne.s32.totalorder %s91, %s94
    %p103 = scmp.eq.s32.totalorder %s14, 15
    %p104 = por %p102, %p103
    %p105 = scmp.ne.s32.totalorder %s94, %s95
    %p106 = scmp.eq.s32.totalorder %s14, 0
    %p107 = por %p105, %p106
    %p108 = scmp.ne.s32.totalorder %s94, %s95
    %p109 = scmp.eq.s32.totalorder %s15, 15
    %p110 = por %p108, %p109
    %p112 = scmp.ne.s32.totalorder %s95, %s111
    %p113 = scmp.eq.s32.totalorder %s15, 0
    %p114 = por %p112, %p113
    %p115 = scmp.le.s32.totalorder 1, %s9
    %p116 = scmp.lt.s32.totalorder %s9, 17
    %p117 = pnand %p115, %p116
    %p118 = pneg %p117
    // Predicated region
    $region9: #{bidaf_forward.33} parent=5 // pred_check
      _
    $region10: #{bidaf_forward.33} parent=5 // pred_check_branch
      %120 = sbr.rel (%p117) target = $region12
    $region11: #{bidaf_forward.33} parent=5 // pred_region
      %s121 = ssub.s32 %s9, 1
      // Predicated region
      $region13: #{bidaf_forward.33} parent=11 // pred_check
        %p122 = pneg %p30
      $region14: #{bidaf_forward.33} parent=11 // pred_check_branch
        %124 = sbr.rel (%p122) target = $region16
      $region15: #{bidaf_forward.33} parent=11 // pred_region
        _
      $region16: #{bidaf_forward.33} parent=11 // pred_fallthru
        _
      // Predicated region
      $region17: #{bidaf_forward.33} parent=11 // pred_check
        %p125 = pneg %p79
      $region18: #{bidaf_forward.33} parent=11 // pred_check_branch
        %127 = sbr.rel (%p125) target = $region20
      $region19: #{bidaf_forward.33} parent=11 // pred_region
        _
      $region20: #{bidaf_forward.33} parent=11 // pred_fallthru
        _
    $region12: #{bidaf_forward.33} parent=5 // pred_fallthru
      _
    %p128 = scmp.lt.s32.totalorder %s9, 16
    // Predicated region
    $region21: #{bidaf_forward.33} parent=5 // pred_check
      %p129 = pneg %p128
    $region22: #{bidaf_forward.33} parent=5 // pred_check_branch
      %131 = sbr.rel (%p129) target = $region24
    $region23: #{bidaf_forward.33} parent=5 // pred_region
      // Predicated region
      $region25: #{bidaf_forward.33} parent=23 // pred_check
        %p132 = pneg %p52
      $region26: #{bidaf_forward.33} parent=23 // pred_check_branch
        %134 = sbr.rel (%p132) target = $region28
      $region27: #{bidaf_forward.33} parent=23 // pred_region
        %s135 = ssub.s32 15, %s9
        %p136 = scmp.lt.s32.totalorder %s135, 15
        %s137 = scalar_select %p136, %s135, 15
        %s138 = smul.addr %s137, 2
        %s139 = scalar_lea.vmem %s1, %s138
        %s140 = ssub.s32 15, %s9
      $region28: #{bidaf_forward.33} parent=23 // pred_fallthru
        _
    $region24: #{bidaf_forward.33} parent=5 // pred_fallthru
      _
    %p141 = scmp.le.s32.totalorder 1, %s9
    %p142 = scmp.lt.s32.totalorder %s9, 17
    %p143 = pnand %p141, %p142
    %p144 = pneg %p143
    // Predicated region
    $region29: #{bidaf_forward.33} parent=5 // pred_check
      _
    $region30: #{bidaf_forward.33} parent=5 // pred_check_branch
      %146 = sbr.rel (%p143) target = $region32
    $region31: #{bidaf_forward.33} parent=5 // pred_region
      %s147 = ssub.s32 %s9, 1
      %p148 = pneg %p30
      %p149 = pneg %p27
      %s150 = ssub.s32 15, %s14
      %p151 = scmp.lt.s32.totalorder %s150, 15
      %s152 = scalar_select %p151, %s150, 15
      %s153 = smul.addr %s152, 2
      %s154 = scalar_lea.vmem %s1, %s153
      %p155 = pneg %p58
      %p156 = pneg %p55
      %p157 = pneg %p79
      %p158 = pneg %p76
      %p159 = pneg %p107
      %p160 = pneg %p104
      %s161 = ssub.s32 15, %s14
      %p162 = scmp.lt.s32.totalorder %s161, 15
      %s163 = scalar_select %p162, %s161, 15
      %s164 = smul.addr %s163, 2
      %s165 = scalar_lea.vmem %s3, %s164
      %s166 = ssub.s32 15, %s14
      %p167 = scmp.lt.s32.totalorder %s166, 15
      %s168 = scalar_select %p167, %s166, 15
      %s169 = smul.addr %s168, 2
      %s170 = scalar_lea.vmem %s1, %s169
      %s171 = ssub.s32 15, %s14
      %s172 = ssub.s32 15, %s14
      %p173 = scmp.lt.s32.totalorder %s172, 15
      %s174 = scalar_select %p173, %s172, 15
      %s175 = smul.addr %s174, 2
      %s176 = scalar_lea.vmem %s3, %s175
      %s177 = ssub.s32 15, %s14
      %p179 = scmp.eq.s32.totalorder %s14, 0
      // Predicated region
      $region33: #{bidaf_forward.33} parent=31 // pred_check
        %p180 = pneg %p179
      $region34: #{bidaf_forward.33} parent=31 // pred_check_branch
        %182 = sbr.rel (%p180) target = $region36
      $region35: #{bidaf_forward.33} parent=31 // pred_region
        %vm183 = vcmask 254976
        %184 = vst.msk [vmem:[#allocation2] sm:$0x3] %vm183, 0.0
        %185 = vst.msk [vmem:[#allocation3] sm:$0x3] %vm183, 0.0
      $region36: #{bidaf_forward.33} parent=31 // pred_fallthru
        _
      %s186 = ssub.s32 15, %s14
      %v187 = vld [vmem:[#allocation2] sm:$0x3]
      %v188 = vld [vmem:[#allocation3] sm:$0x3]
      %v189 = vld [vmem:[%s170] sm:$0x3]
      %v190 = vpack.c.bf16 %v187, %v187
      %v191 = vld [vmem:[%s2] sm:$0xff]
      %v192 = vld [vmem:[%s2 + $0x8] sm:$0xff]
      %v193 = vld [vmem:[%s2 + $0x10] sm:$0xff]
      %v194 = vld [vmem:[%s2 + $0x18] sm:$0xff]
      %v195 = vpack.c.bf16 %v192, %v191
      %v196 = vpack.c.bf16 %v194, %v193
      %vm197 = vcmask 261120
      %v199 = vsel %vm197, %v190, 0
      %201 = vmatpush.bf16.msra.mxu0 0
      %202 = vmatpush.bf16.msra.mxu0 0
      %203 = vmatpush.bf16.msra.mxu0 0
      %204 = vmatpush.bf16.msra.mxu0 0
      %205 = vmatpush.bf16.msra.mxu0 0
      %206 = vmatpush.bf16.msra.mxu0 0
      %207 = vmatpush.bf16.msra.mxu0 %v196
      %208 = vmatpush.bf16.msra.mxu0 %v195
      %209 = vmatmul.bf16.gmra.mxu0 %v199
      %v210 = vpop.f32.mrf.mxu0
      %v211 = vadd.f32 0.0, %v210
      %v212 = vpop.f32.mrf.mxu0
      %213 = vdwg.mxu0
      %v214 = vadd.f32 %v189, %v211
      %v215 = vxor.u32 %v214, 2147483648
      %v216 = vmul.f32 %v215, 1.442695
      %v217 = vpow.pop %v216
      %v218 = vadd.f32 %v217, 1.0
      %v219 = vrcp.pop %v218
      %v220 = vmul.f32 %v218, %v219
      %v221 = vsub.f32 1.0, %v220
      %v222 = vmul.f32 %v219, %v221
      %v223 = vadd.f32 %v219, %v222
      %vm224 = vweird.f32 %v218
      %vm225 = vweird.f32 %v219
      %vm226 = vmor %vm224, %vm225
      %v227 = vsel %vm226, %v219, %v223
      %v228 = vand.u32 2147483647, %v218
      %vm229 = vcmp.eq.f32.partialorder %v228, 8.507059e+37
      %v230 = vand.u32 %v218, 2147483648
      %v231 = vor.u32 1.1754944e-38, %v230
      %v232 = vsel %vm229, %v231, %v227
      %v233 = vmul.f32 1.0, %v232
      %v234 = vtanh.pop %v214
      %236 = vrot.lane.b32.xlu0 %v188, 32
      %v237 = vpop.permute.xlu0 %236
      %v239 = vmul.f32 %v233, %v237
      %241 = vrot.lane.b32.xlu0 %v234, 64
      %v242 = vpop.permute.xlu0 %241
      %v244 = vmul.f32 %v233, %v242
      %246 = vrot.lane.b32.xlu0 %v244, 32
      %v247 = vpop.permute.xlu0 %246
      %v249 = vadd.f32 %v239, %v247
      %v250 = vtanh.pop %v249
      %252 = vrot.lane.b32.xlu0 %v250, 64
      %v253 = vpop.permute.xlu0 %252
      %v255 = vmul.f32 %v233, %v253
      %v256 = vld [vmem:[%s0] sm:$0x3]
      %v257 = vstv %s186
      %vm258 = vcmp.lt.s32.totalorder %v257, %v256
      %v259 = vsel %vm258, 1, 0
      %v260 = vcvt.s32.f32 %v259
      %262 = vset.pattern.permute.xlu0 0
      %263 = vperm.xlu0 %262, %v260
      %v264 = vpop.permute.xlu0 %263
      %v266 = vmul.f32 %v264, %v255
      %v267 = vsub.f32 1.0, %v260
      %269 = vset.pattern.permute.xlu0 0
      %270 = vperm.xlu0 %269, %v267
      %v271 = vpop.permute.xlu0 %270
      %v273 = vmul.f32 %v271, %v187
      %275 = vrot.lane.b32.xlu0 %v273, 96
      %v276 = vpop.permute.xlu0 %275
      %v278 = vadd.f32 %v266, %v276
      %280 = vrot.lane.b32.xlu0 %v278, 32
      %v281 = vpop.permute.xlu0 %280
      %vm283 = vcmask 254976
      %284 = vst.msk [vmem:[#allocation2] sm:$0x3] %vm283, %v281
      %v285 = vmul.f32 %v264, %v249
      %v286 = vmul.f32 %v271, %v188
      %288 = vrot.lane.b32.xlu0 %v286, 32
      %v289 = vpop.permute.xlu0 %288
      %v291 = vadd.f32 %v285, %v289
      %293 = vrot.lane.b32.xlu0 %v291, 96
      %v294 = vpop.permute.xlu0 %293
      %296 = vst.msk [vmem:[#allocation3] sm:$0x3] %vm283, %v294
      %298 = vrot.lane.b32.xlu0 %v266, 32
      %v299 = vpop.permute.xlu0 %298
      %301 = vst.msk [vmem:[%s176] sm:$0x3] %vm283, %v299
      %s302 = ssub.s32 15, %s14
      %p303 = scmp.lt.s32.totalorder %s302, 15
      %s304 = scalar_select %p303, %s302, 15
      %s305 = smul.addr %s304, 2
      %s306 = scalar_lea.vmem %s3, %s305
      // Predicated region
      $region37: #{bidaf_forward.33} parent=31 // pred_check
        %p307 = pneg %p104
      $region38: #{bidaf_forward.33} parent=31 // pred_check_branch
        %309 = sbr.rel (%p307) target = $region40
      $region39: #{bidaf_forward.33} parent=31 // pred_region
        %s310 = ssub.s32 15, %s14
      $region40: #{bidaf_forward.33} parent=31 // pred_fallthru
        _
    $region32: #{bidaf_forward.33} parent=5 // pred_fallthru
      _
    %p311 = scmp.le.s32.totalorder 2, %s9
    // Predicated region
    $region41: #{bidaf_forward.33} parent=5 // pred_check
      %p312 = pneg %p311
    $region42: #{bidaf_forward.33} parent=5 // pred_check_branch
      %314 = sbr.rel (%p312) target = $region44
    $region43: #{bidaf_forward.33} parent=5 // pred_region
      %s315 = ssub.s32 %s9, 2
      // Predicated region
      $region45: #{bidaf_forward.33} parent=43 // pred_check
        %p316 = pneg %p110
      $region46: #{bidaf_forward.33} parent=43 // pred_check_branch
        %318 = sbr.rel (%p316) target = $region48
      $region47: #{bidaf_forward.33} parent=43 // pred_region
        %s319 = ssub.s32 15, %s15
        %p320 = scmp.lt.s32.totalorder %s319, 15
        %s321 = scalar_select %p320, %s319, 15
        %s322 = smul.addr %s321, 2
        %s323 = scalar_lea.vmem %s3, %s322
      $region48: #{bidaf_forward.33} parent=43 // pred_fallthru
        _
    $region44: #{bidaf_forward.33} parent=5 // pred_fallthru
      _
  $region6: #{bidaf_forward.33} parent=0 // loop_footer
    %s13 = sadd.s32 1, %s9
  $region7: #{bidaf_forward.33} parent=0 // loop_footer_branch
    %8 = sbr.rel target = $region3
  $region8: #{bidaf_forward.33} parent=0 // loop_exit
    _

// kernel: bidaf_forward.25
$region0: #{bidaf_forward.25}
  #allocation0 [shape = 'u32[]', space=smem, size = 0x4, offset = 0x4, fixed_abs, tag = 'smem constant byte address 0x4 - core index']
  #allocation1 [shape = 'u32[72,128]{1,0:T(1,128)}', space=vmem, size = 0x9000, scoped, tag = 'internal scratch']
  %s0 = inlined_call_operand.vmem [shape: f32[32,48], index: 0, kind: input, shape index: {}]
  %s1 = inlined_call_operand.vmem [shape: f32[48,32], index: 1, kind: input, shape index: {}]
  %s2 = inlined_call_operand.vmem [shape: f32[32,64], index: 2, kind: input, shape index: {}]
  %s3 = inlined_call_operand.vmem [shape: f32[1,64], index: 3, kind: input, shape index: {}]
  %s4 = inlined_call_operand.vmem [shape: f32[32,64], index: 4, kind: input, shape index: {}]
  %s5 = inlined_call_operand.vmem [shape: f32[1,64], index: 5, kind: input, shape index: {}]
  %s6 = inlined_call_operand.vmem [shape: f32[32,32], index: 6, kind: output, shape index: {}]
  %s7 = sld [smem:[#allocation0]]
  $region34: #{bidaf_forward.25} parent=0
    _
  %s9 = ssub.s32 1, %s7
  %s10 = scalar_select 0, %s9, %s7
  // Predicated region
  $region2: #{bidaf_forward.25} parent=0 // pred_check
    _
  $region3: #{bidaf_forward.25} parent=0 // pred_check_branch
    %12 = sbr.rel (0) target = $region5
  $region4: #{bidaf_forward.25} parent=0 // pred_region
    _
  $region5: #{bidaf_forward.25} parent=0 // pred_fallthru
    _
  // Predicated region
  $region6: #{bidaf_forward.25} parent=0 // pred_check
    _
  $region7: #{bidaf_forward.25} parent=0 // pred_check_branch
    %14 = sbr.rel (0) target = $region9
  $region8: #{bidaf_forward.25} parent=0 // pred_region
    _
  $region9: #{bidaf_forward.25} parent=0 // pred_fallthru
    _
  // Predicated region
  $region10: #{bidaf_forward.25} parent=0 // pred_check
    _
  $region11: #{bidaf_forward.25} parent=0 // pred_check_branch
    %16 = sbr.rel (0) target = $region13
  $region12: #{bidaf_forward.25} parent=0 // pred_region
    _
  $region13: #{bidaf_forward.25} parent=0 // pred_fallthru
    _
  // Predicated region
  $region14: #{bidaf_forward.25} parent=0 // pred_check
    _
  $region15: #{bidaf_forward.25} parent=0 // pred_check_branch
    %18 = sbr.rel (0) target = $region17
  $region16: #{bidaf_forward.25} parent=0 // pred_region
    _
  $region17: #{bidaf_forward.25} parent=0 // pred_fallthru
    _
  // Predicated region
  $region18: #{bidaf_forward.25} parent=0 // pred_check
    _
  $region19: #{bidaf_forward.25} parent=0 // pred_check_branch
    %20 = sbr.rel (0) target = $region21
  $region20: #{bidaf_forward.25} parent=0 // pred_region
    _
  $region21: #{bidaf_forward.25} parent=0 // pred_fallthru
    _
  // Predicated region
  $region22: #{bidaf_forward.25} parent=0 // pred_check
    _
  $region23: #{bidaf_forward.25} parent=0 // pred_check_branch
    %22 = sbr.rel (0) target = $region25
  $region24: #{bidaf_forward.25} parent=0 // pred_region
    _
  $region25: #{bidaf_forward.25} parent=0 // pred_fallthru
    _
  %v24 = vld [vmem:[%s0] sm:$0xff]
  %v25 = vld [vmem:[%s0 + $0x8] sm:$0xff]
  %v26 = vld [vmem:[%s0 + $0x10] sm:$0xff]
  %v27 = vld [vmem:[%s0 + $0x18] sm:$0xff]
  %v28 = vpack.c.bf16 %v25, %v24
  %v29 = vpack.c.bf16 %v27, %v26
  %v30 = vld [vmem:[%s1] sm:$0xff]
  %v31 = vld [vmem:[%s1 + $0x8] sm:$0xff]
  %v32 = vld [vmem:[%s1 + $0x10] sm:$0xff]
  %v33 = vld [vmem:[%s1 + $0x18] sm:$0xff]
  %v34 = vld [vmem:[%s1 + $0x20] sm:$0xff]
  %v35 = vld [vmem:[%s1 + $0x28] sm:$0xff]
  %v36 = vpack.c.bf16 %v31, %v30
  %v37 = vpack.c.bf16 %v33, %v32
  %v38 = vpack.c.bf16 %v35, %v34
  %vm39 = vcmask 392192
  %v41 = vsel %vm39, %v28, 0
  %v44 = vsel %vm39, %v29, 0
  %46 = vmatpush.bf16.msra.mxu0 0
  %47 = vmatpush.bf16.msra.mxu0 0
  %48 = vmatpush.bf16.msra.mxu0 0
  %49 = vmatpush.bf16.msra.mxu0 0
  %50 = vmatpush.bf16.msra.mxu0 0
  %51 = vmatpush.bf16.msra.mxu0 %v38
  %52 = vmatpush.bf16.msra.mxu0 %v37
  %53 = vmatpush.bf16.msra.mxu0 %v36
  %54 = vmatmul.bf16.gmra.mxu0 %v41
  %v55 = vpop.f32.mrf.mxu0
  %v56 = vadd.f32 0.0, %v55
  %v57 = vpop.f32.mrf.mxu0
  %v58 = vadd.f32 0.0, %v57
  %59 = vmatmul.bf16.gmra.mxu0 %v44
  %v60 = vpop.f32.mrf.mxu0
  %v61 = vadd.f32 0.0, %v60
  %v62 = vpop.f32.mrf.mxu0
  %v63 = vadd.f32 0.0, %v62
  %64 = vdwg.mxu0
  %v65 = vpack.c.bf16 %v58, %v56
  %v66 = vpack.c.bf16 %v63, %v61
  %v67 = vld [vmem:[%s2] sm:$0xff]
  %v68 = vld [vmem:[%s2 + $0x8] sm:$0xff]
  %v69 = vld [vmem:[%s2 + $0x10] sm:$0xff]
  %v70 = vld [vmem:[%s2 + $0x18] sm:$0xff]
  %v71 = vpack.c.bf16 %v68, %v67
  %v72 = vpack.c.bf16 %v70, %v69
  %v73 = vld [vmem:[%s3] sm:$0x1]
  %v75 = vperm.slane %v73, 0
  %vm77 = vcmask 261120
  %v79 = vsel %vm77, %v65, 0
  %v82 = vsel %vm77, %v66, 0
  %84 = vmatpush.bf16.msra.mxu0 0
  %85 = vmatpush.bf16.msra.mxu0 0
  %86 = vmatpush.bf16.msra.mxu0 0
  %87 = vmatpush.bf16.msra.mxu0 0
  %88 = vmatpush.bf16.msra.mxu0 0
  %89 = vmatpush.bf16.msra.mxu0 0
  %90 = vmatpush.bf16.msra.mxu0 %v72
  %91 = vmatpush.bf16.msra.mxu0 %v71
  %92 = vmatmul.bf16.gmra.mxu0 %v79
  %v93 = vpop.f32.mrf.mxu0
  %v94 = vadd.f32 %v75, %v93
  %v95 = vpop.f32.mrf.mxu0
  %v96 = vadd.f32 %v75, %v95
  %97 = vmatmul.bf16.gmra.mxu0 %v82
  %v98 = vpop.f32.mrf.mxu0
  %v99 = vadd.f32 %v75, %v98
  %v100 = vpop.f32.mrf.mxu0
  %v101 = vadd.f32 %v75, %v100
  %102 = vdwg.mxu0
  %v103 = vmax.f32 %v94, 0.0
  %v104 = vmax.f32 %v96, 0.0
  %v105 = vmax.f32 %v99, 0.0
  %v106 = vmax.f32 %v101, 0.0
  %v107 = vxor.u32 %v94, 2147483648
  %v108 = vxor.u32 %v96, 2147483648
  %v109 = vxor.u32 %v99, 2147483648
  %v110 = vxor.u32 %v101, 2147483648
  %v111 = vmul.f32 %v107, 1.442695
  %v112 = vpow.pop %v111
  %v113 = vmul.f32 %v108, 1.442695
  %v114 = vpow.pop %v113
  %v115 = vmul.f32 %v109, 1.442695
  %v116 = vpow.pop %v115
  %v117 = vmul.f32 %v110, 1.442695
  %v118 = vpow.pop %v117
  %v119 = vadd.f32 %v112, 1.0
  %v120 = vadd.f32 %v114, 1.0
  %v121 = vadd.f32 %v116, 1.0
  %v122 = vadd.f32 %v118, 1.0
  %v123 = vrcp.pop %v119
  %v124 = vmul.f32 %v119, %v123
  %v125 = vsub.f32 1.0, %v124
  %v126 = vmul.f32 %v123, %v125
  %v127 = vadd.f32 %v123, %v126
  %vm128 = vweird.f32 %v119
  %vm129 = vweird.f32 %v123
  %vm130 = vmor %vm128, %vm129
  %v131 = vsel %vm130, %v123, %v127
  %v132 = vand.u32 2147483647, %v119
  %vm133 = vcmp.eq.f32.partialorder %v132, 8.507059e+37
  %v134 = vand.u32 %v119, 2147483648
  %v135 = vor.u32 1.1754944e-38, %v134
  %v136 = vsel %vm133, %v135, %v131
  %v137 = vmul.f32 1.0, %v136
  %v138 = vrcp.pop %v120
  %v139 = vmul.f32 %v120, %v138
  %v140 = vsub.f32 1.0, %v139
  %v141 = vmul.f32 %v138, %v140
  %v142 = vadd.f32 %v138, %v141
  %vm143 = vweird.f32 %v120
  %vm144 = vweird.f32 %v138
  %vm145 = vmor %vm143, %vm144
  %v146 = vsel %vm145, %v138, %v142
  %v147 = vand.u32 2147483647, %v120
  %vm148 = vcmp.eq.f32.partialorder %v147, 8.507059e+37
  %v149 = vand.u32 %v120, 2147483648
  %v150 = vor.u32 1.1754944e-38, %v149
  %v151 = vsel %vm148, %v150, %v146
  %v152 = vmul.f32 1.0, %v151
  %v153 = vrcp.pop %v121
  %v154 = vmul.f32 %v121, %v153
  %v155 = vsub.f32 1.0, %v154
  %v156 = vmul.f32 %v153, %v155
  %v157 = vadd.f32 %v153, %v156
  %vm158 = vweird.f32 %v121
  %vm159 = vweird.f32 %v153
  %vm160 = vmor %vm158, %vm159
  %v161 = vsel %vm160, %v153, %v157
  %v162 = vand.u32 2147483647, %v121
  %vm163 = vcmp.eq.f32.partialorder %v162, 8.507059e+37
  %v164 = vand.u32 %v121, 2147483648
  %v165 = vor.u32 1.1754944e-38, %v164
  %v166 = vsel %vm163, %v165, %v161
  %v167 = vmul.f32 1.0, %v166
  %v168 = vrcp.pop %v122
  %v169 = vmul.f32 %v122, %v168
  %v170 = vsub.f32 1.0, %v169
  %v171 = vmul.f32 %v168, %v170
  %v172 = vadd.f32 %v168, %v171
  %vm173 = vweird.f32 %v122
  %vm174 = vweird.f32 %v168
  %vm175 = vmor %vm173, %vm174
  %v176 = vsel %vm175, %v168, %v172
  %v177 = vand.u32 2147483647, %v122
  %vm178 = vcmp.eq.f32.partialorder %v177, 8.507059e+37
  %v179 = vand.u32 %v122, 2147483648
  %v180 = vor.u32 1.1754944e-38, %v179
  %v181 = vsel %vm178, %v180, %v176
  %v182 = vmul.f32 1.0, %v181
  %187 = vrot.lane.b32.xlu0 %v103, 32
  %v188 = vpop.permute.xlu0 %187
  %189 = vrot.lane.b32.xlu0 %v104, 32
  %v190 = vpop.permute.xlu0 %189
  %191 = vrot.lane.b32.xlu0 %v105, 32
  %v192 = vpop.permute.xlu0 %191
  %193 = vrot.lane.b32.xlu0 %v106, 32
  %v194 = vpop.permute.xlu0 %193
  %v199 = vmul.f32 %v137, %v188
  %v200 = vmul.f32 %v152, %v190
  %v201 = vmul.f32 %v167, %v192
  %v202 = vmul.f32 %v182, %v194
  %v203 = vsub.f32 1.0, %v137
  %v204 = vsub.f32 1.0, %v152
  %v205 = vsub.f32 1.0, %v167
  %v206 = vsub.f32 1.0, %v182
  %211 = vrot.lane.b32.xlu0 %v56, 32
  %v212 = vpop.permute.xlu0 %211
  %213 = vrot.lane.b32.xlu0 %v58, 32
  %v214 = vpop.permute.xlu0 %213
  %215 = vrot.lane.b32.xlu0 %v61, 32
  %v216 = vpop.permute.xlu0 %215
  %217 = vrot.lane.b32.xlu0 %v63, 32
  %v218 = vpop.permute.xlu0 %217
  %v223 = vmul.f32 %v203, %v212
  %v224 = vmul.f32 %v204, %v214
  %v225 = vmul.f32 %v205, %v216
  %v226 = vmul.f32 %v206, %v218
  %v227 = vadd.f32 %v199, %v223
  %v228 = vadd.f32 %v200, %v224
  %v229 = vadd.f32 %v201, %v225
  %v230 = vadd.f32 %v202, %v226
  %v231 = vpack.c.bf16 %v228, %v227
  %v232 = vpack.c.bf16 %v230, %v229
  %v233 = vld [vmem:[%s4] sm:$0xff]
  %v234 = vld [vmem:[%s4 + $0x8] sm:$0xff]
  %v235 = vld [vmem:[%s4 + $0x10] sm:$0xff]
  %v236 = vld [vmem:[%s4 + $0x18] sm:$0xff]
  %v237 = vpack.c.bf16 %v234, %v233
  %v238 = vpack.c.bf16 %v236, %v235
  %v239 = vld [vmem:[%s5] sm:$0x1]
  %v241 = vperm.slane %v239, 0
  %245 = vrot.lane.b32.xlu0 %v231, 96
  %v246 = vpop.permute.xlu0 %245
  %247 = vrot.lane.b32.xlu0 %v232, 96
  %v248 = vpop.permute.xlu0 %247
  %v250 = vsel %vm77, %v246, 0
  %v253 = vsel %vm77, %v248, 0
  %255 = vmatpush.bf16.msra.mxu0 0
  %256 = vmatpush.bf16.msra.mxu0 0
  %257 = vmatpush.bf16.msra.mxu0 0
  %258 = vmatpush.bf16.msra.mxu0 0
  %259 = vmatpush.bf16.msra.mxu0 0
  %260 = vmatpush.bf16.msra.mxu0 0
  %261 = vmatpush.bf16.msra.mxu0 %v238
  %262 = vmatpush.bf16.msra.mxu0 %v237
  %263 = vmatmul.bf16.gmra.mxu0 %v250
  %v264 = vpop.f32.mrf.mxu0
  %v265 = vadd.f32 %v241, %v264
  %v266 = vpop.f32.mrf.mxu0
  %v267 = vadd.f32 %v241, %v266
  %268 = vmatmul.bf16.gmra.mxu0 %v253
  %v269 = vpop.f32.mrf.mxu0
  %v270 = vadd.f32 %v241, %v269
  %v271 = vpop.f32.mrf.mxu0
  %v272 = vadd.f32 %v241, %v271
  %273 = vdwg.mxu0
  %v274 = vmax.f32 %v265, 0.0
  %v275 = vmax.f32 %v267, 0.0
  %v276 = vmax.f32 %v270, 0.0
  %v277 = vmax.f32 %v272, 0.0
  %v278 = vxor.u32 %v265, 2147483648
  %v279 = vxor.u32 %v267, 2147483648
  %v280 = vxor.u32 %v270, 2147483648
  %v281 = vxor.u32 %v272, 2147483648
  %v282 = vmul.f32 %v278, 1.442695
  %v283 = vpow.pop %v282
  %v284 = vmul.f32 %v279, 1.442695
  %v285 = vpow.pop %v284
  %v286 = vmul.f32 %v280, 1.442695
  %v287 = vpow.pop %v286
  %v288 = vmul.f32 %v281, 1.442695
  %v289 = vpow.pop %v288
  %v290 = vadd.f32 %v283, 1.0
  %v291 = vadd.f32 %v285, 1.0
  %v292 = vadd.f32 %v287, 1.0
  %v293 = vadd.f32 %v289, 1.0
  %v294 = vrcp.pop %v290
  %v295 = vmul.f32 %v290, %v294
  %v296 = vsub.f32 1.0, %v295
  %v297 = vmul.f32 %v294, %v296
  %v298 = vadd.f32 %v294, %v297
  %vm299 = vweird.f32 %v290
  %vm300 = vweird.f32 %v294
  %vm301 = vmor %vm299, %vm300
  %v302 = vsel %vm301, %v294, %v298
  %v303 = vand.u32 2147483647, %v290
  %vm304 = vcmp.eq.f32.partialorder %v303, 8.507059e+37
  %v305 = vand.u32 %v290, 2147483648
  %v306 = vor.u32 1.1754944e-38, %v305
  %v307 = vsel %vm304, %v306, %v302
  %v308 = vmul.f32 1.0, %v307
  %v309 = vrcp.pop %v291
  %v310 = vmul.f32 %v291, %v309
  %v311 = vsub.f32 1.0, %v310
  %v312 = vmul.f32 %v309, %v311
  %v313 = vadd.f32 %v309, %v312
  %vm314 = vweird.f32 %v291
  %vm315 = vweird.f32 %v309
  %vm316 = vmor %vm314, %vm315
  %v317 = vsel %vm316, %v309, %v313
  %v318 = vand.u32 2147483647, %v291
  %vm319 = vcmp.eq.f32.partialorder %v318, 8.507059e+37
  %v320 = vand.u32 %v291, 2147483648
  %v321 = vor.u32 1.1754944e-38, %v320
  %v322 = vsel %vm319, %v321, %v317
  %v323 = vmul.f32 1.0, %v322
  %v324 = vrcp.pop %v292
  %v325 = vmul.f32 %v292, %v324
  %v326 = vsub.f32 1.0, %v325
  %v327 = vmul.f32 %v324, %v326
  %v328 = vadd.f32 %v324, %v327
  %vm329 = vweird.f32 %v292
  %vm330 = vweird.f32 %v324
  %vm331 = vmor %vm329, %vm330
  %v332 = vsel %vm331, %v324, %v328
  %v333 = vand.u32 2147483647, %v292
  %vm334 = vcmp.eq.f32.partialorder %v333, 8.507059e+37
  %v335 = vand.u32 %v292, 2147483648
  %v336 = vor.u32 1.1754944e-38, %v335
  %v337 = vsel %vm334, %v336, %v332
  %v338 = vmul.f32 1.0, %v337
  %v339 = vrcp.pop %v293
  %v340 = vmul.f32 %v293, %v339
  %v341 = vsub.f32 1.0, %v340
  %v342 = vmul.f32 %v339, %v341
  %v343 = vadd.f32 %v339, %v342
  %vm344 = vweird.f32 %v293
  %vm345 = vweird.f32 %v339
  %vm346 = vmor %vm344, %vm345
  %v347 = vsel %vm346, %v339, %v343
  %v348 = vand.u32 2147483647, %v293
  %vm349 = vcmp.eq.f32.partialorder %v348, 8.507059e+37
  %v350 = vand.u32 %v293, 2147483648
  %v351 = vor.u32 1.1754944e-38, %v350
  %v352 = vsel %vm349, %v351, %v347
  %v353 = vmul.f32 1.0, %v352
  %358 = vrot.lane.b32.xlu0 %v274, 32
  %v359 = vpop.permute.xlu0 %358
  %360 = vrot.lane.b32.xlu0 %v275, 32
  %v361 = vpop.permute.xlu0 %360
  %362 = vrot.lane.b32.xlu0 %v276, 32
  %v363 = vpop.permute.xlu0 %362
  %364 = vrot.lane.b32.xlu0 %v277, 32
  %v365 = vpop.permute.xlu0 %364
  %v370 = vmul.f32 %v308, %v359
  %v371 = vmul.f32 %v323, %v361
  %v372 = vmul.f32 %v338, %v363
  %v373 = vmul.f32 %v353, %v365
  %v374 = vsub.f32 1.0, %v308
  %v375 = vsub.f32 1.0, %v323
  %v376 = vsub.f32 1.0, %v338
  %v377 = vsub.f32 1.0, %v353
  %v378 = vmul.f32 %v374, %v227
  %v379 = vmul.f32 %v375, %v228
  %v380 = vmul.f32 %v376, %v229
  %v381 = vmul.f32 %v377, %v230
  %v382 = vadd.f32 %v370, %v378
  %v383 = vadd.f32 %v371, %v379
  %v384 = vadd.f32 %v372, %v380
  %v385 = vadd.f32 %v373, %v381
  %390 = vrot.lane.b32.xlu0 %v382, 96
  %v391 = vpop.permute.xlu0 %390
  %392 = vrot.lane.b32.xlu0 %v383, 96
  %v393 = vpop.permute.xlu0 %392
  %394 = vrot.lane.b32.xlu0 %v384, 96
  %v395 = vpop.permute.xlu0 %394
  %396 = vrot.lane.b32.xlu0 %v385, 96
  %v397 = vpop.permute.xlu0 %396
  %402 = vst.msk [vmem:[%s6] sm:$0xff] %vm77, %v391
  %403 = vst.msk [vmem:[%s6 + $0x8] sm:$0xff] %vm77, %v393
  %404 = vst.msk [vmem:[%s6 + $0x10] sm:$0xff] %vm77, %v395
  %405 = vst.msk [vmem:[%s6 + $0x18] sm:$0xff] %vm77, %v397
  // Predicated region
  $region26: #{bidaf_forward.25} parent=0 // pred_check
    _
  $region27: #{bidaf_forward.25} parent=0 // pred_check_branch
    %407 = sbr.rel (0) target = $region29
  $region28: #{bidaf_forward.25} parent=0 // pred_region
    _
  $region29: #{bidaf_forward.25} parent=0 // pred_fallthru
    _
  // Predicated region
  $region30: #{bidaf_forward.25} parent=0 // pred_check
    _
  $region31: #{bidaf_forward.25} parent=0 // pred_check_branch
    %409 = sbr.rel (0) target = $region33
  $region32: #{bidaf_forward.25} parent=0 // pred_region
    _
  $region33: #{bidaf_forward.25} parent=0 // pred_fallthru
    _

// kernel: bidaf_forward.31
$region0: #{bidaf_forward.31}
  #allocation0 [shape = 'u32[]', space=smem, size = 0x4, offset = 0x4, fixed_abs, tag = 'smem constant byte address 0x4 - core index']
  #allocation1 [shape = 'u32[72,128]{1,0:T(1,128)}', space=vmem, size = 0x9000, scoped, tag = 'internal scratch']
  #allocation2 [shape = 'f32[2,32]{1,0:T(2,128)}', space=vmem, size = 0x400, scoped, tag = 'scratch operand']
  #allocation3 [shape = 'f32[2,32]{1,0:T(2,128)}', space=vmem, size = 0x400, scoped, tag = 'scratch operand']
  %s0 = inlined_call_operand.vmem [shape: s32[2,1], index: 0, kind: input, shape index: {}]
  %s1 = inlined_call_operand.vmem [shape: f32[16,2,128], index: 1, kind: input, shape index: {}]
  %s2 = inlined_call_operand.vmem [shape: f32[32,128], index: 2, kind: input, shape index: {}]
  %s3 = inlined_call_operand.vmem [shape: f32[16,2,32], index: 3, kind: output, shape index: {}]
  %s4 = sld [smem:[#allocation0]]
  $region49: #{bidaf_forward.31} parent=0
    _
  %s6 = ssub.s32 1, %s4
  %s7 = scalar_select 0, %s6, %s4
  loop: start=0, step=1, limit=18
  $region2: #{bidaf_forward.31} parent=0 // loop_pre_header
    _
  $region3: #{bidaf_forward.31} parent=0 // loop_header
    %s9 = sphi 0, %s13
    %p10 = scmp.ge.s32.totalorder %s9, 18
    %s17 = sphi 0, %s17
    %s19 = sphi 0, %s17
    %s20 = sphi 0, %s19
    %s34 = sphi 0, %s20
    %s40 = sphi 0, %s42
    %s43 = sphi 0, %s40
    %s44 = sphi 0, %s43
    %s60 = sphi 0, %s44
    %s64 = sphi 0, %s64
    %s66 = sphi 0, %s64
    %s67 = sphi 0, %s66
    %s81 = sphi 0, %s67
    %s87 = sphi 0, %s89
    %s90 = sphi 0, %s87
    %s91 = sphi 0, %s90
    %s107 = sphi 0, %s91
  $region4: #{bidaf_forward.31} parent=0 // loop_header_branch
    %12 = sbr.rel (%p10) target = $region8
  $region5: #{bidaf_forward.31} parent=0 // loop_body
    %s14 = ssub.s32 %s9, 1
    %s15 = ssub.s32 %s9, 2
    %s16 = sadd.s32 %s9, 1
    %s18 = sadd.s32 %s17, 1
    %p21 = scmp.eq.s32.totalorder %s9, 15
    %p22 = scmp.ne.s32.totalorder %s17, %s19
    %p23 = scmp.eq.s32.totalorder %s9, 0
    %p24 = por %p22, %p23
    %p25 = scmp.ne.s32.totalorder %s17, %s19
    %p26 = scmp.eq.s32.totalorder %s14, 15
    %p27 = por %p25, %p26
    %p28 = scmp.ne.s32.totalorder %s19, %s20
    %p29 = scmp.eq.s32.totalorder %s14, 0
    %p30 = por %p28, %p29
    %p31 = scmp.ne.s32.totalorder %s19, %s20
    %p32 = scmp.eq.s32.totalorder %s15, 15
    %p33 = por %p31, %p32
    %p35 = scmp.ne.s32.totalorder %s20, %s34
    %p36 = scmp.eq.s32.totalorder %s15, 0
    %p37 = por %p35, %p36
    %s38 = ssub.s32 %s9, %s16
    %p39 = scmp.eq.s32.totalorder %s38, 0
    %s41 = sadd.s32 %s40, 1
    %s42 = scalar_select %p39, %s40, %s41
    %p45 = pneg %p39
    %p46 = scmp.eq.s32.totalorder %s9, 15
    %p47 = por %p45, %p46
    %p48 = scmp.ne.s32.totalorder %s40, %s43
    %p49 = scmp.eq.s32.totalorder %s9, 0
    %p50 = por %p48, %p49
    %p51 = scmp.ne.s32.totalorder %s40, %s43
    %p52 = scmp.eq.s32.totalorder %s14, 15
    %p53 = por %p51, %p52
    %p54 = scmp.ne.s32.totalorder %s43, %s44
    %p55 = scmp.eq.s32.totalorder %s14, 0
    %p56 = por %p54, %p55
    %p57 = scmp.ne.s32.totalorder %s43, %s44
    %p58 = scmp.eq.s32.totalorder %s15, 15
    %p59 = por %p57, %p58
    %p61 = scmp.ne.s32.totalorder %s44, %s60
    %p62 = scmp.eq.s32.totalorder %s15, 0
    %p63 = por %p61, %p62
    %s65 = sadd.s32 %s64, 1
    %p68 = scmp.eq.s32.totalorder %s9, 15
    %p69 = scmp.ne.s32.totalorder %s64, %s66
    %p70 = scmp.eq.s32.totalorder %s9, 0
    %p71 = por %p69, %p70
    %p72 = scmp.ne.s32.totalorder %s64, %s66
    %p73 = scmp.eq.s32.totalorder %s14, 15
    %p74 = por %p72, %p73
    %p75 = scmp.ne.s32.totalorder %s66, %s67
    %p76 = scmp.eq.s32.totalorder %s14, 0
    %p77 = por %p75, %p76
    %p78 = scmp.ne.s32.totalorder %s66, %s67
    %p79 = scmp.eq.s32.totalorder %s15, 15
    %p80 = por %p78, %p79
    %p82 = scmp.ne.s32.totalorder %s67, %s81
    %p83 = scmp.eq.s32.totalorder %s15, 0
    %p84 = por %p82, %p83
    %s85 = ssub.s32 %s9, %s16
    %p86 = scmp.eq.s32.totalorder %s85, 0
    %s88 = sadd.s32 %s87, 1
    %s89 = scalar_select %p86, %s87, %s88
    %p92 = pneg %p86
    %p93 = scmp.eq.s32.totalorder %s9, 15
    %p94 = por %p92, %p93
    %p95 = scmp.ne.s32.totalorder %s87, %s90
    %p96 = scmp.eq.s32.totalorder %s9, 0
    %p97 = por %p95, %p96
    %p98 = scmp.ne.s32.totalorder %s87, %s90
    %p99 = scmp.eq.s32.totalorder %s14, 15
    %p100 = por %p98, %p99
    %p101 = scmp.ne.s32.totalorder %s90, %s91
    %p102 = scmp.eq.s32.totalorder %s14, 0
    %p103 = por %p101, %p102
    %p104 = scmp.ne.s32.totalorder %s90, %s91
    %p105 = scmp.eq.s32.totalorder %s15, 15
    %p106 = por %p104, %p105
    %p108 = scmp.ne.s32.totalorder %s91, %s107
    %p109 = scmp.eq.s32.totalorder %s15, 0
    %p110 = por %p108, %p109
    %p111 = scmp.le.s32.totalorder 1, %s9
    %p112 = scmp.lt.s32.totalorder %s9, 17
    %p113 = pnand %p111, %p112
    %p114 = pneg %p113
    // Predicated region
    $region9: #{bidaf_forward.31} parent=5 // pred_check
      _
    $region10: #{bidaf_forward.31} parent=5 // pred_check_branch
      %116 = sbr.rel (%p113) target = $region12
    $region11: #{bidaf_forward.31} parent=5 // pred_region
      %s117 = ssub.s32 %s9, 1
      // Predicated region
      $region13: #{bidaf_forward.31} parent=11 // pred_check
        %p118 = pneg %p30
      $region14: #{bidaf_forward.31} parent=11 // pred_check_branch
        %120 = sbr.rel (%p118) target = $region16
      $region15: #{bidaf_forward.31} parent=11 // pred_region
        _
      $region16: #{bidaf_forward.31} parent=11 // pred_fallthru
        _
      // Predicated region
      $region17: #{bidaf_forward.31} parent=11 // pred_check
        %p121 = pneg %p77
      $region18: #{bidaf_forward.31} parent=11 // pred_check_branch
        %123 = sbr.rel (%p121) target = $region20
      $region19: #{bidaf_forward.31} parent=11 // pred_region
        _
      $region20: #{bidaf_forward.31} parent=11 // pred_fallthru
        _
    $region12: #{bidaf_forward.31} parent=5 // pred_fallthru
      _
    %p124 = scmp.lt.s32.totalorder %s9, 16
    // Predicated region
    $region21: #{bidaf_forward.31} parent=5 // pred_check
      %p125 = pneg %p124
    $region22: #{bidaf_forward.31} parent=5 // pred_check_branch
      %127 = sbr.rel (%p125) target = $region24
    $region23: #{bidaf_forward.31} parent=5 // pred_region
      // Predicated region
      $region25: #{bidaf_forward.31} parent=23 // pred_check
        %p128 = pneg %p50
      $region26: #{bidaf_forward.31} parent=23 // pred_check_branch
        %130 = sbr.rel (%p128) target = $region28
      $region27: #{bidaf_forward.31} parent=23 // pred_region
        %p131 = scmp.lt.s32.totalorder %s9, 15
        %s132 = scalar_select %p131, %s9, 15
        %s133 = smul.addr %s132, 2
        %s134 = scalar_lea.vmem %s1, %s133
      $region28: #{bidaf_forward.31} parent=23 // pred_fallthru
        _
    $region24: #{bidaf_forward.31} parent=5 // pred_fallthru
      _
    %p135 = scmp.le.s32.totalorder 1, %s9
    %p136 = scmp.lt.s32.totalorder %s9, 17
    %p137 = pnand %p135, %p136
    %p138 = pneg %p137
    // Predicated region
    $region29: #{bidaf_forward.31} parent=5 // pred_check
      _
    $region30: #{bidaf_forward.31} parent=5 // pred_check_branch
      %140 = sbr.rel (%p137) target = $region32
    $region31: #{bidaf_forward.31} parent=5 // pred_region
      %s141 = ssub.s32 %s9, 1
      %p142 = pneg %p30
      %p143 = pneg %p27
      %p144 = scmp.lt.s32.totalorder %s14, 15
      %s145 = scalar_select %p144, %s14, 15
      %s146 = smul.addr %s145, 2
      %s147 = scalar_lea.vmem %s1, %s146
      %p148 = pneg %p56
      %p149 = pneg %p53
      %p150 = pneg %p77
      %p151 = pneg %p74
      %p152 = pneg %p103
      %p153 = pneg %p100
      %p154 = scmp.lt.s32.totalorder %s14, 15
      %s155 = scalar_select %p154, %s14, 15
      %s156 = smul.addr %s155, 2
      %s157 = scalar_lea.vmem %s3, %s156
      %p158 = scmp.lt.s32.totalorder %s14, 15
      %s159 = scalar_select %p158, %s14, 15
      %s160 = smul.addr %s159, 2
      %s161 = scalar_lea.vmem %s1, %s160
      %p162 = scmp.lt.s32.totalorder %s14, 15
      %s163 = scalar_select %p162, %s14, 15
      %s164 = smul.addr %s163, 2
      %s165 = scalar_lea.vmem %s3, %s164
      %p167 = scmp.eq.s32.totalorder %s14, 0
      // Predicated region
      $region33: #{bidaf_forward.31} parent=31 // pred_check
        %p168 = pneg %p167
      $region34: #{bidaf_forward.31} parent=31 // pred_check_branch
        %170 = sbr.rel (%p168) target = $region36
      $region35: #{bidaf_forward.31} parent=31 // pred_region
        %vm171 = vcmask 254976
        %172 = vst.msk [vmem:[#allocation2] sm:$0x3] %vm171, 0.0
        %173 = vst.msk [vmem:[#allocation3] sm:$0x3] %vm171, 0.0
      $region36: #{bidaf_forward.31} parent=31 // pred_fallthru
        _
      %v174 = vld [vmem:[#allocation2] sm:$0x3]
      %v175 = vld [vmem:[#allocation3] sm:$0x3]
      %v176 = vld [vmem:[%s161] sm:$0x3]
      %v177 = vpack.c.bf16 %v174, %v174
      %v178 = vld [vmem:[%s2] sm:$0xff]
      %v179 = vld [vmem:[%s2 + $0x8] sm:$0xff]
      %v180 = vld [vmem:[%s2 + $0x10] sm:$0xff]
      %v181 = vld [vmem:[%s2 + $0x18] sm:$0xff]
      %v182 = vpack.c.bf16 %v179, %v178
      %v183 = vpack.c.bf16 %v181, %v180
      %vm184 = vcmask 261120
      %v186 = vsel %vm184, %v177, 0
      %188 = vmatpush.bf16.msra.mxu0 0
      %189 = vmatpush.bf16.msra.mxu0 0
      %190 = vmatpush.bf16.msra.mxu0 0
      %191 = vmatpush.bf16.msra.mxu0 0
      %192 = vmatpush.bf16.msra.mxu0 0
      %193 = vmatpush.bf16.msra.mxu0 0
      %194 = vmatpush.bf16.msra.mxu0 %v183
      %195 = vmatpush.bf16.msra.mxu0 %v182
      %196 = vmatmul.bf16.gmra.mxu0 %v186
      %v197 = vpop.f32.mrf.mxu0
      %v198 = vadd.f32 0.0, %v197
      %v199 = vpop.f32.mrf.mxu0
      %200 = vdwg.mxu0
      %v201 = vadd.f32 %v176, %v198
      %v202 = vxor.u32 %v201, 2147483648
      %v203 = vmul.f32 %v202, 1.442695
      %v204 = vpow.pop %v203
      %v205 = vadd.f32 %v204, 1.0
      %v206 = vrcp.pop %v205
      %v207 = vmul.f32 %v205, %v206
      %v208 = vsub.f32 1.0, %v207
      %v209 = vmul.f32 %v206, %v208
      %v210 = vadd.f32 %v206, %v209
      %vm211 = vweird.f32 %v205
      %vm212 = vweird.f32 %v206
      %vm213 = vmor %vm211, %vm212
      %v214 = vsel %vm213, %v206, %v210
      %v215 = vand.u32 2147483647, %v205
      %vm216 = vcmp.eq.f32.partialorder %v215, 8.507059e+37
      %v217 = vand.u32 %v205, 2147483648
      %v218 = vor.u32 1.1754944e-38, %v217
      %v219 = vsel %vm216, %v218, %v214
      %v220 = vmul.f32 1.0, %v219
      %v221 = vtanh.pop %v201
      %223 = vrot.lane.b32.xlu0 %v175, 32
      %v224 = vpop.permute.xlu0 %223
      %v226 = vmul.f32 %v220, %v224
      %228 = vrot.lane.b32.xlu0 %v221, 64
      %v229 = vpop.permute.xlu0 %228
      %v231 = vmul.f32 %v220, %v229
      %233 = vrot.lane.b32.xlu0 %v231, 32
      %v234 = vpop.permute.xlu0 %233
      %v236 = vadd.f32 %v226, %v234
      %v237 = vtanh.pop %v236
      %239 = vrot.lane.b32.xlu0 %v237, 64
      %v240 = vpop.permute.xlu0 %239
      %v242 = vmul.f32 %v220, %v240
      %v243 = vld [vmem:[%s0] sm:$0x3]
      %v244 = vstv %s14
      %vm245 = vcmp.lt.s32.totalorder %v244, %v243
      %v246 = vsel %vm245, 1, 0
      %v247 = vcvt.s32.f32 %v246
      %249 = vset.pattern.permute.xlu0 0
      %250 = vperm.xlu0 %249, %v247
      %v251 = vpop.permute.xlu0 %250
      %v253 = vmul.f32 %v251, %v242
      %v254 = vsub.f32 1.0, %v247
      %256 = vset.pattern.permute.xlu0 0
      %257 = vperm.xlu0 %256, %v254
      %v258 = vpop.permute.xlu0 %257
      %v260 = vmul.f32 %v258, %v174
      %262 = vrot.lane.b32.xlu0 %v260, 96
      %v263 = vpop.permute.xlu0 %262
      %v265 = vadd.f32 %v253, %v263
      %267 = vrot.lane.b32.xlu0 %v265, 32
      %v268 = vpop.permute.xlu0 %267
      %vm270 = vcmask 254976
      %271 = vst.msk [vmem:[#allocation2] sm:$0x3] %vm270, %v268
      %v272 = vmul.f32 %v251, %v236
      %v273 = vmul.f32 %v258, %v175
      %275 = vrot.lane.b32.xlu0 %v273, 32
      %v276 = vpop.permute.xlu0 %275
      %v278 = vadd.f32 %v272, %v276
      %280 = vrot.lane.b32.xlu0 %v278, 96
      %v281 = vpop.permute.xlu0 %280
      %283 = vst.msk [vmem:[#allocation3] sm:$0x3] %vm270, %v281
      %285 = vrot.lane.b32.xlu0 %v253, 32
      %v286 = vpop.permute.xlu0 %285
      %288 = vst.msk [vmem:[%s165] sm:$0x3] %vm270, %v286
      %p289 = scmp.lt.s32.totalorder %s14, 15
      %s290 = scalar_select %p289, %s14, 15
      %s291 = smul.addr %s290, 2
      %s292 = scalar_lea.vmem %s3, %s291
      // Predicated region
      $region37: #{bidaf_forward.31} parent=31 // pred_check
        %p293 = pneg %p100
      $region38: #{bidaf_forward.31} parent=31 // pred_check_branch
        %295 = sbr.rel (%p293) target = $region40
      $region39: #{bidaf_forward.31} parent=31 // pred_region
        _
      $region40: #{bidaf_forward.31} parent=31 // pred_fallthru
        _
    $region32: #{bidaf_forward.31} parent=5 // pred_fallthru
      _
    %p296 = scmp.le.s32.totalorder 2, %s9
    // Predicated region
    $region41: #{bidaf_forward.31} parent=5 // pred_check
      %p297 = pneg %p296
    $region42: #{bidaf_forward.31} parent=5 // pred_check_branch
      %299 = sbr.rel (%p297) target = $region44
    $region43: #{bidaf_forward.31} parent=5 // pred_region
      %s300 = ssub.s32 %s9, 2
      // Predicated region
      $region45: #{bidaf_forward.31} parent=43 // pred_check
        %p301 = pneg %p106
      $region46: #{bidaf_forward.31} parent=43 // pred_check_branch
        %303 = sbr.rel (%p301) target = $region48
      $region47: #{bidaf_forward.31} parent=43 // pred_region
        %p304 = scmp.lt.s32.totalorder %s15, 15
        %s305 = scalar_select %p304, %s15, 15
        %s306 = smul.addr %s305, 2
        %s307 = scalar_lea.vmem %s3, %s306
      $region48: #{bidaf_forward.31} parent=43 // pred_fallthru
        _
    $region44: #{bidaf_forward.31} parent=5 // pred_fallthru
      _
  $region6: #{bidaf_forward.31} parent=0 // loop_footer
    %s13 = sadd.s32 1, %s9
  $region7: #{bidaf_forward.31} parent=0 // loop_footer_branch
    %8 = sbr.rel target = $region3
  $region8: #{bidaf_forward.31} parent=0 // loop_exit
    _

// kernel: bidaf_forward.34
$region0: #{bidaf_forward.34}
  #allocation0 [shape = 'u32[]', space=smem, size = 0x4, offset = 0x4, fixed_abs, tag = 'smem constant byte address 0x4 - core index']
  #allocation1 [shape = 'u32[72,128]{1,0:T(1,128)}', space=vmem, size = 0x9000, scoped, tag = 'internal scratch']
  #allocation2 [shape = 's32[1]{0}', space=sflag, size = 0x4, scoped, tag = 'scoped memory for bidaf_forward.34']
  #allocation3 [shape = 'u8[512]{0}', space=smem, size = 0x200, scoped, tag = 'prefetched SMEM operand 0']
  #allocation4 [shape = 'u8[512]{0}', space=smem, size = 0x200, scoped, tag = 'prefetched SMEM operand 1']
  #allocation5 [shape = 'f32[1,1]{1,0:T(1,128)S(1)}', space=vmem, size = 0x200, scoped, tag = 'scoped memory for bidaf_forward.34']
  %s0 = inlined_call_operand.vmem [shape: s32[2], index: 0, kind: input, shape index: {}]
  %s1 = inlined_call_operand.vmem [shape: s32[2], index: 1, kind: input, shape index: {}]
  %s2 = inlined_call_operand.vmem [shape: f32[2,32,64], index: 2, kind: input, shape index: {}]
  %s3 = inlined_call_operand.vmem [shape: f32[2,16,64], index: 3, kind: input, shape index: {}]
  %s4 = inlined_call_operand.vmem [shape: f32[1,64], index: 4, kind: input, shape index: {}]
  %s5 = inlined_call_operand.vmem [shape: f32[1,64], index: 5, kind: input, shape index: {}]
  %s6 = inlined_call_operand.vmem [shape: f32[1,64], index: 6, kind: input, shape index: {}]
  %s7 = inlined_call_operand.<no memory space> [shape: f32[1,1], index: 7, kind: input, shape index: {}]
  %s8 = inlined_call_operand.vmem [shape: f32[2,32,256], index: 8, kind: output, shape index: {}]
  %s9 = sld [smem:[#allocation0]]
  $region57: #{bidaf_forward.34} parent=0
    _
  %s11 = ssub.s32 1, %s9
  %s12 = scalar_select 0, %s11, %s9
  %s14 = sshll.u32 %s0, 4
  %s15 = int_to_ptr.vmem [resolvable:$true] %s14
  %17 = dma.vmem_to_smem %s15, 16, [#allocation3], [#allocation2]
  %s19 = sshll.u32 %s1, 4
  %s20 = int_to_ptr.vmem [resolvable:$true] %s19
  %22 = dma.vmem_to_smem %s20, 16, [#allocation4], [#allocation2]
  %v23 = vstv %s7
  %24 = vst [vmem:[#allocation5] sm:$0x1] %v23
  %26 = dma.done [#allocation2], 32
  %27 = sfence
  loop: start=0, step=1, limit=4
  $region2: #{bidaf_forward.34} parent=0 // loop_pre_header
    _
  $region3: #{bidaf_forward.34} parent=0 // loop_header
    %s29 = sphi 0, %s33
    %p30 = scmp.ge.s32.totalorder %s29, 4
    %s39 = sphi 0, %s41
    %s42 = sphi 0, %s39
    %s43 = sphi 0, %s42
    %s59 = sphi 0, %s43
    %s65 = sphi 0, %s67
    %s68 = sphi 0, %s65
    %s69 = sphi 0, %s68
    %s85 = sphi 0, %s69
    %s89 = sphi 0, %s89
    %s91 = sphi 0, %s89
    %s92 = sphi 0, %s91
    %s106 = sphi 0, %s92
    %s110 = sphi 0, %s110
    %s112 = sphi 0, %s110
    %s113 = sphi 0, %s112
    %s127 = sphi 0, %s113
    %s131 = sphi 0, %s131
    %s133 = sphi 0, %s131
    %s134 = sphi 0, %s133
    %s148 = sphi 0, %s134
    %s152 = sphi 0, %s152
    %s154 = sphi 0, %s152
    %s155 = sphi 0, %s154
    %s169 = sphi 0, %s155
    %s175 = sphi 0, %s177
    %s178 = sphi 0, %s175
    %s179 = sphi 0, %s178
    %s195 = sphi 0, %s179
  $region4: #{bidaf_forward.34} parent=0 // loop_header_branch
    %32 = sbr.rel (%p30) target = $region8
  $region5: #{bidaf_forward.34} parent=0 // loop_body
    %s34 = ssub.s32 %s29, 1
    %s35 = ssub.s32 %s29, 2
    %s36 = sadd.s32 %s29, 1
    %s37 = ssub.s32 %s29, %s36
    %p38 = scmp.eq.s32.totalorder %s37, 0
    %s40 = sadd.s32 %s39, 1
    %s41 = scalar_select %p38, %s39, %s40
    %p44 = pneg %p38
    %p45 = scmp.eq.s32.totalorder %s29, 1
    %p46 = por %p44, %p45
    %p47 = scmp.ne.s32.totalorder %s39, %s42
    %p48 = scmp.eq.s32.totalorder %s29, 0
    %p49 = por %p47, %p48
    %p50 = scmp.ne.s32.totalorder %s39, %s42
    %p51 = scmp.eq.s32.totalorder %s34, 1
    %p52 = por %p50, %p51
    %p53 = scmp.ne.s32.totalorder %s42, %s43
    %p54 = scmp.eq.s32.totalorder %s34, 0
    %p55 = por %p53, %p54
    %p56 = scmp.ne.s32.totalorder %s42, %s43
    %p57 = scmp.eq.s32.totalorder %s35, 1
    %p58 = por %p56, %p57
    %p60 = scmp.ne.s32.totalorder %s43, %s59
    %p61 = scmp.eq.s32.totalorder %s35, 0
    %p62 = por %p60, %p61
    %s63 = ssub.s32 %s29, %s36
    %p64 = scmp.eq.s32.totalorder %s63, 0
    %s66 = sadd.s32 %s65, 1
    %s67 = scalar_select %p64, %s65, %s66
    %p70 = pneg %p64
    %p71 = scmp.eq.s32.totalorder %s29, 1
    %p72 = por %p70, %p71
    %p73 = scmp.ne.s32.totalorder %s65, %s68
    %p74 = scmp.eq.s32.totalorder %s29, 0
    %p75 = por %p73, %p74
    %p76 = scmp.ne.s32.totalorder %s65, %s68
    %p77 = scmp.eq.s32.totalorder %s34, 1
    %p78 = por %p76, %p77
    %p79 = scmp.ne.s32.totalorder %s68, %s69
    %p80 = scmp.eq.s32.totalorder %s34, 0
    %p81 = por %p79, %p80
    %p82 = scmp.ne.s32.totalorder %s68, %s69
    %p83 = scmp.eq.s32.totalorder %s35, 1
    %p84 = por %p82, %p83
    %p86 = scmp.ne.s32.totalorder %s69, %s85
    %p87 = scmp.eq.s32.totalorder %s35, 0
    %p88 = por %p86, %p87
    %s90 = sadd.s32 %s89, 1
    %p93 = scmp.eq.s32.totalorder %s29, 1
    %p94 = scmp.ne.s32.totalorder %s89, %s91
    %p95 = scmp.eq.s32.totalorder %s29, 0
    %p96 = por %p94, %p95
    %p97 = scmp.ne.s32.totalorder %s89, %s91
    %p98 = scmp.eq.s32.totalorder %s34, 1
    %p99 = por %p97, %p98
    %p100 = scmp.ne.s32.totalorder %s91, %s92
    %p101 = scmp.eq.s32.totalorder %s34, 0
    %p102 = por %p100, %p101
    %p103 = scmp.ne.s32.totalorder %s91, %s92
    %p104 = scmp.eq.s32.totalorder %s35, 1
    %p105 = por %p103, %p104
    %p107 = scmp.ne.s32.totalorder %s92, %s106
    %p108 = scmp.eq.s32.totalorder %s35, 0
    %p109 = por %p107, %p108
    %s111 = sadd.s32 %s110, 1
    %p114 = scmp.eq.s32.totalorder %s29, 1
    %p115 = scmp.ne.s32.totalorder %s110, %s112
    %p116 = scmp.eq.s32.totalorder %s29, 0
    %p117 = por %p115, %p116
    %p118 = scmp.ne.s32.totalorder %s110, %s112
    %p119 = scmp.eq.s32.totalorder %s34, 1
    %p120 = por %p118, %p119
    %p121 = scmp.ne.s32.totalorder %s112, %s113
    %p122 = scmp.eq.s32.totalorder %s34, 0
    %p123 = por %p121, %p122
    %p124 = scmp.ne.s32.totalorder %s112, %s113
    %p125 = scmp.eq.s32.totalorder %s35, 1
    %p126 = por %p124, %p125
    %p128 = scmp.ne.s32.totalorder %s113, %s127
    %p129 = scmp.eq.s32.totalorder %s35, 0
    %p130 = por %p128, %p129
    %s132 = sadd.s32 %s131, 1
    %p135 = scmp.eq.s32.totalorder %s29, 1
    %p136 = scmp.ne.s32.totalorder %s131, %s133
    %p137 = scmp.eq.s32.totalorder %s29, 0
    %p138 = por %p136, %p137
    %p139 = scmp.ne.s32.totalorder %s131, %s133
    %p140 = scmp.eq.s32.totalorder %s34, 1
    %p141 = por %p139, %p140
    %p142 = scmp.ne.s32.totalorder %s133, %s134
    %p143 = scmp.eq.s32.totalorder %s34, 0
    %p144 = por %p142, %p143
    %p145 = scmp.ne.s32.totalorder %s133, %s134
    %p146 = scmp.eq.s32.totalorder %s35, 1
    %p147 = por %p145, %p146
    %p149 = scmp.ne.s32.totalorder %s134, %s148
    %p150 = scmp.eq.s32.totalorder %s35, 0
    %p151 = por %p149, %p150
    %s153 = sadd.s32 %s152, 1
    %p156 = scmp.eq.s32.totalorder %s29, 1
    %p157 = scmp.ne.s32.totalorder %s152, %s154
    %p158 = scmp.eq.s32.totalorder %s29, 0
    %p159 = por %p157, %p158
    %p160 = scmp.ne.s32.totalorder %s152, %s154
    %p161 = scmp.eq.s32.totalorder %s34, 1
    %p162 = por %p160, %p161
    %p163 = scmp.ne.s32.totalorder %s154, %s155
    %p164 = scmp.eq.s32.totalorder %s34, 0
    %p165 = por %p163, %p164
    %p166 = scmp.ne.s32.totalorder %s154, %s155
    %p167 = scmp.eq.s32.totalorder %s35, 1
    %p168 = por %p166, %p167
    %p170 = scmp.ne.s32.totalorder %s155, %s169
    %p171 = scmp.eq.s32.totalorder %s35, 0
    %p172 = por %p170, %p171
    %s173 = ssub.s32 %s29, %s36
    %p174 = scmp.eq.s32.totalorder %s173, 0
    %s176 = sadd.s32 %s175, 1
    %s177 = scalar_select %p174, %s175, %s176
    %p180 = pneg %p174
    %p181 = scmp.eq.s32.totalorder %s29, 1
    %p182 = por %p180, %p181
    %p183 = scmp.ne.s32.totalorder %s175, %s178
    %p184 = scmp.eq.s32.totalorder %s29, 0
    %p185 = por %p183, %p184
    %p186 = scmp.ne.s32.totalorder %s175, %s178
    %p187 = scmp.eq.s32.totalorder %s34, 1
    %p188 = por %p186, %p187
    %p189 = scmp.ne.s32.totalorder %s178, %s179
    %p190 = scmp.eq.s32.totalorder %s34, 0
    %p191 = por %p189, %p190
    %p192 = scmp.ne.s32.totalorder %s178, %s179
    %p193 = scmp.eq.s32.totalorder %s35, 1
    %p194 = por %p192, %p193
    %p196 = scmp.ne.s32.totalorder %s179, %s195
    %p197 = scmp.eq.s32.totalorder %s35, 0
    %p198 = por %p196, %p197
    %p199 = scmp.le.s32.totalorder 1, %s29
    %p200 = scmp.lt.s32.totalorder %s29, 3
    %p201 = pnand %p199, %p200
    %p202 = pneg %p201
    // Predicated region
    $region9: #{bidaf_forward.34} parent=5 // pred_check
      _
    $region10: #{bidaf_forward.34} parent=5 // pred_check_branch
      %204 = sbr.rel (%p201) target = $region12
    $region11: #{bidaf_forward.34} parent=5 // pred_region
      %s205 = ssub.s32 %s29, 1
      // Predicated region
      $region13: #{bidaf_forward.34} parent=11 // pred_check
        %p206 = pneg %p102
      $region14: #{bidaf_forward.34} parent=11 // pred_check_branch
        %208 = sbr.rel (%p206) target = $region16
      $region15: #{bidaf_forward.34} parent=11 // pred_region
        _
      $region16: #{bidaf_forward.34} parent=11 // pred_fallthru
        _
      // Predicated region
      $region17: #{bidaf_forward.34} parent=11 // pred_check
        %p209 = pneg %p123
      $region18: #{bidaf_forward.34} parent=11 // pred_check_branch
        %211 = sbr.rel (%p209) target = $region20
      $region19: #{bidaf_forward.34} parent=11 // pred_region
        _
      $region20: #{bidaf_forward.34} parent=11 // pred_fallthru
        _
      // Predicated region
      $region21: #{bidaf_forward.34} parent=11 // pred_check
        %p212 = pneg %p144
      $region22: #{bidaf_forward.34} parent=11 // pred_check_branch
        %214 = sbr.rel (%p212) target = $region24
      $region23: #{bidaf_forward.34} parent=11 // pred_region
        _
      $region24: #{bidaf_forward.34} parent=11 // pred_fallthru
        _
      // Predicated region
      $region25: #{bidaf_forward.34} parent=11 // pred_check
        %p215 = pneg %p165
      $region26: #{bidaf_forward.34} parent=11 // pred_check_branch
        %217 = sbr.rel (%p215) target = $region28
      $region27: #{bidaf_forward.34} parent=11 // pred_region
        _
      $region28: #{bidaf_forward.34} parent=11 // pred_fallthru
        _
    $region12: #{bidaf_forward.34} parent=5 // pred_fallthru
      _
    %p218 = scmp.lt.s32.totalorder %s29, 2
    // Predicated region
    $region29: #{bidaf_forward.34} parent=5 // pred_check
      %p219 = pneg %p218
    $region30: #{bidaf_forward.34} parent=5 // pred_check_branch
      %221 = sbr.rel (%p219) target = $region32
    $region31: #{bidaf_forward.34} parent=5 // pred_region
      // Predicated region
      $region33: #{bidaf_forward.34} parent=31 // pred_check
        %p222 = pneg %p49
      $region34: #{bidaf_forward.34} parent=31 // pred_check_branch
        %224 = sbr.rel (%p222) target = $region36
      $region35: #{bidaf_forward.34} parent=31 // pred_region
        %p225 = scmp.lt.s32.totalorder %s29, 1
        %s226 = scalar_select %p225, %s29, 1
        %s227 = smul.addr %s226, 4
        %s228 = smul.addr %s227, 8
        %s229 = scalar_lea.vmem %s2, %s228
      $region36: #{bidaf_forward.34} parent=31 // pred_fallthru
        _
      // Predicated region
      $region37: #{bidaf_forward.34} parent=31 // pred_check
        %p230 = pneg %p75
      $region38: #{bidaf_forward.34} parent=31 // pred_check_branch
        %232 = sbr.rel (%p230) target = $region40
      $region39: #{bidaf_forward.34} parent=31 // pred_region
        %p233 = scmp.lt.s32.totalorder %s29, 1
        %s234 = scalar_select %p233, %s29, 1
        %s235 = smul.addr %s234, 2
        %s236 = smul.addr %s235, 8
        %s237 = scalar_lea.vmem %s3, %s236
      $region40: #{bidaf_forward.34} parent=31 // pred_fallthru
        _
    $region32: #{bidaf_forward.34} parent=5 // pred_fallthru
      _
    %p238 = scmp.le.s32.totalorder 1, %s29
    %p239 = scmp.lt.s32.totalorder %s29, 3
    %p240 = pnand %p238, %p239
    %p241 = pneg %p240
    // Predicated region
    $region41: #{bidaf_forward.34} parent=5 // pred_check
      _
    $region42: #{bidaf_forward.34} parent=5 // pred_check_branch
      %243 = sbr.rel (%p240) target = $region44
    $region43: #{bidaf_forward.34} parent=5 // pred_region
      %s244 = ssub.s32 %s29, 1
      %p245 = scmp.lt.s32.totalorder %s34, 1
      %s246 = scalar_select %p245, %s34, 1
      %s247 = smul.addr %s246, 4
      %s248 = smul.addr %s247, 8
      %s249 = scalar_lea.vmem %s2, %s248
      %p250 = pneg %p55
      %p251 = pneg %p52
      %p252 = scmp.lt.s32.totalorder %s34, 1
      %s253 = scalar_select %p252, %s34, 1
      %s254 = smul.addr %s253, 2
      %s255 = smul.addr %s254, 8
      %s256 = scalar_lea.vmem %s3, %s255
      %p257 = pneg %p81
      %p258 = pneg %p78
      %p259 = pneg %p102
      %p260 = pneg %p99
      %p261 = pneg %p123
      %p262 = pneg %p120
      %p263 = pneg %p144
      %p264 = pneg %p141
      %p265 = pneg %p165
      %p266 = pneg %p162
      %p267 = pneg %p191
      %p268 = pneg %p188
      %p269 = scmp.lt.s32.totalorder %s34, 1
      %s270 = scalar_select %p269, %s34, 1
      %s271 = smul.addr %s270, 8
      %s272 = smul.addr %s271, 8
      %s273 = scalar_lea.vmem %s8, %s272
      %p274 = scmp.lt.s32.totalorder %s34, 1
      %s275 = scalar_select %p274, %s34, 1
      %s276 = smul.addr %s275, 4
      %s277 = smul.addr %s276, 8
      %s278 = scalar_lea.vmem %s2, %s277
      %p279 = scmp.lt.s32.totalorder %s34, 1
      %s280 = scalar_select %p279, %s34, 1
      %s281 = smul.addr %s280, 2
      %s282 = smul.addr %s281, 8
      %s283 = scalar_lea.vmem %s3, %s282
      %p284 = scmp.lt.s32.totalorder %s34, 1
      %s285 = scalar_select %p284, %s34, 1
      %s286 = smul.addr %s285, 8
      %s287 = smul.addr %s286, 8
      %s288 = scalar_lea.vmem %s8, %s287
      %v290 = vld [vmem:[%s278] sm:$0xff]
      %v291 = vld [vmem:[%s278 + $0x8] sm:$0xff]
      %v292 = vld [vmem:[%s278 + $0x10] sm:$0xff]
      %v293 = vld [vmem:[%s278 + $0x18] sm:$0xff]
      %v294 = vld [vmem:[%s283] sm:$0xff]
      %v295 = vld [vmem:[%s283 + $0x8] sm:$0xff]
      %v296 = vld [vmem:[%s4] sm:$0x1]
      %v298 = vperm.slane %v296, 0
      %v300 = vmul.f32 %v290, %v298
      %v301 = vmul.f32 %v291, %v298
      %v302 = vmul.f32 %v292, %v298
      %v303 = vmul.f32 %v293, %v298
      %vm304 = vcmask 523264
      %v305 = vsel %vm304, %v300, 0.0
      %306 = vadd.xlane.f32.xlu0 %v305
      %v307 = vpop.xlane.xlu0 %306
      %v308 = vsel %vm304, %v301, 0.0
      %309 = vadd.xlane.f32.xlu0 %v308
      %v310 = vpop.xlane.xlu0 %309
      %v311 = vsel %vm304, %v302, 0.0
      %312 = vadd.xlane.f32.xlu0 %v311
      %v313 = vpop.xlane.xlu0 %312
      %v314 = vsel %vm304, %v303, 0.0
      %315 = vadd.xlane.f32.xlu0 %v314
      %v316 = vpop.xlane.xlu0 %315
      %v317 = vld [vmem:[%s5] sm:$0x1]
      %v319 = vsel %vm304, %v317, 0
      %v322 = vsel %vm304, %v294, 0
      %v325 = vsel %vm304, %v295, 0
      %327 = vmatpush.xpose.msra.mxu0 0.0
      %328 = vmatpush.xpose.msra.mxu0 0.0
      %329 = vmatpush.xpose.msra.mxu0 0.0
      %330 = vmatpush.xpose.msra.mxu0 0.0
      %331 = vmatpush.xpose.msra.mxu0 0.0
      %332 = vmatpush.xpose.msra.mxu0 0.0
      %333 = vmatpush.xpose.msra.mxu0 0.0
      %334 = vmatpush.xpose.msra.mxu0 0.0
      %335 = vmatpush.xpose.msra.mxu0 0.0
      %336 = vmatpush.xpose.msra.mxu0 0.0
      %337 = vmatpush.xpose.msra.mxu0 0.0
      %338 = vmatpush.xpose.msra.mxu0 0.0
      %339 = vmatpush.xpose.msra.mxu0 0.0
      %340 = vmatpush.xpose.msra.mxu0 0.0
      %341 = vmatpush.xpose.msra.mxu0 %v325
      %342 = vmatpush.xpose.msra.mxu0 %v322
      %343 = vmatmul.f32.gmra.mxu0 %v319
      %v344 = vpop.f32.mrf.mxu0
      %v345 = vadd.f32 0.0, %v344
      %346 = vdwg.mxu0
      %v347 = vld [vmem:[%s6] sm:$0x1]
      %v349 = vperm.slane %v347, 0
      %v351 = vmul.f32 %v290, %v349
      %v352 = vmul.f32 %v291, %v349
      %v353 = vmul.f32 %v292, %v349
      %v354 = vmul.f32 %v293, %v349
      %v355 = vpack.c.bf16 %v352, %v351
      %v356 = vpack.c.bf16 %v354, %v353
      %v357 = vpack.c.bf16 %v295, %v294
      %v359 = vsel %vm304, %v355, 0
      %v362 = vsel %vm304, %v356, 0
      %v365 = vsel %vm304, %v357, 0
      %367 = vmatpush.bf16.xpose.msra.mxu0 0
      %368 = vmatpush.bf16.xpose.msra.mxu0 0
      %369 = vmatpush.bf16.xpose.msra.mxu0 0
      %370 = vmatpush.bf16.xpose.msra.mxu0 0
      %371 = vmatpush.bf16.xpose.msra.mxu0 0
      %372 = vmatpush.bf16.xpose.msra.mxu0 0
      %373 = vmatpush.bf16.xpose.msra.mxu0 0
      %374 = vmatpush.bf16.xpose.msra.mxu0 %v365
      %375 = vmatmul.bf16.gmra.mxu0 %v359
      %v376 = vpop.f32.mrf.mxu0
      %v377 = vadd.f32 0.0, %v376
      %v378 = vpop.f32.mrf.mxu0
      %v379 = vadd.f32 0.0, %v378
      %380 = vmatmul.bf16.gmra.mxu0 %v362
      %v381 = vpop.f32.mrf.mxu0
      %v382 = vadd.f32 0.0, %v381
      %v383 = vpop.f32.mrf.mxu0
      %v384 = vadd.f32 0.0, %v383
      %385 = vdwg.mxu0
      %v386 = vperm.slane %v345, 0
      %v387 = vadd.f32 %v307, %v386
      %v388 = vadd.f32 %v310, %v386
      %v389 = vadd.f32 %v313, %v386
      %v390 = vadd.f32 %v316, %v386
      %v391 = vadd.f32 %v387, %v377
      %v392 = vadd.f32 %v388, %v379
      %v393 = vadd.f32 %v389, %v382
      %v394 = vadd.f32 %v390, %v384
      %v395 = vld [vmem:[#allocation5] sm:$0x1]
      %s396 = vtos %v395
      %v397 = vstv %s396
      %v398 = vadd.f32 %v391, %v397
      %v399 = vadd.f32 %v392, %v397
      %v400 = vadd.f32 %v393, %v397
      %v401 = vadd.f32 %v394, %v397
      %v402 = vlaneseq
      %v403 = vand.u32 %v402, 127
      %v404 = vlaneseq
      %v405 = vshrl.u32 %v404, 7
      %v406 = vadd.s32 %v405, 8
      %v407 = vadd.s32 %v405, 16
      %v408 = vadd.s32 %v405, 24
      %s409 = sld [smem:[#allocation4 + %s34]]
      %v410 = vstv %s409
      %vm411 = vcmp.lt.s32.totalorder %v403, %v410
      %v412 = vsel %vm411, %v398, -1e+30
      %v413 = vsel %vm411, %v399, -1e+30
      %v414 = vsel %vm411, %v400, -1e+30
      %v415 = vsel %vm411, %v401, -1e+30
      %vm416 = vcmask 130048
      %v417 = vsel %vm416, %v412, -inf
      %418 = vmax.xlane.f32.xlu0 %v417
      %v419 = vpop.xlane.xlu0 %418
      %v420 = vsel %vm416, %v413, -inf
      %421 = vmax.xlane.f32.xlu0 %v420
      %v422 = vpop.xlane.xlu0 %421
      %v423 = vsel %vm416, %v414, -inf
      %424 = vmax.xlane.f32.xlu0 %v423
      %v425 = vpop.xlane.xlu0 %424
      %v426 = vsel %vm416, %v415, -inf
      %427 = vmax.xlane.f32.xlu0 %v426
      %v428 = vpop.xlane.xlu0 %427
      %v429 = vsub.f32 %v412, %v419
      %v430 = vsub.f32 %v413, %v422
      %v431 = vsub.f32 %v414, %v425
      %v432 = vsub.f32 %v415, %v428
      %v433 = vmul.f32 %v429, 1.442695
      %v434 = vpow.pop %v433
      %v435 = vmul.f32 %v430, 1.442695
      %v436 = vpow.pop %v435
      %v437 = vmul.f32 %v431, 1.442695
      %v438 = vpow.pop %v437
      %v439 = vmul.f32 %v432, 1.442695
      %v440 = vpow.pop %v439
      %v441 = vsel %vm416, %v434, 0.0
      %442 = vadd.xlane.f32.xlu0 %v441
      %v443 = vpop.xlane.xlu0 %442
      %v444 = vsel %vm416, %v436, 0.0
      %445 = vadd.xlane.f32.xlu0 %v444
      %v446 = vpop.xlane.xlu0 %445
      %v447 = vsel %vm416, %v438, 0.0
      %448 = vadd.xlane.f32.xlu0 %v447
      %v449 = vpop.xlane.xlu0 %448
      %v450 = vsel %vm416, %v440, 0.0
      %451 = vadd.xlane.f32.xlu0 %v450
      %v452 = vpop.xlane.xlu0 %451
      %v453 = vrcp.pop %v443
      %v454 = vmul.f32 %v443, %v453
      %v455 = vsub.f32 1.0, %v454
      %v456 = vmul.f32 %v453, %v455
      %v457 = vadd.f32 %v453, %v456
      %vm458 = vweird.f32 %v443
      %vm459 = vweird.f32 %v453
      %vm460 = vmor %vm458, %vm459
      %v461 = vsel %vm460, %v453, %v457
      %v462 = vand.u32 2147483647, %v443
      %vm463 = vcmp.eq.f32.partialorder %v462, 8.507059e+37
      %v464 = vand.u32 %v443, 2147483648
      %v465 = vor.u32 1.1754944e-38, %v464
      %v466 = vsel %vm463, %v465, %v461
      %v467 = vmul.f32 %v434, %v466
      %v468 = vrcp.pop %v446
      %v469 = vmul.f32 %v446, %v468
      %v470 = vsub.f32 1.0, %v469
      %v471 = vmul.f32 %v468, %v470
      %v472 = vadd.f32 %v468, %v471
      %vm473 = vweird.f32 %v446
      %vm474 = vweird.f32 %v468
      %vm475 = vmor %vm473, %vm474
      %v476 = vsel %vm475, %v468, %v472
      %v477 = vand.u32 2147483647, %v446
      %vm478 = vcmp.eq.f32.partialorder %v477, 8.507059e+37
      %v479 = vand.u32 %v446, 2147483648
      %v480 = vor.u32 1.1754944e-38, %v479
      %v481 = vsel %vm478, %v480, %v476
      %v482 = vmul.f32 %v436, %v481
      %v483 = vrcp.pop %v449
      %v484 = vmul.f32 %v449, %v483
      %v485 = vsub.f32 1.0, %v484
      %v486 = vmul.f32 %v483, %v485
      %v487 = vadd.f32 %v483, %v486
      %vm488 = vweird.f32 %v449
      %vm489 = vweird.f32 %v483
      %vm490 = vmor %vm488, %vm489
      %v491 = vsel %vm490, %v483, %v487
      %v492 = vand.u32 2147483647, %v449
      %vm493 = vcmp.eq.f32.partialorder %v492, 8.507059e+37
      %v494 = vand.u32 %v449, 2147483648
      %v495 = vor.u32 1.1754944e-38, %v494
      %v496 = vsel %vm493, %v495, %v491
      %v497 = vmul.f32 %v438, %v496
      %v498 = vrcp.pop %v452
      %v499 = vmul.f32 %v452, %v498
      %v500 = vsub.f32 1.0, %v499
      %v501 = vmul.f32 %v498, %v500
      %v502 = vadd.f32 %v498, %v501
      %vm503 = vweird.f32 %v452
      %vm504 = vweird.f32 %v498
      %vm505 = vmor %vm503, %vm504
      %v506 = vsel %vm505, %v498, %v502
      %v507 = vand.u32 2147483647, %v452
      %vm508 = vcmp.eq.f32.partialorder %v507, 8.507059e+37
      %v509 = vand.u32 %v452, 2147483648
      %v510 = vor.u32 1.1754944e-38, %v509
      %v511 = vsel %vm508, %v510, %v506
      %v512 = vmul.f32 %v440, %v511
      %s513 = sld [smem:[#allocation3 + %s34]]
      %v514 = vstv %s513
      %vm515 = vcmp.lt.s32.totalorder %v405, %v514
      %vm516 = vcmp.lt.s32.totalorder %v406, %v514
      %vm517 = vcmp.lt.s32.totalorder %v407, %v514
      %vm518 = vcmp.lt.s32.totalorder %v408, %v514
      %v519 = vsel %vm515, %v398, -1e+30
      %v520 = vsel %vm516, %v399, -1e+30
      %v521 = vsel %vm517, %v400, -1e+30
      %v522 = vsel %vm518, %v401, -1e+30
      %v523 = vsel %vm416, %v519, -inf
      %v524 = vsel %vm416, %v520, -inf
      %v525 = vsel %vm416, %v521, -inf
      %v526 = vsel %vm416, %v522, -inf
      %v527 = vmax.f32 %v523, %v524
      %v528 = vmax.f32 %v525, %v526
      %v529 = vmax.f32 %v527, %v528
      %v530 = vrot.slane %v529, 4
      %v531 = vmax.f32 %v529, %v530
      %v532 = vrot.slane %v531, 2
      %v533 = vmax.f32 %v531, %v532
      %v534 = vrot.slane %v533, 1
      %v535 = vmax.f32 %v533, %v534
      %v536 = vsub.f32 %v519, %v535
      %v537 = vsub.f32 %v520, %v535
      %v538 = vsub.f32 %v521, %v535
      %v539 = vsub.f32 %v522, %v535
      %v540 = vmul.f32 %v536, 1.442695
      %v541 = vpow.pop %v540
      %v542 = vmul.f32 %v537, 1.442695
      %v543 = vpow.pop %v542
      %v544 = vmul.f32 %v538, 1.442695
      %v545 = vpow.pop %v544
      %v546 = vmul.f32 %v539, 1.442695
      %v547 = vpow.pop %v546
      %v548 = vsel %vm416, %v541, 0.0
      %v549 = vsel %vm416, %v543, 0.0
      %v550 = vadd.f32 %v548, %v549
      %v551 = vsel %vm416, %v545, 0.0
      %v552 = vadd.f32 %v550, %v551
      %v553 = vsel %vm416, %v547, 0.0
      %v554 = vadd.f32 %v552, %v553
      %v555 = vrot.slane %v554, 4
      %v556 = vadd.f32 %v554, %v555
      %v557 = vrot.slane %v556, 2
      %v558 = vadd.f32 %v556, %v557
      %v559 = vrot.slane %v558, 1
      %v560 = vadd.f32 %v558, %v559
      %v561 = vrcp.pop %v560
      %v562 = vmul.f32 %v560, %v561
      %v563 = vsub.f32 1.0, %v562
      %v564 = vmul.f32 %v561, %v563
      %v565 = vadd.f32 %v561, %v564
      %vm566 = vweird.f32 %v560
      %vm567 = vweird.f32 %v561
      %vm568 = vmor %vm566, %vm567
      %v569 = vsel %vm568, %v561, %v565
      %v570 = vand.u32 2147483647, %v560
      %vm571 = vcmp.eq.f32.partialorder %v570, 8.507059e+37
      %v572 = vand.u32 %v560, 2147483648
      %v573 = vor.u32 1.1754944e-38, %v572
      %v574 = vsel %vm571, %v573, %v569
      %v575 = vmul.f32 %v541, %v574
      %v576 = vmul.f32 %v543, %v574
      %v577 = vmul.f32 %v545, %v574
      %v578 = vmul.f32 %v547, %v574
      %v579 = vpack.c.bf16 %v482, %v467
      %v580 = vpack.c.bf16 %v512, %v497
      %v582 = vsel %vm416, %v579, 0
      %v585 = vsel %vm416, %v580, 0
      %587 = vmatpush.bf16.msra.mxu0 0
      %588 = vmatpush.bf16.msra.mxu0 0
      %589 = vmatpush.bf16.msra.mxu0 0
      %590 = vmatpush.bf16.msra.mxu0 0
      %591 = vmatpush.bf16.msra.mxu0 0
      %592 = vmatpush.bf16.msra.mxu0 0
      %593 = vmatpush.bf16.msra.mxu0 0
      %594 = vmatpush.bf16.msra.mxu0 %v357
      %595 = vmatmul.bf16.gmra.mxu0 %v582
      %v596 = vpop.f32.mrf.mxu0
      %v597 = vadd.f32 0.0, %v596
      %v598 = vpop.f32.mrf.mxu0
      %v599 = vadd.f32 0.0, %v598
      %600 = vmatmul.bf16.gmra.mxu0 %v585
      %v601 = vpop.f32.mrf.mxu0
      %v602 = vadd.f32 0.0, %v601
      %v603 = vpop.f32.mrf.mxu0
      %v604 = vadd.f32 0.0, %v603
      %605 = vdwg.mxu0
      %v606 = vpack.c.bf16 %v576, %v575
      %v607 = vpack.c.bf16 %v578, %v577
      %v608 = vpack.c.bf16 %v291, %v290
      %v609 = vpack.c.bf16 %v293, %v292
      %610 = vxpose.xlu0.c.b16.start [1/8] %v606, 128
      %611 = vxpose.xlu0.c.b16.cont [2/8] %v607, 128
      %612 = vxpose.xlu0.c.b16.cont [3/8] 0, 128
      %613 = vxpose.xlu0.c.b16.cont [4/8] 0, 128
      %614 = vxpose.xlu0.c.b16.cont [5/8] 0, 128
      %615 = vxpose.xlu0.c.b16.cont [6/8] 0, 128
      %616 = vxpose.xlu0.c.b16.cont [7/8] 0, 128
      %617 = vxpose.xlu0.c.b16.end [8/8] 0, 128
      %v618 = vpop.trf.xlu0
      %v619 = vpop.trf.xlu0
      %v620 = vpop.trf.xlu0
      %v621 = vpop.trf.xlu0
      %v622 = vpop.trf.xlu0
      %v623 = vpop.trf.xlu0
      %v624 = vpop.trf.xlu0
      %v625 = vpop.trf.xlu0
      %vm626 = vcmask 261120
      %v628 = vsel %vm626, %v618, 0
      %630 = vmatpush.bf16.msra.mxu0 0
      %631 = vmatpush.bf16.msra.mxu0 0
      %632 = vmatpush.bf16.msra.mxu0 0
      %633 = vmatpush.bf16.msra.mxu0 0
      %634 = vmatpush.bf16.msra.mxu0 0
      %635 = vmatpush.bf16.msra.mxu0 0
      %636 = vmatpush.bf16.msra.mxu0 %v609
      %637 = vmatpush.bf16.msra.mxu0 %v608
      %638 = vmatmul.bf16.gmra.mxu0 %v628
      %v639 = vpop.f32.mrf.mxu0
      %v640 = vadd.f32 0.0, %v639
      %v641 = vpop.f32.mrf.mxu0
      %v642 = vadd.f32 0.0, %v641
      %643 = vdwg.mxu0
      %v644 = vpack.c.bf16 %v642, %v640
      %645 = vmatpush.bf16.msra.mxu0 0
      %646 = vmatpush.bf16.msra.mxu0 0
      %647 = vmatpush.bf16.msra.mxu0 0
      %648 = vmatpush.bf16.msra.mxu0 0
      %649 = vmatpush.bf16.msra.mxu0 0
      %650 = vmatpush.bf16.msra.mxu0 0
      %651 = vmatpush.bf16.msra.mxu0 0
      %652 = vmatpush.bf16.msra.mxu0 %v644
      %653 = vmatmul.bf16.gmra.mxu0 %v582
      %v654 = vpop.f32.mrf.mxu0
      %v655 = vadd.f32 0.0, %v654
      %v656 = vpop.f32.mrf.mxu0
      %v657 = vadd.f32 0.0, %v656
      %658 = vmatmul.bf16.gmra.mxu0 %v585
      %v659 = vpop.f32.mrf.mxu0
      %v660 = vadd.f32 0.0, %v659
      %v661 = vpop.f32.mrf.mxu0
      %v662 = vadd.f32 0.0, %v661
      %663 = vdwg.mxu0
      %664 = vst.msk [vmem:[%s288] sm:$0xff] %vm304, %v290
      %665 = vst.msk [vmem:[%s288 + $0x10] sm:$0xff] %vm304, %v291
      %666 = vst.msk [vmem:[%s288 + $0x20] sm:$0xff] %vm304, %v292
      %667 = vst.msk [vmem:[%s288 + $0x30] sm:$0xff] %vm304, %v293
      %672 = vrot.lane.b32.xlu0 %v597, 64
      %v673 = vpop.permute.xlu0 %672
      %674 = vrot.lane.b32.xlu0 %v599, 64
      %v675 = vpop.permute.xlu0 %674
      %676 = vrot.lane.b32.xlu0 %v602, 64
      %v677 = vpop.permute.xlu0 %676
      %678 = vrot.lane.b32.xlu0 %v604, 64
      %v679 = vpop.permute.xlu0 %678
      %vm684 = vcmask 1048064
      %685 = vst.msk [vmem:[%s288] sm:$0xff] %vm684, %v673
      %686 = vst.msk [vmem:[%s288 + $0x10] sm:$0xff] %vm684, %v675
      %687 = vst.msk [vmem:[%s288 + $0x20] sm:$0xff] %vm684, %v677
      %688 = vst.msk [vmem:[%s288 + $0x30] sm:$0xff] %vm684, %v679
      %v689 = vmul.f32 %v290, %v597
      %v690 = vmul.f32 %v291, %v599
      %v691 = vmul.f32 %v292, %v602
      %v692 = vmul.f32 %v293, %v604
      %693 = vst.msk [vmem:[%s288 + $0x8] sm:$0xff] %vm304, %v689
      %694 = vst.msk [vmem:[%s288 + $0x18] sm:$0xff] %vm304, %v690
      %695 = vst.msk [vmem:[%s288 + $0x28] sm:$0xff] %vm304, %v691
      %696 = vst.msk [vmem:[%s288 + $0x38] sm:$0xff] %vm304, %v692
      %v697 = vmul.f32 %v290, %v655
      %v698 = vmul.f32 %v291, %v657
      %v699 = vmul.f32 %v292, %v660
      %v700 = vmul.f32 %v293, %v662
      %705 = vrot.lane.b32.xlu0 %v697, 64
      %v706 = vpop.permute.xlu0 %705
      %707 = vrot.lane.b32.xlu0 %v698, 64
      %v708 = vpop.permute.xlu0 %707
      %709 = vrot.lane.b32.xlu0 %v699, 64
      %v710 = vpop.permute.xlu0 %709
      %711 = vrot.lane.b32.xlu0 %v700, 64
      %v712 = vpop.permute.xlu0 %711
      %717 = vst.msk [vmem:[%s288 + $0x8] sm:$0xff] %vm684, %v706
      %718 = vst.msk [vmem:[%s288 + $0x18] sm:$0xff] %vm684, %v708
      %719 = vst.msk [vmem:[%s288 + $0x28] sm:$0xff] %vm684, %v710
      %720 = vst.msk [vmem:[%s288 + $0x38] sm:$0xff] %vm684, %v712
      %p721 = scmp.lt.s32.totalorder %s34, 1
      %s722 = scalar_select %p721, %s34, 1
      %s723 = smul.addr %s722, 8
      %s724 = smul.addr %s723, 8
      %s725 = scalar_lea.vmem %s8, %s724
      // Predicated region
      $region45: #{bidaf_forward.34} parent=43 // pred_check
        %p726 = pneg %p188
      $region46: #{bidaf_forward.34} parent=43 // pred_check_branch
        %728 = sbr.rel (%p726) target = $region48
      $region47: #{bidaf_forward.34} parent=43 // pred_region
        _
      $region48: #{bidaf_forward.34} parent=43 // pred_fallthru
        _
    $region44: #{bidaf_forward.34} parent=5 // pred_fallthru
      _
    %p729 = scmp.le.s32.totalorder 2, %s29
    // Predicated region
    $region49: #{bidaf_forward.34} parent=5 // pred_check
      %p730 = pneg %p729
    $region50: #{bidaf_forward.34} parent=5 // pred_check_branch
      %732 = sbr.rel (%p730) target = $region52
    $region51: #{bidaf_forward.34} parent=5 // pred_region
      %s733 = ssub.s32 %s29, 2
      // Predicated region
      $region53: #{bidaf_forward.34} parent=51 // pred_check
        %p734 = pneg %p194
      $region54: #{bidaf_forward.34} parent=51 // pred_check_branch
        %736 = sbr.rel (%p734) target = $region56
      $region55: #{bidaf_forward.34} parent=51 // pred_region
        %p737 = scmp.lt.s32.totalorder %s35, 1
        %s738 = scalar_select %p737, %s35, 1
        %s739 = smul.addr %s738, 8
        %s740 = smul.addr %s739, 8
        %s741 = scalar_lea.vmem %s8, %s740
      $region56: #{bidaf_forward.34} parent=51 // pred_fallthru
        _
    $region52: #{bidaf_forward.34} parent=5 // pred_fallthru
      _
  $region6: #{bidaf_forward.34} parent=0 // loop_footer
    %s33 = sadd.s32 1, %s29
  $region7: #{bidaf_forward.34} parent=0 // loop_footer_branch
    %28 = sbr.rel target = $region3
  $region8: #{bidaf_forward.34} parent=0 // loop_exit
    _

// kernel: bidaf_forward.35
$region0: #{bidaf_forward.35}
  #allocation0 [shape = 'u32[]', space=smem, size = 0x4, offset = 0x4, fixed_abs, tag = 'smem constant byte address 0x4 - core index']
  #allocation1 [shape = 'u32[72,128]{1,0:T(1,128)}', space=vmem, size = 0x9000, scoped, tag = 'internal scratch']
  %s0 = inlined_call_operand.vmem [shape: f32[64,256], index: 0, kind: input, shape index: {}]
  %s1 = inlined_call_operand.vmem [shape: f32[256,128], index: 1, kind: input, shape index: {}]
  %s2 = inlined_call_operand.vmem [shape: f32[1,128], index: 2, kind: input, shape index: {}]
  %s3 = inlined_call_operand.vmem [shape: f32[64,128], index: 3, kind: output, shape index: {}]
  %s4 = sld [smem:[#allocation0]]
  $region22: #{bidaf_forward.35} parent=0
    _
  %s6 = ssub.s32 1, %s4
  %s7 = scalar_select 0, %s6, %s4
  // Predicated region
  $region2: #{bidaf_forward.35} parent=0 // pred_check
    _
  $region3: #{bidaf_forward.35} parent=0 // pred_check_branch
    %9 = sbr.rel (0) target = $region5
  $region4: #{bidaf_forward.35} parent=0 // pred_region
    _
  $region5: #{bidaf_forward.35} parent=0 // pred_fallthru
    _
  // Predicated region
  $region6: #{bidaf_forward.35} parent=0 // pred_check
    _
  $region7: #{bidaf_forward.35} parent=0 // pred_check_branch
    %11 = sbr.rel (0) target = $region9
  $region8: #{bidaf_forward.35} parent=0 // pred_region
    _
  $region9: #{bidaf_forward.35} parent=0 // pred_fallthru
    _
  // Predicated region
  $region10: #{bidaf_forward.35} parent=0 // pred_check
    _
  $region11: #{bidaf_forward.35} parent=0 // pred_check_branch
    %13 = sbr.rel (0) target = $region13
  $region12: #{bidaf_forward.35} parent=0 // pred_region
    _
  $region13: #{bidaf_forward.35} parent=0 // pred_fallthru
    _
  %v14 = vld [vmem:[%s0] sm:$0xff]
  %v15 = vld [vmem:[%s0 + $0x8] sm:$0xff]
  %v16 = vld [vmem:[%s0 + $0x10] sm:$0xff]
  %v17 = vld [vmem:[%s0 + $0x18] sm:$0xff]
  %v18 = vld [vmem:[%s0 + $0x20] sm:$0xff]
  %v19 = vld [vmem:[%s0 + $0x28] sm:$0xff]
  %v20 = vld [vmem:[%s0 + $0x30] sm:$0xff]
  %v21 = vld [vmem:[%s0 + $0x38] sm:$0xff]
  %v22 = vld [vmem:[%s0 + $0x40] sm:$0xff]
  %v23 = vld [vmem:[%s0 + $0x48] sm:$0xff]
  %v24 = vld [vmem:[%s0 + $0x50] sm:$0xff]
  %v25 = vld [vmem:[%s0 + $0x58] sm:$0xff]
  %v26 = vld [vmem:[%s0 + $0x60] sm:$0xff]
  %v27 = vld [vmem:[%s0 + $0x68] sm:$0xff]
  %v28 = vld [vmem:[%s0 + $0x70] sm:$0xff]
  %v29 = vld [vmem:[%s0 + $0x78] sm:$0xff]
  %v30 = vpack.c.bf16 %v16, %v14
  %v31 = vpack.c.bf16 %v17, %v15
  %v32 = vpack.c.bf16 %v20, %v18
  %v33 = vpack.c.bf16 %v21, %v19
  %v34 = vpack.c.bf16 %v24, %v22
  %v35 = vpack.c.bf16 %v25, %v23
  %v36 = vpack.c.bf16 %v28, %v26
  %v37 = vpack.c.bf16 %v29, %v27
  %v38 = vld [vmem:[%s1] sm:$0xff]
  %v39 = vld [vmem:[%s1 + $0x8] sm:$0xff]
  %v40 = vld [vmem:[%s1 + $0x10] sm:$0xff]
  %v41 = vld [vmem:[%s1 + $0x18] sm:$0xff]
  %v42 = vld [vmem:[%s1 + $0x20] sm:$0xff]
  %v43 = vld [vmem:[%s1 + $0x28] sm:$0xff]
  %v44 = vld [vmem:[%s1 + $0x30] sm:$0xff]
  %v45 = vld [vmem:[%s1 + $0x38] sm:$0xff]
  %v46 = vld [vmem:[%s1 + $0x40] sm:$0xff]
  %v47 = vld [vmem:[%s1 + $0x48] sm:$0xff]
  %v48 = vld [vmem:[%s1 + $0x50] sm:$0xff]
  %v49 = vld [vmem:[%s1 + $0x58] sm:$0xff]
  %v50 = vld [vmem:[%s1 + $0x60] sm:$0xff]
  %v51 = vld [vmem:[%s1 + $0x68] sm:$0xff]
  %v52 = vld [vmem:[%s1 + $0x70] sm:$0xff]
  %v53 = vld [vmem:[%s1 + $0x78] sm:$0xff]
  %v54 = vld [vmem:[%s1 + $0x80] sm:$0xff]
  %v55 = vld [vmem:[%s1 + $0x88] sm:$0xff]
  %v56 = vld [vmem:[%s1 + $0x90] sm:$0xff]
  %v57 = vld [vmem:[%s1 + $0x98] sm:$0xff]
  %v58 = vld [vmem:[%s1 + $0xa0] sm:$0xff]
  %v59 = vld [vmem:[%s1 + $0xa8] sm:$0xff]
  %v60 = vld [vmem:[%s1 + $0xb0] sm:$0xff]
  %v61 = vld [vmem:[%s1 + $0xb8] sm:$0xff]
  %v62 = vld [vmem:[%s1 + $0xc0] sm:$0xff]
  %v63 = vld [vmem:[%s1 + $0xc8] sm:$0xff]
  %v64 = vld [vmem:[%s1 + $0xd0] sm:$0xff]
  %v65 = vld [vmem:[%s1 + $0xd8] sm:$0xff]
  %v66 = vld [vmem:[%s1 + $0xe0] sm:$0xff]
  %v67 = vld [vmem:[%s1 + $0xe8] sm:$0xff]
  %v68 = vld [vmem:[%s1 + $0xf0] sm:$0xff]
  %v69 = vld [vmem:[%s1 + $0xf8] sm:$0xff]
  %v70 = vpack.c.bf16 %v39, %v38
  %v71 = vpack.c.bf16 %v41, %v40
  %v72 = vpack.c.bf16 %v43, %v42
  %v73 = vpack.c.bf16 %v45, %v44
  %v74 = vpack.c.bf16 %v47, %v46
  %v75 = vpack.c.bf16 %v49, %v48
  %v76 = vpack.c.bf16 %v51, %v50
  %v77 = vpack.c.bf16 %v53, %v52
  %v78 = vpack.c.bf16 %v55, %v54
  %v79 = vpack.c.bf16 %v57, %v56
  %v80 = vpack.c.bf16 %v59, %v58
  %v81 = vpack.c.bf16 %v61, %v60
  %v82 = vpack.c.bf16 %v63, %v62
  %v83 = vpack.c.bf16 %v65, %v64
  %v84 = vpack.c.bf16 %v67, %v66
  %v85 = vpack.c.bf16 %v69, %v68
  %v86 = vld [vmem:[%s2] sm:$0x1]
  %v88 = vperm.slane %v86, 0
  %90 = vmatpush.bf16.msra.mxu0 %v77
  %91 = vmatpush.bf16.msra.mxu0 %v76
  %92 = vmatpush.bf16.msra.mxu0 %v75
  %93 = vmatpush.bf16.msra.mxu0 %v74
  %94 = vmatpush.bf16.msra.mxu0 %v73
  %95 = vmatpush.bf16.msra.mxu0 %v72
  %96 = vmatpush.bf16.msra.mxu0 %v71
  %97 = vmatpush.bf16.msra.mxu0 %v70
  %98 = vmatmul.bf16.gmra.mxu0 %v30
  %v99 = vpop.f32.mrf.mxu0
  %v100 = vadd.f32 %v88, %v99
  %v101 = vpop.f32.mrf.mxu0
  %v102 = vadd.f32 %v88, %v101
  %103 = vmatmul.bf16.gmra.mxu0 %v32
  %v104 = vpop.f32.mrf.mxu0
  %v105 = vadd.f32 %v88, %v104
  %v106 = vpop.f32.mrf.mxu0
  %v107 = vadd.f32 %v88, %v106
  %108 = vmatmul.bf16.gmra.mxu0 %v34
  %v109 = vpop.f32.mrf.mxu0
  %v110 = vadd.f32 %v88, %v109
  %v111 = vpop.f32.mrf.mxu0
  %v112 = vadd.f32 %v88, %v111
  %113 = vmatmul.bf16.gmra.mxu0 %v36
  %v114 = vpop.f32.mrf.mxu0
  %v115 = vadd.f32 %v88, %v114
  %v116 = vpop.f32.mrf.mxu0
  %v117 = vadd.f32 %v88, %v116
  %118 = vdwg.mxu0
  %119 = vmatpush.bf16.msra.mxu0 %v85
  %120 = vmatpush.bf16.msra.mxu0 %v84
  %121 = vmatpush.bf16.msra.mxu0 %v83
  %122 = vmatpush.bf16.msra.mxu0 %v82
  %123 = vmatpush.bf16.msra.mxu0 %v81
  %124 = vmatpush.bf16.msra.mxu0 %v80
  %125 = vmatpush.bf16.msra.mxu0 %v79
  %126 = vmatpush.bf16.msra.mxu0 %v78
  %127 = vmatmul.bf16.gmra.mxu0 %v31
  %v128 = vpop.f32.mrf.mxu0
  %v129 = vadd.f32 %v100, %v128
  %v130 = vpop.f32.mrf.mxu0
  %v131 = vadd.f32 %v102, %v130
  %132 = vmatmul.bf16.gmra.mxu0 %v33
  %v133 = vpop.f32.mrf.mxu0
  %v134 = vadd.f32 %v105, %v133
  %v135 = vpop.f32.mrf.mxu0
  %v136 = vadd.f32 %v107, %v135
  %137 = vmatmul.bf16.gmra.mxu0 %v35
  %v138 = vpop.f32.mrf.mxu0
  %v139 = vadd.f32 %v110, %v138
  %v140 = vpop.f32.mrf.mxu0
  %v141 = vadd.f32 %v112, %v140
  %142 = vmatmul.bf16.gmra.mxu0 %v37
  %v143 = vpop.f32.mrf.mxu0
  %v144 = vadd.f32 %v115, %v143
  %v145 = vpop.f32.mrf.mxu0
  %v146 = vadd.f32 %v117, %v145
  %147 = vdwg.mxu0
  %148 = vst [vmem:[%s3] sm:$0xff] %v129
  %149 = vst [vmem:[%s3 + $0x8] sm:$0xff] %v131
  %150 = vst [vmem:[%s3 + $0x10] sm:$0xff] %v134
  %151 = vst [vmem:[%s3 + $0x18] sm:$0xff] %v136
  %152 = vst [vmem:[%s3 + $0x20] sm:$0xff] %v139
  %153 = vst [vmem:[%s3 + $0x28] sm:$0xff] %v141
  %154 = vst [vmem:[%s3 + $0x30] sm:$0xff] %v144
  %155 = vst [vmem:[%s3 + $0x38] sm:$0xff] %v146
  // Predicated region
  $region14: #{bidaf_forward.35} parent=0 // pred_check
    _
  $region15: #{bidaf_forward.35} parent=0 // pred_check_branch
    %157 = sbr.rel (0) target = $region17
  $region16: #{bidaf_forward.35} parent=0 // pred_region
    _
  $region17: #{bidaf_forward.35} parent=0 // pred_fallthru
    _
  // Predicated region
  $region18: #{bidaf_forward.35} parent=0 // pred_check
    _
  $region19: #{bidaf_forward.35} parent=0 // pred_check_branch
    %159 = sbr.rel (0) target = $region21
  $region20: #{bidaf_forward.35} parent=0 // pred_region
    _
  $region21: #{bidaf_forward.35} parent=0 // pred_fallthru
    _

// kernel: bidaf_forward.39
$region0: #{bidaf_forward.39}
  #allocation0 [shape = 'u32[]', space=smem, size = 0x4, offset = 0x4, fixed_abs, tag = 'smem constant byte address 0x4 - core index']
  #allocation1 [shape = 'u32[72,128]{1,0:T(1,128)}', space=vmem, size = 0x9000, scoped, tag = 'internal scratch']
  %s0 = inlined_call_operand.vmem [shape: f32[64,64], index: 0, kind: input, shape index: {}]
  %s1 = inlined_call_operand.vmem [shape: f32[64,128], index: 1, kind: input, shape index: {}]
  %s2 = inlined_call_operand.vmem [shape: f32[1,128], index: 2, kind: input, shape index: {}]
  %s3 = inlined_call_operand.vmem [shape: f32[64,128], index: 3, kind: output, shape index: {}]
  %s4 = sld [smem:[#allocation0]]
  $region22: #{bidaf_forward.39} parent=0
    _
  %s6 = ssub.s32 1, %s4
  %s7 = scalar_select 0, %s6, %s4
  // Predicated region
  $region2: #{bidaf_forward.39} parent=0 // pred_check
    _
  $region3: #{bidaf_forward.39} parent=0 // pred_check_branch
    %9 = sbr.rel (0) target = $region5
  $region4: #{bidaf_forward.39} parent=0 // pred_region
    _
  $region5: #{bidaf_forward.39} parent=0 // pred_fallthru
    _
  // Predicated region
  $region6: #{bidaf_forward.39} parent=0 // pred_check
    _
  $region7: #{bidaf_forward.39} parent=0 // pred_check_branch
    %11 = sbr.rel (0) target = $region9
  $region8: #{bidaf_forward.39} parent=0 // pred_region
    _
  $region9: #{bidaf_forward.39} parent=0 // pred_fallthru
    _
  // Predicated region
  $region10: #{bidaf_forward.39} parent=0 // pred_check
    _
  $region11: #{bidaf_forward.39} parent=0 // pred_check_branch
    %13 = sbr.rel (0) target = $region13
  $region12: #{bidaf_forward.39} parent=0 // pred_region
    _
  $region13: #{bidaf_forward.39} parent=0 // pred_fallthru
    _
  %v15 = vld [vmem:[%s0] sm:$0xff]
  %v16 = vld [vmem:[%s0 + $0x8] sm:$0xff]
  %v17 = vld [vmem:[%s0 + $0x10] sm:$0xff]
  %v18 = vld [vmem:[%s0 + $0x18] sm:$0xff]
  %v19 = vld [vmem:[%s0 + $0x20] sm:$0xff]
  %v20 = vld [vmem:[%s0 + $0x28] sm:$0xff]
  %v21 = vld [vmem:[%s0 + $0x30] sm:$0xff]
  %v22 = vld [vmem:[%s0 + $0x38] sm:$0xff]
  %v23 = vpack.c.bf16 %v16, %v15
  %v24 = vpack.c.bf16 %v18, %v17
  %v25 = vpack.c.bf16 %v20, %v19
  %v26 = vpack.c.bf16 %v22, %v21
  %v27 = vld [vmem:[%s1] sm:$0xff]
  %v28 = vld [vmem:[%s1 + $0x8] sm:$0xff]
  %v29 = vld [vmem:[%s1 + $0x10] sm:$0xff]
  %v30 = vld [vmem:[%s1 + $0x18] sm:$0xff]
  %v31 = vld [vmem:[%s1 + $0x20] sm:$0xff]
  %v32 = vld [vmem:[%s1 + $0x28] sm:$0xff]
  %v33 = vld [vmem:[%s1 + $0x30] sm:$0xff]
  %v34 = vld [vmem:[%s1 + $0x38] sm:$0xff]
  %v35 = vpack.c.bf16 %v28, %v27
  %v36 = vpack.c.bf16 %v30, %v29
  %v37 = vpack.c.bf16 %v32, %v31
  %v38 = vpack.c.bf16 %v34, %v33
  %v39 = vld [vmem:[%s2] sm:$0x1]
  %v41 = vperm.slane %v39, 0
  %vm43 = vcmask 523264
  %v45 = vsel %vm43, %v23, 0
  %v48 = vsel %vm43, %v24, 0
  %v51 = vsel %vm43, %v25, 0
  %v54 = vsel %vm43, %v26, 0
  %56 = vmatpush.bf16.msra.mxu0 0
  %57 = vmatpush.bf16.msra.mxu0 0
  %58 = vmatpush.bf16.msra.mxu0 0
  %59 = vmatpush.bf16.msra.mxu0 0
  %60 = vmatpush.bf16.msra.mxu0 %v38
  %61 = vmatpush.bf16.msra.mxu0 %v37
  %62 = vmatpush.bf16.msra.mxu0 %v36
  %63 = vmatpush.bf16.msra.mxu0 %v35
  %64 = vmatmul.bf16.gmra.mxu0 %v45
  %v65 = vpop.f32.mrf.mxu0
  %v66 = vadd.f32 %v41, %v65
  %v67 = vpop.f32.mrf.mxu0
  %v68 = vadd.f32 %v41, %v67
  %69 = vmatmul.bf16.gmra.mxu0 %v48
  %v70 = vpop.f32.mrf.mxu0
  %v71 = vadd.f32 %v41, %v70
  %v72 = vpop.f32.mrf.mxu0
  %v73 = vadd.f32 %v41, %v72
  %74 = vmatmul.bf16.gmra.mxu0 %v51
  %v75 = vpop.f32.mrf.mxu0
  %v76 = vadd.f32 %v41, %v75
  %v77 = vpop.f32.mrf.mxu0
  %v78 = vadd.f32 %v41, %v77
  %79 = vmatmul.bf16.gmra.mxu0 %v54
  %v80 = vpop.f32.mrf.mxu0
  %v81 = vadd.f32 %v41, %v80
  %v82 = vpop.f32.mrf.mxu0
  %v83 = vadd.f32 %v41, %v82
  %84 = vdwg.mxu0
  %85 = vst [vmem:[%s3] sm:$0xff] %v66
  %86 = vst [vmem:[%s3 + $0x8] sm:$0xff] %v68
  %87 = vst [vmem:[%s3 + $0x10] sm:$0xff] %v71
  %88 = vst [vmem:[%s3 + $0x18] sm:$0xff] %v73
  %89 = vst [vmem:[%s3 + $0x20] sm:$0xff] %v76
  %90 = vst [vmem:[%s3 + $0x28] sm:$0xff] %v78
  %91 = vst [vmem:[%s3 + $0x30] sm:$0xff] %v81
  %92 = vst [vmem:[%s3 + $0x38] sm:$0xff] %v83
  // Predicated region
  $region14: #{bidaf_forward.39} parent=0 // pred_check
    _
  $region15: #{bidaf_forward.39} parent=0 // pred_check_branch
    %94 = sbr.rel (0) target = $region17
  $region16: #{bidaf_forward.39} parent=0 // pred_region
    _
  $region17: #{bidaf_forward.39} parent=0 // pred_fallthru
    _
  // Predicated region
  $region18: #{bidaf_forward.39} parent=0 // pred_check
    _
  $region19: #{bidaf_forward.39} parent=0 // pred_check_branch
    %96 = sbr.rel (0) target = $region21
  $region20: #{bidaf_forward.39} parent=0 // pred_region
    _
  $region21: #{bidaf_forward.39} parent=0 // pred_fallthru
    _

// kernel: bidaf_forward.47
$region0: #{bidaf_forward.47}
  #allocation0 [shape = 'u32[]', space=smem, size = 0x4, offset = 0x4, fixed_abs, tag = 'smem constant byte address 0x4 - core index']
  #allocation1 [shape = 'u32[72,128]{1,0:T(1,128)}', space=vmem, size = 0x9000, scoped, tag = 'internal scratch']
  #allocation2 [shape = 's32[1]{0}', space=sflag, size = 0x4, scoped, tag = 'scoped memory for bidaf_forward.47']
  #allocation3 [shape = 'u8[512]{0}', space=smem, size = 0x200, scoped, tag = 'prefetched SMEM operand 0']
  %s0 = inlined_call_operand.vmem [shape: s32[2], index: 0, kind: input, shape index: {}]
  %s1 = inlined_call_operand.vmem [shape: f32[2,32,256], index: 1, kind: input, shape index: {}]
  %s2 = inlined_call_operand.vmem [shape: f32[2,32,64], index: 2, kind: input, shape index: {}]
  %s3 = inlined_call_operand.vmem [shape: f32[2,32,64], index: 3, kind: input, shape index: {}]
  %s4 = inlined_call_operand.vmem [shape: f32[1,256], index: 4, kind: input, shape index: {}]
  %s5 = inlined_call_operand.vmem [shape: f32[1,64], index: 5, kind: input, shape index: {}]
  %s6 = inlined_call_operand.vmem [shape: f32[1,256], index: 6, kind: input, shape index: {}]
  %s7 = inlined_call_operand.vmem [shape: f32[1,64], index: 7, kind: input, shape index: {}]
  %s8 = inlined_call_operand.vmem [shape: f32[1,2], index: 8, kind: input, shape index: {}]
  %s9 = inlined_call_operand.vmem [shape: f32[2,32,1], index: 9, kind: output, shape index: {0}]
  %s10 = inlined_call_operand.vmem [shape: f32[2,32,1], index: 10, kind: output, shape index: {1}]
  %11 = xla_tuple %s9, %s10
  %s12 = sld [smem:[#allocation0]]
  $region73: #{bidaf_forward.47} parent=0
    _
  %s14 = ssub.s32 1, %s12
  %s15 = scalar_select 0, %s14, %s12
  %s17 = sshll.u32 %s0, 4
  %s18 = int_to_ptr.vmem [resolvable:$true] %s17
  %20 = dma.vmem_to_smem %s18, 16, [#allocation3], [#allocation2]
  %22 = dma.done [#allocation2], 16
  %23 = sfence
  loop: start=0, step=1, limit=4
  $region2: #{bidaf_forward.47} parent=0 // loop_pre_header
    _
  $region3: #{bidaf_forward.47} parent=0 // loop_header
    %s25 = sphi 0, %s29
    %p26 = scmp.ge.s32.totalorder %s25, 4
    %s35 = sphi 0, %s37
    %s38 = sphi 0, %s35
    %s39 = sphi 0, %s38
    %s55 = sphi 0, %s39
    %s61 = sphi 0, %s63
    %s64 = sphi 0, %s61
    %s65 = sphi 0, %s64
    %s81 = sphi 0, %s65
    %s87 = sphi 0, %s89
    %s90 = sphi 0, %s87
    %s91 = sphi 0, %s90
    %s107 = sphi 0, %s91
    %s111 = sphi 0, %s111
    %s113 = sphi 0, %s111
    %s114 = sphi 0, %s113
    %s128 = sphi 0, %s114
    %s132 = sphi 0, %s132
    %s134 = sphi 0, %s132
    %s135 = sphi 0, %s134
    %s149 = sphi 0, %s135
    %s153 = sphi 0, %s153
    %s155 = sphi 0, %s153
    %s156 = sphi 0, %s155
    %s170 = sphi 0, %s156
    %s174 = sphi 0, %s174
    %s176 = sphi 0, %s174
    %s177 = sphi 0, %s176
    %s191 = sphi 0, %s177
    %s195 = sphi 0, %s195
    %s197 = sphi 0, %s195
    %s198 = sphi 0, %s197
    %s212 = sphi 0, %s198
    %s218 = sphi 0, %s220
    %s221 = sphi 0, %s218
    %s222 = sphi 0, %s221
    %s238 = sphi 0, %s222
    %s244 = sphi 0, %s246
    %s247 = sphi 0, %s244
    %s248 = sphi 0, %s247
    %s264 = sphi 0, %s248
  $region4: #{bidaf_forward.47} parent=0 // loop_header_branch
    %28 = sbr.rel (%p26) target = $region8
  $region5: #{bidaf_forward.47} parent=0 // loop_body
    %s30 = ssub.s32 %s25, 1
    %s31 = ssub.s32 %s25, 2
    %s32 = sadd.s32 %s25, 1
    %s33 = ssub.s32 %s25, %s32
    %p34 = scmp.eq.s32.totalorder %s33, 0
    %s36 = sadd.s32 %s35, 1
    %s37 = scalar_select %p34, %s35, %s36
    %p40 = pneg %p34
    %p41 = scmp.eq.s32.totalorder %s25, 1
    %p42 = por %p40, %p41
    %p43 = scmp.ne.s32.totalorder %s35, %s38
    %p44 = scmp.eq.s32.totalorder %s25, 0
    %p45 = por %p43, %p44
    %p46 = scmp.ne.s32.totalorder %s35, %s38
    %p47 = scmp.eq.s32.totalorder %s30, 1
    %p48 = por %p46, %p47
    %p49 = scmp.ne.s32.totalorder %s38, %s39
    %p50 = scmp.eq.s32.totalorder %s30, 0
    %p51 = por %p49, %p50
    %p52 = scmp.ne.s32.totalorder %s38, %s39
    %p53 = scmp.eq.s32.totalorder %s31, 1
    %p54 = por %p52, %p53
    %p56 = scmp.ne.s32.totalorder %s39, %s55
    %p57 = scmp.eq.s32.totalorder %s31, 0
    %p58 = por %p56, %p57
    %s59 = ssub.s32 %s25, %s32
    %p60 = scmp.eq.s32.totalorder %s59, 0
    %s62 = sadd.s32 %s61, 1
    %s63 = scalar_select %p60, %s61, %s62
    %p66 = pneg %p60
    %p67 = scmp.eq.s32.totalorder %s25, 1
    %p68 = por %p66, %p67
    %p69 = scmp.ne.s32.totalorder %s61, %s64
    %p70 = scmp.eq.s32.totalorder %s25, 0
    %p71 = por %p69, %p70
    %p72 = scmp.ne.s32.totalorder %s61, %s64
    %p73 = scmp.eq.s32.totalorder %s30, 1
    %p74 = por %p72, %p73
    %p75 = scmp.ne.s32.totalorder %s64, %s65
    %p76 = scmp.eq.s32.totalorder %s30, 0
    %p77 = por %p75, %p76
    %p78 = scmp.ne.s32.totalorder %s64, %s65
    %p79 = scmp.eq.s32.totalorder %s31, 1
    %p80 = por %p78, %p79
    %p82 = scmp.ne.s32.totalorder %s65, %s81
    %p83 = scmp.eq.s32.totalorder %s31, 0
    %p84 = por %p82, %p83
    %s85 = ssub.s32 %s25, %s32
    %p86 = scmp.eq.s32.totalorder %s85, 0
    %s88 = sadd.s32 %s87, 1
    %s89 = scalar_select %p86, %s87, %s88
    %p92 = pneg %p86
    %p93 = scmp.eq.s32.totalorder %s25, 1
    %p94 = por %p92, %p93
    %p95 = scmp.ne.s32.totalorder %s87, %s90
    %p96 = scmp.eq.s32.totalorder %s25, 0
    %p97 = por %p95, %p96
    %p98 = scmp.ne.s32.totalorder %s87, %s90
    %p99 = scmp.eq.s32.totalorder %s30, 1
    %p100 = por %p98, %p99
    %p101 = scmp.ne.s32.totalorder %s90, %s91
    %p102 = scmp.eq.s32.totalorder %s30, 0
    %p103 = por %p101, %p102
    %p104 = scmp.ne.s32.totalorder %s90, %s91
    %p105 = scmp.eq.s32.totalorder %s31, 1
    %p106 = por %p104, %p105
    %p108 = scmp.ne.s32.totalorder %s91, %s107
    %p109 = scmp.eq.s32.totalorder %s31, 0
    %p110 = por %p108, %p109
    %s112 = sadd.s32 %s111, 1
    %p115 = scmp.eq.s32.totalorder %s25, 1
    %p116 = scmp.ne.s32.totalorder %s111, %s113
    %p117 = scmp.eq.s32.totalorder %s25, 0
    %p118 = por %p116, %p117
    %p119 = scmp.ne.s32.totalorder %s111, %s113
    %p120 = scmp.eq.s32.totalorder %s30, 1
    %p121 = por %p119, %p120
    %p122 = scmp.ne.s32.totalorder %s113, %s114
    %p123 = scmp.eq.s32.totalorder %s30, 0
    %p124 = por %p122, %p123
    %p125 = scmp.ne.s32.totalorder %s113, %s114
    %p126 = scmp.eq.s32.totalorder %s31, 1
    %p127 = por %p125, %p126
    %p129 = scmp.ne.s32.totalorder %s114, %s128
    %p130 = scmp.eq.s32.totalorder %s31, 0
    %p131 = por %p129, %p130
    %s133 = sadd.s32 %s132, 1
    %p136 = scmp.eq.s32.totalorder %s25, 1
    %p137 = scmp.ne.s32.totalorder %s132, %s134
    %p138 = scmp.eq.s32.totalorder %s25, 0
    %p139 = por %p137, %p138
    %p140 = scmp.ne.s32.totalorder %s132, %s134
    %p141 = scmp.eq.s32.totalorder %s30, 1
    %p142 = por %p140, %p141
    %p143 = scmp.ne.s32.totalorder %s134, %s135
    %p144 = scmp.eq.s32.totalorder %s30, 0
    %p145 = por %p143, %p144
    %p146 = scmp.ne.s32.totalorder %s134, %s135
    %p147 = scmp.eq.s32.totalorder %s31, 1
    %p148 = por %p146, %p147
    %p150 = scmp.ne.s32.totalorder %s135, %s149
    %p151 = scmp.eq.s32.totalorder %s31, 0
    %p152 = por %p150, %p151
    %s154 = sadd.s32 %s153, 1
    %p157 = scmp.eq.s32.totalorder %s25, 1
    %p158 = scmp.ne.s32.totalorder %s153, %s155
    %p159 = scmp.eq.s32.totalorder %s25, 0
    %p160 = por %p158, %p159
    %p161 = scmp.ne.s32.totalorder %s153, %s155
    %p162 = scmp.eq.s32.totalorder %s30, 1
    %p163 = por %p161, %p162
    %p164 = scmp.ne.s32.totalorder %s155, %s156
    %p165 = scmp.eq.s32.totalorder %s30, 0
    %p166 = por %p164, %p165
    %p167 = scmp.ne.s32.totalorder %s155, %s156
    %p168 = scmp.eq.s32.totalorder %s31, 1
    %p169 = por %p167, %p168
    %p171 = scmp.ne.s32.totalorder %s156, %s170
    %p172 = scmp.eq.s32.totalorder %s31, 0
    %p173 = por %p171, %p172
    %s175 = sadd.s32 %s174, 1
    %p178 = scmp.eq.s32.totalorder %s25, 1
    %p179 = scmp.ne.s32.totalorder %s174, %s176
    %p180 = scmp.eq.s32.totalorder %s25, 0
    %p181 = por %p179, %p180
    %p182 = scmp.ne.s32.totalorder %s174, %s176
    %p183 = scmp.eq.s32.totalorder %s30, 1
    %p184 = por %p182, %p183
    %p185 = scmp.ne.s32.totalorder %s176, %s177
    %p186 = scmp.eq.s32.totalorder %s30, 0
    %p187 = por %p185, %p186
    %p188 = scmp.ne.s32.totalorder %s176, %s177
    %p189 = scmp.eq.s32.totalorder %s31, 1
    %p190 = por %p188, %p189
    %p192 = scmp.ne.s32.totalorder %s177, %s191
    %p193 = scmp.eq.s32.totalorder %s31, 0
    %p194 = por %p192, %p193
    %s196 = sadd.s32 %s195, 1
    %p199 = scmp.eq.s32.totalorder %s25, 1
    %p200 = scmp.ne.s32.totalorder %s195, %s197
    %p201 = scmp.eq.s32.totalorder %s25, 0
    %p202 = por %p200, %p201
    %p203 = scmp.ne.s32.totalorder %s195, %s197
    %p204 = scmp.eq.s32.totalorder %s30, 1
    %p205 = por %p203, %p204
    %p206 = scmp.ne.s32.totalorder %s197, %s198
    %p207 = scmp.eq.s32.totalorder %s30, 0
    %p208 = por %p206, %p207
    %p209 = scmp.ne.s32.totalorder %s197, %s198
    %p210 = scmp.eq.s32.totalorder %s31, 1
    %p211 = por %p209, %p210
    %p213 = scmp.ne.s32.totalorder %s198, %s212
    %p214 = scmp.eq.s32.totalorder %s31, 0
    %p215 = por %p213, %p214
    %s216 = ssub.s32 %s25, %s32
    %p217 = scmp.eq.s32.totalorder %s216, 0
    %s219 = sadd.s32 %s218, 1
    %s220 = scalar_select %p217, %s218, %s219
    %p223 = pneg %p217
    %p224 = scmp.eq.s32.totalorder %s25, 1
    %p225 = por %p223, %p224
    %p226 = scmp.ne.s32.totalorder %s218, %s221
    %p227 = scmp.eq.s32.totalorder %s25, 0
    %p228 = por %p226, %p227
    %p229 = scmp.ne.s32.totalorder %s218, %s221
    %p230 = scmp.eq.s32.totalorder %s30, 1
    %p231 = por %p229, %p230
    %p232 = scmp.ne.s32.totalorder %s221, %s222
    %p233 = scmp.eq.s32.totalorder %s30, 0
    %p234 = por %p232, %p233
    %p235 = scmp.ne.s32.totalorder %s221, %s222
    %p236 = scmp.eq.s32.totalorder %s31, 1
    %p237 = por %p235, %p236
    %p239 = scmp.ne.s32.totalorder %s222, %s238
    %p240 = scmp.eq.s32.totalorder %s31, 0
    %p241 = por %p239, %p240
    %s242 = ssub.s32 %s25, %s32
    %p243 = scmp.eq.s32.totalorder %s242, 0
    %s245 = sadd.s32 %s244, 1
    %s246 = scalar_select %p243, %s244, %s245
    %p249 = pneg %p243
    %p250 = scmp.eq.s32.totalorder %s25, 1
    %p251 = por %p249, %p250
    %p252 = scmp.ne.s32.totalorder %s244, %s247
    %p253 = scmp.eq.s32.totalorder %s25, 0
    %p254 = por %p252, %p253
    %p255 = scmp.ne.s32.totalorder %s244, %s247
    %p256 = scmp.eq.s32.totalorder %s30, 1
    %p257 = por %p255, %p256
    %p258 = scmp.ne.s32.totalorder %s247, %s248
    %p259 = scmp.eq.s32.totalorder %s30, 0
    %p260 = por %p258, %p259
    %p261 = scmp.ne.s32.totalorder %s247, %s248
    %p262 = scmp.eq.s32.totalorder %s31, 1
    %p263 = por %p261, %p262
    %p265 = scmp.ne.s32.totalorder %s248, %s264
    %p266 = scmp.eq.s32.totalorder %s31, 0
    %p267 = por %p265, %p266
    %p268 = scmp.le.s32.totalorder 1, %s25
    %p269 = scmp.lt.s32.totalorder %s25, 3
    %p270 = pnand %p268, %p269
    %p271 = pneg %p270
    // Predicated region
    $region9: #{bidaf_forward.47} parent=5 // pred_check
      _
    $region10: #{bidaf_forward.47} parent=5 // pred_check_branch
      %273 = sbr.rel (%p270) target = $region12
    $region11: #{bidaf_forward.47} parent=5 // pred_region
      %s274 = ssub.s32 %s25, 1
      // Predicated region
      $region13: #{bidaf_forward.47} parent=11 // pred_check
        %p275 = pneg %p124
      $region14: #{bidaf_forward.47} parent=11 // pred_check_branch
        %277 = sbr.rel (%p275) target = $region16
      $region15: #{bidaf_forward.47} parent=11 // pred_region
        _
      $region16: #{bidaf_forward.47} parent=11 // pred_fallthru
        _
      // Predicated region
      $region17: #{bidaf_forward.47} parent=11 // pred_check
        %p278 = pneg %p145
      $region18: #{bidaf_forward.47} parent=11 // pred_check_branch
        %280 = sbr.rel (%p278) target = $region20
      $region19: #{bidaf_forward.47} parent=11 // pred_region
        _
      $region20: #{bidaf_forward.47} parent=11 // pred_fallthru
        _
      // Predicated region
      $region21: #{bidaf_forward.47} parent=11 // pred_check
        %p281 = pneg %p166
      $region22: #{bidaf_forward.47} parent=11 // pred_check_branch
        %283 = sbr.rel (%p281) target = $region24
      $region23: #{bidaf_forward.47} parent=11 // pred_region
        _
      $region24: #{bidaf_forward.47} parent=11 // pred_fallthru
        _
      // Predicated region
      $region25: #{bidaf_forward.47} parent=11 // pred_check
        %p284 = pneg %p187
      $region26: #{bidaf_forward.47} parent=11 // pred_check_branch
        %286 = sbr.rel (%p284) target = $region28
      $region27: #{bidaf_forward.47} parent=11 // pred_region
        _
      $region28: #{bidaf_forward.47} parent=11 // pred_fallthru
        _
      // Predicated region
      $region29: #{bidaf_forward.47} parent=11 // pred_check
        %p287 = pneg %p208
      $region30: #{bidaf_forward.47} parent=11 // pred_check_branch
        %289 = sbr.rel (%p287) target = $region32
      $region31: #{bidaf_forward.47} parent=11 // pred_region
        _
      $region32: #{bidaf_forward.47} parent=11 // pred_fallthru
        _
    $region12: #{bidaf_forward.47} parent=5 // pred_fallthru
      _
    %p290 = scmp.lt.s32.totalorder %s25, 2
    // Predicated region
    $region33: #{bidaf_forward.47} parent=5 // pred_check
      %p291 = pneg %p290
    $region34: #{bidaf_forward.47} parent=5 // pred_check_branch
      %293 = sbr.rel (%p291) target = $region36
    $region35: #{bidaf_forward.47} parent=5 // pred_region
      // Predicated region
      $region37: #{bidaf_forward.47} parent=35 // pred_check
        %p294 = pneg %p45
      $region38: #{bidaf_forward.47} parent=35 // pred_check_branch
        %296 = sbr.rel (%p294) target = $region40
      $region39: #{bidaf_forward.47} parent=35 // pred_region
        %p297 = scmp.lt.s32.totalorder %s25, 1
        %s298 = scalar_select %p297, %s25, 1
        %s299 = smul.addr %s298, 8
        %s300 = smul.addr %s299, 8
        %s301 = scalar_lea.vmem %s1, %s300
      $region40: #{bidaf_forward.47} parent=35 // pred_fallthru
        _
      // Predicated region
      $region41: #{bidaf_forward.47} parent=35 // pred_check
        %p302 = pneg %p71
      $region42: #{bidaf_forward.47} parent=35 // pred_check_branch
        %304 = sbr.rel (%p302) target = $region44
      $region43: #{bidaf_forward.47} parent=35 // pred_region
        %p305 = scmp.lt.s32.totalorder %s25, 1
        %s306 = scalar_select %p305, %s25, 1
        %s307 = smul.addr %s306, 4
        %s308 = smul.addr %s307, 8
        %s309 = scalar_lea.vmem %s2, %s308
      $region44: #{bidaf_forward.47} parent=35 // pred_fallthru
        _
      // Predicated region
      $region45: #{bidaf_forward.47} parent=35 // pred_check
        %p310 = pneg %p97
      $region46: #{bidaf_forward.47} parent=35 // pred_check_branch
        %312 = sbr.rel (%p310) target = $region48
      $region47: #{bidaf_forward.47} parent=35 // pred_region
        %p313 = scmp.lt.s32.totalorder %s25, 1
        %s314 = scalar_select %p313, %s25, 1
        %s315 = smul.addr %s314, 4
        %s316 = smul.addr %s315, 8
        %s317 = scalar_lea.vmem %s3, %s316
      $region48: #{bidaf_forward.47} parent=35 // pred_fallthru
        _
    $region36: #{bidaf_forward.47} parent=5 // pred_fallthru
      _
    %p318 = scmp.le.s32.totalorder 1, %s25
    %p319 = scmp.lt.s32.totalorder %s25, 3
    %p320 = pnand %p318, %p319
    %p321 = pneg %p320
    // Predicated region
    $region49: #{bidaf_forward.47} parent=5 // pred_check
      _
    $region50: #{bidaf_forward.47} parent=5 // pred_check_branch
      %323 = sbr.rel (%p320) target = $region52
    $region51: #{bidaf_forward.47} parent=5 // pred_region
      %s324 = ssub.s32 %s25, 1
      %p325 = scmp.lt.s32.totalorder %s30, 1
      %s326 = scalar_select %p325, %s30, 1
      %s327 = smul.addr %s326, 8
      %s328 = smul.addr %s327, 8
      %s329 = scalar_lea.vmem %s1, %s328
      %p330 = pneg %p51
      %p331 = pneg %p48
      %p332 = scmp.lt.s32.totalorder %s30, 1
      %s333 = scalar_select %p332, %s30, 1
      %s334 = smul.addr %s333, 4
      %s335 = smul.addr %s334, 8
      %s336 = scalar_lea.vmem %s2, %s335
      %p337 = pneg %p77
      %p338 = pneg %p74
      %p339 = scmp.lt.s32.totalorder %s30, 1
      %s340 = scalar_select %p339, %s30, 1
      %s341 = smul.addr %s340, 4
      %s342 = smul.addr %s341, 8
      %s343 = scalar_lea.vmem %s3, %s342
      %p344 = pneg %p103
      %p345 = pneg %p100
      %p346 = pneg %p124
      %p347 = pneg %p121
      %p348 = pneg %p145
      %p349 = pneg %p142
      %p350 = pneg %p166
      %p351 = pneg %p163
      %p352 = pneg %p187
      %p353 = pneg %p184
      %p354 = pneg %p208
      %p355 = pneg %p205
      %p356 = pneg %p234
      %p357 = pneg %p231
      %p358 = scmp.lt.s32.totalorder %s30, 1
      %s359 = scalar_select %p358, %s30, 1
      %s360 = smul.addr %s359, 4
      %s361 = smul.addr %s360, 8
      %s362 = scalar_lea.vmem %s9, %s361
      %p363 = pneg %p260
      %p364 = pneg %p257
      %p365 = scmp.lt.s32.totalorder %s30, 1
      %s366 = scalar_select %p365, %s30, 1
      %s367 = smul.addr %s366, 4
      %s368 = smul.addr %s367, 8
      %s369 = scalar_lea.vmem %s10, %s368
      %p370 = scmp.lt.s32.totalorder %s30, 1
      %s371 = scalar_select %p370, %s30, 1
      %s372 = smul.addr %s371, 8
      %s373 = smul.addr %s372, 8
      %s374 = scalar_lea.vmem %s1, %s373
      %p375 = scmp.lt.s32.totalorder %s30, 1
      %s376 = scalar_select %p375, %s30, 1
      %s377 = smul.addr %s376, 4
      %s378 = smul.addr %s377, 8
      %s379 = scalar_lea.vmem %s2, %s378
      %p380 = scmp.lt.s32.totalorder %s30, 1
      %s381 = scalar_select %p380, %s30, 1
      %s382 = smul.addr %s381, 4
      %s383 = smul.addr %s382, 8
      %s384 = scalar_lea.vmem %s3, %s383
      %p385 = scmp.lt.s32.totalorder %s30, 1
      %s386 = scalar_select %p385, %s30, 1
      %s387 = smul.addr %s386, 4
      %s388 = smul.addr %s387, 8
      %s389 = scalar_lea.vmem %s9, %s388
      %p390 = scmp.lt.s32.totalorder %s30, 1
      %s391 = scalar_select %p390, %s30, 1
      %s392 = smul.addr %s391, 4
      %s393 = smul.addr %s392, 8
      %s394 = scalar_lea.vmem %s10, %s393
      %v395 = vld [vmem:[%s374] sm:$0xff]
      %v396 = vld [vmem:[%s374 + $0x8] sm:$0xff]
      %v397 = vld [vmem:[%s374 + $0x10] sm:$0xff]
      %v398 = vld [vmem:[%s374 + $0x18] sm:$0xff]
      %v399 = vld [vmem:[%s374 + $0x20] sm:$0xff]
      %v400 = vld [vmem:[%s374 + $0x28] sm:$0xff]
      %v401 = vld [vmem:[%s374 + $0x30] sm:$0xff]
      %v402 = vld [vmem:[%s374 + $0x38] sm:$0xff]
      %v403 = vld [vmem:[%s379] sm:$0xff]
      %v404 = vld [vmem:[%s379 + $0x8] sm:$0xff]
      %v405 = vld [vmem:[%s379 + $0x10] sm:$0xff]
      %v406 = vld [vmem:[%s379 + $0x18] sm:$0xff]
      %v407 = vld [vmem:[%s384] sm:$0xff]
      %v408 = vld [vmem:[%s384 + $0x8] sm:$0xff]
      %v409 = vld [vmem:[%s384 + $0x10] sm:$0xff]
      %v410 = vld [vmem:[%s384 + $0x18] sm:$0xff]
      %v411 = vld [vmem:[%s4] sm:$0x3]
      %v413 = vperm.slane %v411, 0
      %v414 = vperm.slane %v411, 1
      %v417 = vmul.f32 %v395, %v413
      %v418 = vmul.f32 %v396, %v414
      %v419 = vmul.f32 %v397, %v413
      %v420 = vmul.f32 %v398, %v414
      %v421 = vmul.f32 %v399, %v413
      %v422 = vmul.f32 %v400, %v414
      %v423 = vmul.f32 %v401, %v413
      %v424 = vmul.f32 %v402, %v414
      %v425 = vadd.f32 %v417, %v418
      %426 = vadd.xlane.f32.xlu0 %v425
      %v427 = vpop.xlane.xlu0 %426
      %v428 = vadd.f32 %v419, %v420
      %429 = vadd.xlane.f32.xlu0 %v428
      %v430 = vpop.xlane.xlu0 %429
      %v431 = vadd.f32 %v421, %v422
      %432 = vadd.xlane.f32.xlu0 %v431
      %v433 = vpop.xlane.xlu0 %432
      %v434 = vadd.f32 %v423, %v424
      %435 = vadd.xlane.f32.xlu0 %v434
      %v436 = vpop.xlane.xlu0 %435
      %v437 = vld [vmem:[%s5] sm:$0x1]
      %v439 = vperm.slane %v437, 0
      %v441 = vmul.f32 %v403, %v439
      %v442 = vmul.f32 %v404, %v439
      %v443 = vmul.f32 %v405, %v439
      %v444 = vmul.f32 %v406, %v439
      %vm445 = vcmask 523264
      %v446 = vsel %vm445, %v441, 0.0
      %447 = vadd.xlane.f32.xlu0 %v446
      %v448 = vpop.xlane.xlu0 %447
      %v449 = vsel %vm445, %v442, 0.0
      %450 = vadd.xlane.f32.xlu0 %v449
      %v451 = vpop.xlane.xlu0 %450
      %v452 = vsel %vm445, %v443, 0.0
      %453 = vadd.xlane.f32.xlu0 %v452
      %v454 = vpop.xlane.xlu0 %453
      %v455 = vsel %vm445, %v444, 0.0
      %456 = vadd.xlane.f32.xlu0 %v455
      %v457 = vpop.xlane.xlu0 %456
      %v458 = vadd.f32 %v427, %v448
      %v459 = vadd.f32 %v430, %v451
      %v460 = vadd.f32 %v433, %v454
      %v461 = vadd.f32 %v436, %v457
      %v462 = vld [vmem:[%s8] sm:$0x1]
      %s463 = vtos %v462
      %v464 = vstv %s463
      %v465 = vadd.f32 %v458, %v464
      %v466 = vadd.f32 %v459, %v464
      %v467 = vadd.f32 %v460, %v464
      %v468 = vadd.f32 %v461, %v464
      %v469 = vld [vmem:[%s6] sm:$0x3]
      %v471 = vperm.slane %v469, 0
      %v472 = vperm.slane %v469, 1
      %v475 = vmul.f32 %v395, %v471
      %v476 = vmul.f32 %v396, %v472
      %v477 = vmul.f32 %v397, %v471
      %v478 = vmul.f32 %v398, %v472
      %v479 = vmul.f32 %v399, %v471
      %v480 = vmul.f32 %v400, %v472
      %v481 = vmul.f32 %v401, %v471
      %v482 = vmul.f32 %v402, %v472
      %v483 = vadd.f32 %v475, %v476
      %484 = vadd.xlane.f32.xlu0 %v483
      %v485 = vpop.xlane.xlu0 %484
      %v486 = vadd.f32 %v477, %v478
      %487 = vadd.xlane.f32.xlu0 %v486
      %v488 = vpop.xlane.xlu0 %487
      %v489 = vadd.f32 %v479, %v480
      %490 = vadd.xlane.f32.xlu0 %v489
      %v491 = vpop.xlane.xlu0 %490
      %v492 = vadd.f32 %v481, %v482
      %493 = vadd.xlane.f32.xlu0 %v492
      %v494 = vpop.xlane.xlu0 %493
      %v495 = vld [vmem:[%s7] sm:$0x1]
      %v497 = vperm.slane %v495, 0
      %v499 = vmul.f32 %v407, %v497
      %v500 = vmul.f32 %v408, %v497
      %v501 = vmul.f32 %v409, %v497
      %v502 = vmul.f32 %v410, %v497
      %v503 = vsel %vm445, %v499, 0.0
      %504 = vadd.xlane.f32.xlu0 %v503
      %v505 = vpop.xlane.xlu0 %504
      %v506 = vsel %vm445, %v500, 0.0
      %507 = vadd.xlane.f32.xlu0 %v506
      %v508 = vpop.xlane.xlu0 %507
      %v509 = vsel %vm445, %v501, 0.0
      %510 = vadd.xlane.f32.xlu0 %v509
      %v511 = vpop.xlane.xlu0 %510
      %v512 = vsel %vm445, %v502, 0.0
      %513 = vadd.xlane.f32.xlu0 %v512
      %v514 = vpop.xlane.xlu0 %513
      %v515 = vadd.f32 %v485, %v505
      %v516 = vadd.f32 %v488, %v508
      %v517 = vadd.f32 %v491, %v511
      %v518 = vadd.f32 %v494, %v514
      %520 = vrot.lane.b32.xlu0 %v462, 127
      %v521 = vpop.permute.xlu0 %520
      %s523 = vtos %v521
      %v524 = vstv %s523
      %v525 = vadd.f32 %v515, %v524
      %v526 = vadd.f32 %v516, %v524
      %v527 = vadd.f32 %v517, %v524
      %v528 = vadd.f32 %v518, %v524
      %v529 = vlaneseq
      %v530 = vshrl.u32 %v529, 7
      %v531 = vadd.s32 %v530, 8
      %v532 = vadd.s32 %v530, 16
      %v533 = vadd.s32 %v530, 24
      %s534 = sld [smem:[#allocation3 + %s30]]
      %v535 = vstv %s534
      %vm536 = vcmp.lt.s32.totalorder %v530, %v535
      %vm537 = vcmp.lt.s32.totalorder %v531, %v535
      %vm538 = vcmp.lt.s32.totalorder %v532, %v535
      %vm539 = vcmp.lt.s32.totalorder %v533, %v535
      %v540 = vsel %vm536, %v465, -1e+30
      %v541 = vsel %vm537, %v466, -1e+30
      %v542 = vsel %vm538, %v467, -1e+30
      %v543 = vsel %vm539, %v468, -1e+30
      %v544 = vmax.f32 %v540, %v541
      %v545 = vmax.f32 %v542, %v543
      %v546 = vmax.f32 %v544, %v545
      %v547 = vrot.slane %v546, 4
      %v548 = vmax.f32 %v546, %v547
      %v549 = vrot.slane %v548, 2
      %v550 = vmax.f32 %v548, %v549
      %v551 = vrot.slane %v550, 1
      %v552 = vmax.f32 %v550, %v551
      %v553 = vsub.f32 %v540, %v552
      %v554 = vsub.f32 %v541, %v552
      %v555 = vsub.f32 %v542, %v552
      %v556 = vsub.f32 %v543, %v552
      %v557 = vmul.f32 %v553, 1.442695
      %v558 = vpow.pop %v557
      %v559 = vmul.f32 %v554, 1.442695
      %v560 = vpow.pop %v559
      %v561 = vmul.f32 %v555, 1.442695
      %v562 = vpow.pop %v561
      %v563 = vmul.f32 %v556, 1.442695
      %v564 = vpow.pop %v563
      %v565 = vadd.f32 %v558, %v560
      %v566 = vadd.f32 %v565, %v562
      %v567 = vadd.f32 %v566, %v564
      %v568 = vrot.slane %v567, 4
      %v569 = vadd.f32 %v567, %v568
      %v570 = vrot.slane %v569, 2
      %v571 = vadd.f32 %v569, %v570
      %v572 = vrot.slane %v571, 1
      %v573 = vadd.f32 %v571, %v572
      %v574 = vlog2.pop %v573
      %v575 = vmul.f32 %v574, 0.6931472
      %v576 = vsub.f32 %v553, %v575
      %v577 = vsub.f32 %v554, %v575
      %v578 = vsub.f32 %v555, %v575
      %v579 = vsub.f32 %v556, %v575
      %vm580 = vcmask 7168
      %581 = vst.msk [vmem:[%s389] sm:$0xff] %vm580, %v576
      %582 = vst.msk [vmem:[%s389 + $0x8] sm:$0xff] %vm580, %v577
      %583 = vst.msk [vmem:[%s389 + $0x10] sm:$0xff] %vm580, %v578
      %584 = vst.msk [vmem:[%s389 + $0x18] sm:$0xff] %vm580, %v579
      %v585 = vsel %vm536, %v525, -1e+30
      %v586 = vsel %vm537, %v526, -1e+30
      %v587 = vsel %vm538, %v527, -1e+30
      %v588 = vsel %vm539, %v528, -1e+30
      %v589 = vmax.f32 %v585, %v586
      %v590 = vmax.f32 %v587, %v588
      %v591 = vmax.f32 %v589, %v590
      %v592 = vrot.slane %v591, 4
      %v593 = vmax.f32 %v591, %v592
      %v594 = vrot.slane %v593, 2
      %v595 = vmax.f32 %v593, %v594
      %v596 = vrot.slane %v595, 1
      %v597 = vmax.f32 %v595, %v596
      %v598 = vsub.f32 %v585, %v597
      %v599 = vsub.f32 %v586, %v597
      %v600 = vsub.f32 %v587, %v597
      %v601 = vsub.f32 %v588, %v597
      %v602 = vmul.f32 %v598, 1.442695
      %v603 = vpow.pop %v602
      %v604 = vmul.f32 %v599, 1.442695
      %v605 = vpow.pop %v604
      %v606 = vmul.f32 %v600, 1.442695
      %v607 = vpow.pop %v606
      %v608 = vmul.f32 %v601, 1.442695
      %v609 = vpow.pop %v608
      %v610 = vadd.f32 %v603, %v605
      %v611 = vadd.f32 %v610, %v607
      %v612 = vadd.f32 %v611, %v609
      %v613 = vrot.slane %v612, 4
      %v614 = vadd.f32 %v612, %v613
      %v615 = vrot.slane %v614, 2
      %v616 = vadd.f32 %v614, %v615
      %v617 = vrot.slane %v616, 1
      %v618 = vadd.f32 %v616, %v617
      %v619 = vlog2.pop %v618
      %v620 = vmul.f32 %v619, 0.6931472
      %v621 = vsub.f32 %v598, %v620
      %v622 = vsub.f32 %v599, %v620
      %v623 = vsub.f32 %v600, %v620
      %v624 = vsub.f32 %v601, %v620
      %625 = vst.msk [vmem:[%s394] sm:$0xff] %vm580, %v621
      %626 = vst.msk [vmem:[%s394 + $0x8] sm:$0xff] %vm580, %v622
      %627 = vst.msk [vmem:[%s394 + $0x10] sm:$0xff] %vm580, %v623
      %628 = vst.msk [vmem:[%s394 + $0x18] sm:$0xff] %vm580, %v624
      %p629 = scmp.lt.s32.totalorder %s30, 1
      %s630 = scalar_select %p629, %s30, 1
      %s631 = smul.addr %s630, 4
      %s632 = smul.addr %s631, 8
      %s633 = scalar_lea.vmem %s9, %s632
      %p634 = scmp.lt.s32.totalorder %s30, 1
      %s635 = scalar_select %p634, %s30, 1
      %s636 = smul.addr %s635, 4
      %s637 = smul.addr %s636, 8
      %s638 = scalar_lea.vmem %s10, %s637
      // Predicated region
      $region53: #{bidaf_forward.47} parent=51 // pred_check
        %p639 = pneg %p231
      $region54: #{bidaf_forward.47} parent=51 // pred_check_branch
        %641 = sbr.rel (%p639) target = $region56
      $region55: #{bidaf_forward.47} parent=51 // pred_region
        _
      $region56: #{bidaf_forward.47} parent=51 // pred_fallthru
        _
      // Predicated region
      $region57: #{bidaf_forward.47} parent=51 // pred_check
        %p642 = pneg %p257
      $region58: #{bidaf_forward.47} parent=51 // pred_check_branch
        %644 = sbr.rel (%p642) target = $region60
      $region59: #{bidaf_forward.47} parent=51 // pred_region
        _
      $region60: #{bidaf_forward.47} parent=51 // pred_fallthru
        _
    $region52: #{bidaf_forward.47} parent=5 // pred_fallthru
      _
    %p645 = scmp.le.s32.totalorder 2, %s25
    // Predicated region
    $region61: #{bidaf_forward.47} parent=5 // pred_check
      %p646 = pneg %p645
    $region62: #{bidaf_forward.47} parent=5 // pred_check_branch
      %648 = sbr.rel (%p646) target = $region64
    $region63: #{bidaf_forward.47} parent=5 // pred_region
      %s649 = ssub.s32 %s25, 2
      // Predicated region
      $region65: #{bidaf_forward.47} parent=63 // pred_check
        %p650 = pneg %p237
      $region66: #{bidaf_forward.47} parent=63 // pred_check_branch
        %652 = sbr.rel (%p650) target = $region68
      $region67: #{bidaf_forward.47} parent=63 // pred_region
        %p653 = scmp.lt.s32.totalorder %s31, 1
        %s654 = scalar_select %p653, %s31, 1
        %s655 = smul.addr %s654, 4
        %s656 = smul.addr %s655, 8
        %s657 = scalar_lea.vmem %s9, %s656
      $region68: #{bidaf_forward.47} parent=63 // pred_fallthru
        _
      // Predicated region
      $region69: #{bidaf_forward.47} parent=63 // pred_check
        %p658 = pneg %p263
      $region70: #{bidaf_forward.47} parent=63 // pred_check_branch
        %660 = sbr.rel (%p658) target = $region72
      $region71: #{bidaf_forward.47} parent=63 // pred_region
        %p661 = scmp.lt.s32.totalorder %s31, 1
        %s662 = scalar_select %p661, %s31, 1
        %s663 = smul.addr %s662, 4
        %s664 = smul.addr %s663, 8
        %s665 = scalar_lea.vmem %s10, %s664
      $region72: #{bidaf_forward.47} parent=63 // pred_fallthru
        _
    $region64: #{bidaf_forward.47} parent=5 // pred_fallthru
      _
  $region6: #{bidaf_forward.47} parent=0 // loop_footer
    %s29 = sadd.s32 1, %s25
  $region7: #{bidaf_forward.47} parent=0 // loop_footer_branch
    %24 = sbr.rel target = $region3
  $region8: #{bidaf_forward.47} parent=0 // loop_exit
    _

</llo_original>
